<compile_context>
chip_gen: v7x
topology: tpu7x:2x2x1
jax: 0.10.0
libtpu: 0.0.40
codegen_flags: <defaults>
</compile_context>

<pallas_src>
import functools

import jax
import jax.numpy as jnp
from jax.experimental import pallas as pl
from jax.experimental.pallas import tpu as pltpu


# ---------------------------------------------------------------------------
# In-kernel 3x3 conv on a lane-dense [Cin, H*W] activation.
# ---------------------------------------------------------------------------
def _conv3x3(a, w, b, row, col, H, W, act):
    # a:   [Cin, H*W]   float32 activation (spatial flattened on lanes)
    # w:   [Cout, 9*Cin] bfloat16, K index = (kh*3 + kw)*Cin + cin
    # b:   [Cout, 1]    float32
    # row, col: [1, H*W] int32 pixel coordinates of each flattened position
    taps = []
    for kh in range(3):
        dh = kh - 1
        for kw in range(3):
            dw = kw - 1
            s = dh * W + dw
            # shifted[c, i] == a[c, i + s]  (wraps; wrapped positions are masked below)
            t = a if s == 0 else jnp.roll(a, -s, axis=1)
            conds = []
            if dh < 0:
                conds.append(row >= 1)
            elif dh > 0:
                conds.append(row <= H - 2)
            if dw < 0:
                conds.append(col >= 1)
            elif dw > 0:
                conds.append(col <= W - 2)
            if conds:
                valid = conds[0]
                for c in conds[1:]:
                    valid = jnp.logical_and(valid, c)
                t = jnp.where(valid, t, 0.0)          # zero padding semantics
            taps.append(t)
    p = jnp.concatenate(taps, axis=0).astype(jnp.bfloat16)    # [9*Cin, HW]
    out = jnp.dot(w, p, preferred_element_type=jnp.float32)   # single MXU matmul
    out = out + b
    if act == "relu":
        return jnp.maximum(out, 0.0)
    return jnp.tanh(out)


# ---------------------------------------------------------------------------
# Fused whole-network kernel: 7 convs + 8 curve-enhancement steps.
# ---------------------------------------------------------------------------
def _enhance_net_kernel(rc_ref, inp_ref,
                        w1_ref, b1_ref, w2_ref, b2_ref, w3_ref, b3_ref,
                        w4_ref, b4_ref, w5_ref, b5_ref, w6_ref, b6_ref,
                        w7_ref, b7_ref,
                        e1_ref, e2_ref, r_ref, *, H, W):
    row = rc_ref[0:1, :]
    col = rc_ref[1:2, :]
    inp = inp_ref[...]            # [4, HW] = [r, g, b, depth]
    x = inp[0:3, :]               # original image (for the enhancement curves)

    conv = functools.partial(_conv3x3, row=row, col=col, H=H, W=W)
    x1 = conv(inp, w1_ref[...], b1_ref[...], act="relu")
    x2 = conv(x1, w2_ref[...], b2_ref[...], act="relu")
    x3 = conv(x2, w3_ref[...], b3_ref[...], act="relu")
    x4 = conv(x3, w4_ref[...], b4_ref[...], act="relu")
    # channel concats stay on in-kernel values (never materialized in HBM)
    x5 = conv(jnp.concatenate([x3, x4], axis=0), w5_ref[...], b5_ref[...], act="relu")
    x6 = conv(jnp.concatenate([x2, x5], axis=0), w6_ref[...], b6_ref[...], act="relu")
    x_r = conv(jnp.concatenate([x1, x6], axis=0), w7_ref[...], b7_ref[...], act="tanh")

    # 8 curve-enhancement steps; r_i are free static sublane slices of x_r.
    o = x
    for i in range(4):
        r_i = x_r[3 * i:3 * (i + 1), :]
        o = o + r_i * (o * o - o)
    e1_ref[...] = o                       # enhance_image_1 (after r4)
    for i in range(4, 8):
        r_i = x_r[3 * i:3 * (i + 1), :]
        o = o + r_i * (o * o - o)
    e2_ref[...] = o                       # enhance_image   (after r8)
    r_ref[...] = x_r                      # r == cat([r1..r8], channel dim)


# ---------------------------------------------------------------------------
# Parameters (deterministic, PyTorch-Conv2d-like uniform init, OIHW layout).
# ---------------------------------------------------------------------------
def init_params(key):
    number_f = 32
    specs = [
        ("e_conv1", 4, number_f),
        ("e_conv2", number_f, number_f),
        ("e_conv3", number_f, number_f),
        ("e_conv4", number_f, number_f),
        ("e_conv5", number_f * 2, number_f),
        ("e_conv6", number_f * 2, number_f),
        ("e_conv7", number_f * 2, 24),
    ]
    params = {}
    for name, cin, cout in specs:
        key, kw, kb = jax.random.split(key, 3)
        bound = 1.0 / float(cin * 9) ** 0.5
        w = jax.random.uniform(kw, (cout, cin, 3, 3), jnp.float32, -bound, bound)
        b = jax.random.uniform(kb, (cout,), jnp.float32, -bound, bound)
        params[name] = (w, b)
    return params


def _prep_conv_params(w, b):
    # [Cout, Cin, 3, 3] (OIHW) -> [Cout, 9*Cin] bf16 with K = (kh*3 + kw)*Cin + cin,
    # matching the in-kernel tap ordering; bias -> [Cout, 1] f32 column.
    cout, cin = w.shape[0], w.shape[1]
    wmat = jnp.transpose(w, (0, 2, 3, 1)).reshape(cout, 9 * cin).astype(jnp.bfloat16)
    return wmat, b.reshape(cout, 1).astype(jnp.float32)


# ---------------------------------------------------------------------------
# Full forward pass (mirrors enhance_net.forward).
# ---------------------------------------------------------------------------
def enhance_net_forward(params, x, d):
    # x: [1, 3, H, W] (NCHW), d: [1, H, W]
    _, _, H, W = x.shape
    HW = H * W

    # input_ = cat([x, d.unsqueeze(0)], dim=1), flattened lane-dense as [4, HW]
    inp = jnp.concatenate(
        [x[0].reshape(3, HW), d.reshape(1, HW)], axis=0).astype(jnp.float32)

    # pixel coordinates used in-kernel for the zero-padding masks
    row = jnp.repeat(jnp.arange(H, dtype=jnp.int32), W)
    col = jnp.tile(jnp.arange(W, dtype=jnp.int32), H)
    rc = jnp.stack([row, col], axis=0)                          # [2, HW]

    names = ["e_conv1", "e_conv2", "e_conv3", "e_conv4",
             "e_conv5", "e_conv6", "e_conv7"]
    flat = []
    for n in names:
        wmat, bcol = _prep_conv_params(*params[n])
        flat += [wmat, bcol]

    vmem = pl.BlockSpec(memory_space=pltpu.MemorySpace.VMEM)
    e1, e2, r = pl.pallas_call(
        functools.partial(_enhance_net_kernel, H=H, W=W),
        out_shape=(jax.ShapeDtypeStruct((3, HW), jnp.float32),
                   jax.ShapeDtypeStruct((3, HW), jnp.float32),
                   jax.ShapeDtypeStruct((24, HW), jnp.float32)),
        in_specs=[vmem] * (2 + len(flat)),
        out_specs=(vmem, vmem, vmem),
    )(rc, inp, *flat)

    to_nchw = lambda a: a.reshape(1, a.shape[0], H, W)   # contiguous: free reshape
    return to_nchw(e1), to_nchw(e2), to_nchw(r)


if __name__ == "__main__":
    key = jax.random.PRNGKey(0)
    kp, kx, kd = jax.random.split(key, 3)
    H = W = 16
    params = init_params(kp)
    x = jax.random.uniform(kx, (1, 3, H, W), jnp.float32)   # image, batch=1
    d = jax.random.uniform(kd, (1, H, W), jnp.float32)      # depth map

    fwd = jax.jit(functools.partial(enhance_net_forward, params))
    enhance_image_1, enhance_image, r = fwd(x, d)
    jax.block_until_ready((enhance_image_1, enhance_image, r))

    assert enhance_image_1.shape == (1, 3, H, W)
    assert enhance_image.shape == (1, 3, H, W)
    assert r.shape == (1, 24, H, W)
    assert bool(jnp.all(jnp.isfinite(enhance_image)))
    print("KERNEL_OK")
</pallas_src>

<mosaic_0001>
module attributes {stable_mosaic.version = 11 : i64} {
  func.func @_enhance_net_kernel(%arg0: memref<2x256xi32, #tpu.memory_space<vmem>>, %arg1: memref<4x256xf32, #tpu.memory_space<vmem>>, %arg2: memref<32x36xbf16, #tpu.memory_space<vmem>>, %arg3: memref<32x1xf32, #tpu.memory_space<vmem>>, %arg4: memref<32x288xbf16, #tpu.memory_space<vmem>>, %arg5: memref<32x1xf32, #tpu.memory_space<vmem>>, %arg6: memref<32x288xbf16, #tpu.memory_space<vmem>>, %arg7: memref<32x1xf32, #tpu.memory_space<vmem>>, %arg8: memref<32x288xbf16, #tpu.memory_space<vmem>>, %arg9: memref<32x1xf32, #tpu.memory_space<vmem>>, %arg10: memref<32x576xbf16, #tpu.memory_space<vmem>>, %arg11: memref<32x1xf32, #tpu.memory_space<vmem>>, %arg12: memref<32x576xbf16, #tpu.memory_space<vmem>>, %arg13: memref<32x1xf32, #tpu.memory_space<vmem>>, %arg14: memref<24x576xbf16, #tpu.memory_space<vmem>>, %arg15: memref<24x1xf32, #tpu.memory_space<vmem>>, %arg16: memref<3x256xf32, #tpu.memory_space<vmem>>, %arg17: memref<3x256xf32, #tpu.memory_space<vmem>>, %arg18: memref<24x256xf32, #tpu.memory_space<vmem>>) attributes {dimension_semantics = [], scalar_prefetch = 0 : i64, scratch_operands = 0 : i64, tpu.core_type = #tpu.core_type<tc>} {
    %c0 = arith.constant 0 : index
    %c0_0 = arith.constant 0 : index
    %0 = vector.load %arg0[%c0, %c0_0] : memref<2x256xi32, #tpu.memory_space<vmem>>, vector<1x256xi32>
    %c1 = arith.constant 1 : index
    %c0_1 = arith.constant 0 : index
    %1 = vector.load %arg0[%c1, %c0_1] : memref<2x256xi32, #tpu.memory_space<vmem>>, vector<1x256xi32>
    %c0_2 = arith.constant 0 : index
    %c0_3 = arith.constant 0 : index
    %2 = vector.load %arg1[%c0_2, %c0_3] : memref<4x256xf32, #tpu.memory_space<vmem>>, vector<4x256xf32>
    %3 = vector.extract_strided_slice %2 {offsets = [0, 0], sizes = [3, 256], strides = [1, 1]} : vector<4x256xf32> to vector<3x256xf32>
    %c0_4 = arith.constant 0 : index
    %c0_5 = arith.constant 0 : index
    %4 = vector.load %arg2[%c0_4, %c0_5] : memref<32x36xbf16, #tpu.memory_space<vmem>>, vector<32x36xbf16>
    %c0_6 = arith.constant 0 : index
    %c0_7 = arith.constant 0 : index
    %5 = vector.load %arg3[%c0_6, %c0_7] : memref<32x1xf32, #tpu.memory_space<vmem>>, vector<32x1xf32>
    %6 = vector.extract_strided_slice %2 {offsets = [0, 239], sizes = [4, 17], strides = [1, 1]} : vector<4x256xf32> to vector<4x17xf32>
    %7 = vector.extract_strided_slice %2 {offsets = [0, 0], sizes = [4, 239], strides = [1, 1]} : vector<4x256xf32> to vector<4x239xf32>
    %8 = tpu.concatenate %6, %7 in 1 : vector<4x17xf32>, vector<4x239xf32> -> vector<4x256xf32>
    %c1_i32 = arith.constant 1 : i32
    %9 = vector.broadcast %c1_i32 : i32 to vector<1x256xi32>
    %10 = arith.cmpi sge, %0, %9 : vector<1x256xi32>
    %c1_i32_8 = arith.constant 1 : i32
    %11 = vector.broadcast %c1_i32_8 : i32 to vector<1x256xi32>
    %12 = arith.cmpi sge, %1, %11 : vector<1x256xi32>
    %13 = arith.andi %10, %12 : vector<1x256xi1>
    %cst = arith.constant 0.000000e+00 : f32
    %14 = vector.shape_cast %13 : vector<1x256xi1> to vector<1x256xi1>
    %15 = vector.broadcast %14 : vector<1x256xi1> to vector<4x256xi1>
    %16 = vector.broadcast %cst : f32 to vector<4x256xf32>
    %17 = arith.select %15, %8, %16 : vector<4x256xi1>, vector<4x256xf32>
    %18 = vector.extract_strided_slice %2 {offsets = [0, 240], sizes = [4, 16], strides = [1, 1]} : vector<4x256xf32> to vector<4x16xf32>
    %19 = vector.extract_strided_slice %2 {offsets = [0, 0], sizes = [4, 240], strides = [1, 1]} : vector<4x256xf32> to vector<4x240xf32>
    %20 = tpu.concatenate %18, %19 in 1 : vector<4x16xf32>, vector<4x240xf32> -> vector<4x256xf32>
    %c1_i32_9 = arith.constant 1 : i32
    %21 = vector.broadcast %c1_i32_9 : i32 to vector<1x256xi32>
    %22 = arith.cmpi sge, %0, %21 : vector<1x256xi32>
    %cst_10 = arith.constant 0.000000e+00 : f32
    %23 = vector.shape_cast %22 : vector<1x256xi1> to vector<1x256xi1>
    %24 = vector.broadcast %23 : vector<1x256xi1> to vector<4x256xi1>
    %25 = vector.broadcast %cst_10 : f32 to vector<4x256xf32>
    %26 = arith.select %24, %20, %25 : vector<4x256xi1>, vector<4x256xf32>
    %27 = vector.extract_strided_slice %2 {offsets = [0, 241], sizes = [4, 15], strides = [1, 1]} : vector<4x256xf32> to vector<4x15xf32>
    %28 = vector.extract_strided_slice %2 {offsets = [0, 0], sizes = [4, 241], strides = [1, 1]} : vector<4x256xf32> to vector<4x241xf32>
    %29 = tpu.concatenate %27, %28 in 1 : vector<4x15xf32>, vector<4x241xf32> -> vector<4x256xf32>
    %c1_i32_11 = arith.constant 1 : i32
    %30 = vector.broadcast %c1_i32_11 : i32 to vector<1x256xi32>
    %31 = arith.cmpi sge, %0, %30 : vector<1x256xi32>
    %c14_i32 = arith.constant 14 : i32
    %32 = vector.broadcast %c14_i32 : i32 to vector<1x256xi32>
    %33 = arith.cmpi sle, %1, %32 : vector<1x256xi32>
    %34 = arith.andi %31, %33 : vector<1x256xi1>
    %cst_12 = arith.constant 0.000000e+00 : f32
    %35 = vector.shape_cast %34 : vector<1x256xi1> to vector<1x256xi1>
    %36 = vector.broadcast %35 : vector<1x256xi1> to vector<4x256xi1>
    %37 = vector.broadcast %cst_12 : f32 to vector<4x256xf32>
    %38 = arith.select %36, %29, %37 : vector<4x256xi1>, vector<4x256xf32>
    %39 = vector.extract_strided_slice %2 {offsets = [0, 255], sizes = [4, 1], strides = [1, 1]} : vector<4x256xf32> to vector<4x1xf32>
    %40 = vector.extract_strided_slice %2 {offsets = [0, 0], sizes = [4, 255], strides = [1, 1]} : vector<4x256xf32> to vector<4x255xf32>
    %41 = tpu.concatenate %39, %40 in 1 : vector<4x1xf32>, vector<4x255xf32> -> vector<4x256xf32>
    %c1_i32_13 = arith.constant 1 : i32
    %42 = vector.broadcast %c1_i32_13 : i32 to vector<1x256xi32>
    %43 = arith.cmpi sge, %1, %42 : vector<1x256xi32>
    %cst_14 = arith.constant 0.000000e+00 : f32
    %44 = vector.shape_cast %43 : vector<1x256xi1> to vector<1x256xi1>
    %45 = vector.broadcast %44 : vector<1x256xi1> to vector<4x256xi1>
    %46 = vector.broadcast %cst_14 : f32 to vector<4x256xf32>
    %47 = arith.select %45, %41, %46 : vector<4x256xi1>, vector<4x256xf32>
    %48 = vector.extract_strided_slice %2 {offsets = [0, 1], sizes = [4, 255], strides = [1, 1]} : vector<4x256xf32> to vector<4x255xf32>
    %49 = vector.extract_strided_slice %2 {offsets = [0, 0], sizes = [4, 1], strides = [1, 1]} : vector<4x256xf32> to vector<4x1xf32>
    %50 = tpu.concatenate %48, %49 in 1 : vector<4x255xf32>, vector<4x1xf32> -> vector<4x256xf32>
    %c14_i32_15 = arith.constant 14 : i32
    %51 = vector.broadcast %c14_i32_15 : i32 to vector<1x256xi32>
    %52 = arith.cmpi sle, %1, %51 : vector<1x256xi32>
    %cst_16 = arith.constant 0.000000e+00 : f32
    %53 = vector.shape_cast %52 : vector<1x256xi1> to vector<1x256xi1>
    %54 = vector.broadcast %53 : vector<1x256xi1> to vector<4x256xi1>
    %55 = vector.broadcast %cst_16 : f32 to vector<4x256xf32>
    %56 = arith.select %54, %50, %55 : vector<4x256xi1>, vector<4x256xf32>
    %57 = vector.extract_strided_slice %2 {offsets = [0, 15], sizes = [4, 241], strides = [1, 1]} : vector<4x256xf32> to vector<4x241xf32>
    %58 = vector.extract_strided_slice %2 {offsets = [0, 0], sizes = [4, 15], strides = [1, 1]} : vector<4x256xf32> to vector<4x15xf32>
    %59 = tpu.concatenate %57, %58 in 1 : vector<4x241xf32>, vector<4x15xf32> -> vector<4x256xf32>
    %c14_i32_17 = arith.constant 14 : i32
    %60 = vector.broadcast %c14_i32_17 : i32 to vector<1x256xi32>
    %61 = arith.cmpi sle, %0, %60 : vector<1x256xi32>
    %c1_i32_18 = arith.constant 1 : i32
    %62 = vector.broadcast %c1_i32_18 : i32 to vector<1x256xi32>
    %63 = arith.cmpi sge, %1, %62 : vector<1x256xi32>
    %64 = arith.andi %61, %63 : vector<1x256xi1>
    %cst_19 = arith.constant 0.000000e+00 : f32
    %65 = vector.shape_cast %64 : vector<1x256xi1> to vector<1x256xi1>
    %66 = vector.broadcast %65 : vector<1x256xi1> to vector<4x256xi1>
    %67 = vector.broadcast %cst_19 : f32 to vector<4x256xf32>
    %68 = arith.select %66, %59, %67 : vector<4x256xi1>, vector<4x256xf32>
    %69 = vector.extract_strided_slice %2 {offsets = [0, 16], sizes = [4, 240], strides = [1, 1]} : vector<4x256xf32> to vector<4x240xf32>
    %70 = vector.extract_strided_slice %2 {offsets = [0, 0], sizes = [4, 16], strides = [1, 1]} : vector<4x256xf32> to vector<4x16xf32>
    %71 = tpu.concatenate %69, %70 in 1 : vector<4x240xf32>, vector<4x16xf32> -> vector<4x256xf32>
    %c14_i32_20 = arith.constant 14 : i32
    %72 = vector.broadcast %c14_i32_20 : i32 to vector<1x256xi32>
    %73 = arith.cmpi sle, %0, %72 : vector<1x256xi32>
    %cst_21 = arith.constant 0.000000e+00 : f32
    %74 = vector.shape_cast %73 : vector<1x256xi1> to vector<1x256xi1>
    %75 = vector.broadcast %74 : vector<1x256xi1> to vector<4x256xi1>
    %76 = vector.broadcast %cst_21 : f32 to vector<4x256xf32>
    %77 = arith.select %75, %71, %76 : vector<4x256xi1>, vector<4x256xf32>
    %78 = vector.extract_strided_slice %2 {offsets = [0, 17], sizes = [4, 239], strides = [1, 1]} : vector<4x256xf32> to vector<4x239xf32>
    %79 = vector.extract_strided_slice %2 {offsets = [0, 0], sizes = [4, 17], strides = [1, 1]} : vector<4x256xf32> to vector<4x17xf32>
    %80 = tpu.concatenate %78, %79 in 1 : vector<4x239xf32>, vector<4x17xf32> -> vector<4x256xf32>
    %c14_i32_22 = arith.constant 14 : i32
    %81 = vector.broadcast %c14_i32_22 : i32 to vector<1x256xi32>
    %82 = arith.cmpi sle, %0, %81 : vector<1x256xi32>
    %c14_i32_23 = arith.constant 14 : i32
    %83 = vector.broadcast %c14_i32_23 : i32 to vector<1x256xi32>
    %84 = arith.cmpi sle, %1, %83 : vector<1x256xi32>
    %85 = arith.andi %82, %84 : vector<1x256xi1>
    %cst_24 = arith.constant 0.000000e+00 : f32
    %86 = vector.shape_cast %85 : vector<1x256xi1> to vector<1x256xi1>
    %87 = vector.broadcast %86 : vector<1x256xi1> to vector<4x256xi1>
    %88 = vector.broadcast %cst_24 : f32 to vector<4x256xf32>
    %89 = arith.select %87, %80, %88 : vector<4x256xi1>, vector<4x256xf32>
    %90 = tpu.concatenate %17, %26, %38, %47, %2, %56, %68, %77, %89 in 0 : vector<4x256xf32>, vector<4x256xf32>, vector<4x256xf32>, vector<4x256xf32>, vector<4x256xf32>, vector<4x256xf32>, vector<4x256xf32>, vector<4x256xf32>, vector<4x256xf32> -> vector<36x256xf32>
    %91 = arith.truncf %90 : vector<36x256xf32> to vector<36x256xbf16>
    %cst_25 = arith.constant dense<0.000000e+00> : vector<32x256xf32>
    %92 = tpu.matmul %4, %91, %cst_25 {dimension_numbers = #tpu.dot_dimension_numbers<[1], [0], [0], [1], [0, 0, 1, 1], [], []>} : vector<32x36xbf16>, vector<36x256xbf16>, vector<32x256xf32> -> vector<32x256xf32>
    %93 = vector.broadcast %5 : vector<32x1xf32> to vector<32x256xf32>
    %94 = arith.addf %92, %93 : vector<32x256xf32>
    %cst_26 = arith.constant 0.000000e+00 : f32
    %95 = vector.broadcast %cst_26 : f32 to vector<32x256xf32>
    %96 = arith.maximumf %94, %95 : vector<32x256xf32>
    %c0_27 = arith.constant 0 : index
    %c0_28 = arith.constant 0 : index
    %97 = vector.load %arg4[%c0_27, %c0_28] : memref<32x288xbf16, #tpu.memory_space<vmem>>, vector<32x288xbf16>
    %c0_29 = arith.constant 0 : index
    %c0_30 = arith.constant 0 : index
    %98 = vector.load %arg5[%c0_29, %c0_30] : memref<32x1xf32, #tpu.memory_space<vmem>>, vector<32x1xf32>
    %99 = vector.extract_strided_slice %96 {offsets = [0, 239], sizes = [32, 17], strides = [1, 1]} : vector<32x256xf32> to vector<32x17xf32>
    %100 = vector.extract_strided_slice %96 {offsets = [0, 0], sizes = [32, 239], strides = [1, 1]} : vector<32x256xf32> to vector<32x239xf32>
    %101 = tpu.concatenate %99, %100 in 1 : vector<32x17xf32>, vector<32x239xf32> -> vector<32x256xf32>
    %c1_i32_31 = arith.constant 1 : i32
    %102 = vector.broadcast %c1_i32_31 : i32 to vector<1x256xi32>
    %103 = arith.cmpi sge, %0, %102 : vector<1x256xi32>
    %c1_i32_32 = arith.constant 1 : i32
    %104 = vector.broadcast %c1_i32_32 : i32 to vector<1x256xi32>
    %105 = arith.cmpi sge, %1, %104 : vector<1x256xi32>
    %106 = arith.andi %103, %105 : vector<1x256xi1>
    %cst_33 = arith.constant 0.000000e+00 : f32
    %107 = vector.shape_cast %106 : vector<1x256xi1> to vector<1x256xi1>
    %108 = vector.broadcast %107 : vector<1x256xi1> to vector<32x256xi1>
    %109 = vector.broadcast %cst_33 : f32 to vector<32x256xf32>
    %110 = arith.select %108, %101, %109 : vector<32x256xi1>, vector<32x256xf32>
    %111 = vector.extract_strided_slice %96 {offsets = [0, 240], sizes = [32, 16], strides = [1, 1]} : vector<32x256xf32> to vector<32x16xf32>
    %112 = vector.extract_strided_slice %96 {offsets = [0, 0], sizes = [32, 240], strides = [1, 1]} : vector<32x256xf32> to vector<32x240xf32>
    %113 = tpu.concatenate %111, %112 in 1 : vector<32x16xf32>, vector<32x240xf32> -> vector<32x256xf32>
    %c1_i32_34 = arith.constant 1 : i32
    %114 = vector.broadcast %c1_i32_34 : i32 to vector<1x256xi32>
    %115 = arith.cmpi sge, %0, %114 : vector<1x256xi32>
    %cst_35 = arith.constant 0.000000e+00 : f32
    %116 = vector.shape_cast %115 : vector<1x256xi1> to vector<1x256xi1>
    %117 = vector.broadcast %116 : vector<1x256xi1> to vector<32x256xi1>
    %118 = vector.broadcast %cst_35 : f32 to vector<32x256xf32>
    %119 = arith.select %117, %113, %118 : vector<32x256xi1>, vector<32x256xf32>
    %120 = vector.extract_strided_slice %96 {offsets = [0, 241], sizes = [32, 15], strides = [1, 1]} : vector<32x256xf32> to vector<32x15xf32>
    %121 = vector.extract_strided_slice %96 {offsets = [0, 0], sizes = [32, 241], strides = [1, 1]} : vector<32x256xf32> to vector<32x241xf32>
    %122 = tpu.concatenate %120, %121 in 1 : vector<32x15xf32>, vector<32x241xf32> -> vector<32x256xf32>
    %c1_i32_36 = arith.constant 1 : i32
    %123 = vector.broadcast %c1_i32_36 : i32 to vector<1x256xi32>
    %124 = arith.cmpi sge, %0, %123 : vector<1x256xi32>
    %c14_i32_37 = arith.constant 14 : i32
    %125 = vector.broadcast %c14_i32_37 : i32 to vector<1x256xi32>
    %126 = arith.cmpi sle, %1, %125 : vector<1x256xi32>
    %127 = arith.andi %124, %126 : vector<1x256xi1>
    %cst_38 = arith.constant 0.000000e+00 : f32
    %128 = vector.shape_cast %127 : vector<1x256xi1> to vector<1x256xi1>
    %129 = vector.broadcast %128 : vector<1x256xi1> to vector<32x256xi1>
    %130 = vector.broadcast %cst_38 : f32 to vector<32x256xf32>
    %131 = arith.select %129, %122, %130 : vector<32x256xi1>, vector<32x256xf32>
    %132 = vector.extract_strided_slice %96 {offsets = [0, 255], sizes = [32, 1], strides = [1, 1]} : vector<32x256xf32> to vector<32x1xf32>
    %133 = vector.extract_strided_slice %96 {offsets = [0, 0], sizes = [32, 255], strides = [1, 1]} : vector<32x256xf32> to vector<32x255xf32>
    %134 = tpu.concatenate %132, %133 in 1 : vector<32x1xf32>, vector<32x255xf32> -> vector<32x256xf32>
    %c1_i32_39 = arith.constant 1 : i32
    %135 = vector.broadcast %c1_i32_39 : i32 to vector<1x256xi32>
    %136 = arith.cmpi sge, %1, %135 : vector<1x256xi32>
    %cst_40 = arith.constant 0.000000e+00 : f32
    %137 = vector.shape_cast %136 : vector<1x256xi1> to vector<1x256xi1>
    %138 = vector.broadcast %137 : vector<1x256xi1> to vector<32x256xi1>
    %139 = vector.broadcast %cst_40 : f32 to vector<32x256xf32>
    %140 = arith.select %138, %134, %139 : vector<32x256xi1>, vector<32x256xf32>
    %141 = vector.extract_strided_slice %96 {offsets = [0, 1], sizes = [32, 255], strides = [1, 1]} : vector<32x256xf32> to vector<32x255xf32>
    %142 = vector.extract_strided_slice %96 {offsets = [0, 0], sizes = [32, 1], strides = [1, 1]} : vector<32x256xf32> to vector<32x1xf32>
    %143 = tpu.concatenate %141, %142 in 1 : vector<32x255xf32>, vector<32x1xf32> -> vector<32x256xf32>
    %c14_i32_41 = arith.constant 14 : i32
    %144 = vector.broadcast %c14_i32_41 : i32 to vector<1x256xi32>
    %145 = arith.cmpi sle, %1, %144 : vector<1x256xi32>
    %cst_42 = arith.constant 0.000000e+00 : f32
    %146 = vector.shape_cast %145 : vector<1x256xi1> to vector<1x256xi1>
    %147 = vector.broadcast %146 : vector<1x256xi1> to vector<32x256xi1>
    %148 = vector.broadcast %cst_42 : f32 to vector<32x256xf32>
    %149 = arith.select %147, %143, %148 : vector<32x256xi1>, vector<32x256xf32>
    %150 = vector.extract_strided_slice %96 {offsets = [0, 15], sizes = [32, 241], strides = [1, 1]} : vector<32x256xf32> to vector<32x241xf32>
    %151 = vector.extract_strided_slice %96 {offsets = [0, 0], sizes = [32, 15], strides = [1, 1]} : vector<32x256xf32> to vector<32x15xf32>
    %152 = tpu.concatenate %150, %151 in 1 : vector<32x241xf32>, vector<32x15xf32> -> vector<32x256xf32>
    %c14_i32_43 = arith.constant 14 : i32
    %153 = vector.broadcast %c14_i32_43 : i32 to vector<1x256xi32>
    %154 = arith.cmpi sle, %0, %153 : vector<1x256xi32>
    %c1_i32_44 = arith.constant 1 : i32
    %155 = vector.broadcast %c1_i32_44 : i32 to vector<1x256xi32>
    %156 = arith.cmpi sge, %1, %155 : vector<1x256xi32>
    %157 = arith.andi %154, %156 : vector<1x256xi1>
    %cst_45 = arith.constant 0.000000e+00 : f32
    %158 = vector.shape_cast %157 : vector<1x256xi1> to vector<1x256xi1>
    %159 = vector.broadcast %158 : vector<1x256xi1> to vector<32x256xi1>
    %160 = vector.broadcast %cst_45 : f32 to vector<32x256xf32>
    %161 = arith.select %159, %152, %160 : vector<32x256xi1>, vector<32x256xf32>
    %162 = vector.extract_strided_slice %96 {offsets = [0, 16], sizes = [32, 240], strides = [1, 1]} : vector<32x256xf32> to vector<32x240xf32>
    %163 = vector.extract_strided_slice %96 {offsets = [0, 0], sizes = [32, 16], strides = [1, 1]} : vector<32x256xf32> to vector<32x16xf32>
    %164 = tpu.concatenate %162, %163 in 1 : vector<32x240xf32>, vector<32x16xf32> -> vector<32x256xf32>
    %c14_i32_46 = arith.constant 14 : i32
    %165 = vector.broadcast %c14_i32_46 : i32 to vector<1x256xi32>
    %166 = arith.cmpi sle, %0, %165 : vector<1x256xi32>
    %cst_47 = arith.constant 0.000000e+00 : f32
    %167 = vector.shape_cast %166 : vector<1x256xi1> to vector<1x256xi1>
    %168 = vector.broadcast %167 : vector<1x256xi1> to vector<32x256xi1>
    %169 = vector.broadcast %cst_47 : f32 to vector<32x256xf32>
    %170 = arith.select %168, %164, %169 : vector<32x256xi1>, vector<32x256xf32>
    %171 = vector.extract_strided_slice %96 {offsets = [0, 17], sizes = [32, 239], strides = [1, 1]} : vector<32x256xf32> to vector<32x239xf32>
    %172 = vector.extract_strided_slice %96 {offsets = [0, 0], sizes = [32, 17], strides = [1, 1]} : vector<32x256xf32> to vector<32x17xf32>
    %173 = tpu.concatenate %171, %172 in 1 : vector<32x239xf32>, vector<32x17xf32> -> vector<32x256xf32>
    %c14_i32_48 = arith.constant 14 : i32
    %174 = vector.broadcast %c14_i32_48 : i32 to vector<1x256xi32>
    %175 = arith.cmpi sle, %0, %174 : vector<1x256xi32>
    %c14_i32_49 = arith.constant 14 : i32
    %176 = vector.broadcast %c14_i32_49 : i32 to vector<1x256xi32>
    %177 = arith.cmpi sle, %1, %176 : vector<1x256xi32>
    %178 = arith.andi %175, %177 : vector<1x256xi1>
    %cst_50 = arith.constant 0.000000e+00 : f32
    %179 = vector.shape_cast %178 : vector<1x256xi1> to vector<1x256xi1>
    %180 = vector.broadcast %179 : vector<1x256xi1> to vector<32x256xi1>
    %181 = vector.broadcast %cst_50 : f32 to vector<32x256xf32>
    %182 = arith.select %180, %173, %181 : vector<32x256xi1>, vector<32x256xf32>
    %183 = tpu.concatenate %110, %119, %131, %140, %96, %149, %161, %170, %182 in 0 : vector<32x256xf32>, vector<32x256xf32>, vector<32x256xf32>, vector<32x256xf32>, vector<32x256xf32>, vector<32x256xf32>, vector<32x256xf32>, vector<32x256xf32>, vector<32x256xf32> -> vector<288x256xf32>
    %184 = arith.truncf %183 : vector<288x256xf32> to vector<288x256xbf16>
    %cst_51 = arith.constant dense<0.000000e+00> : vector<32x256xf32>
    %185 = tpu.matmul %97, %184, %cst_51 {dimension_numbers = #tpu.dot_dimension_numbers<[1], [0], [0], [1], [0, 0, 1, 1], [], []>} : vector<32x288xbf16>, vector<288x256xbf16>, vector<32x256xf32> -> vector<32x256xf32>
    %186 = vector.broadcast %98 : vector<32x1xf32> to vector<32x256xf32>
    %187 = arith.addf %185, %186 : vector<32x256xf32>
    %cst_52 = arith.constant 0.000000e+00 : f32
    %188 = vector.broadcast %cst_52 : f32 to vector<32x256xf32>
    %189 = arith.maximumf %187, %188 : vector<32x256xf32>
    %c0_53 = arith.constant 0 : index
    %c0_54 = arith.constant 0 : index
    %190 = vector.load %arg6[%c0_53, %c0_54] : memref<32x288xbf16, #tpu.memory_space<vmem>>, vector<32x288xbf16>
    %c0_55 = arith.constant 0 : index
    %c0_56 = arith.constant 0 : index
    %191 = vector.load %arg7[%c0_55, %c0_56] : memref<32x1xf32, #tpu.memory_space<vmem>>, vector<32x1xf32>
    %192 = vector.extract_strided_slice %189 {offsets = [0, 239], sizes = [32, 17], strides = [1, 1]} : vector<32x256xf32> to vector<32x17xf32>
    %193 = vector.extract_strided_slice %189 {offsets = [0, 0], sizes = [32, 239], strides = [1, 1]} : vector<32x256xf32> to vector<32x239xf32>
    %194 = tpu.concatenate %192, %193 in 1 : vector<32x17xf32>, vector<32x239xf32> -> vector<32x256xf32>
    %c1_i32_57 = arith.constant 1 : i32
    %195 = vector.broadcast %c1_i32_57 : i32 to vector<1x256xi32>
    %196 = arith.cmpi sge, %0, %195 : vector<1x256xi32>
    %c1_i32_58 = arith.constant 1 : i32
    %197 = vector.broadcast %c1_i32_58 : i32 to vector<1x256xi32>
    %198 = arith.cmpi sge, %1, %197 : vector<1x256xi32>
    %199 = arith.andi %196, %198 : vector<1x256xi1>
    %cst_59 = arith.constant 0.000000e+00 : f32
    %200 = vector.shape_cast %199 : vector<1x256xi1> to vector<1x256xi1>
    %201 = vector.broadcast %200 : vector<1x256xi1> to vector<32x256xi1>
    %202 = vector.broadcast %cst_59 : f32 to vector<32x256xf32>
    %203 = arith.select %201, %194, %202 : vector<32x256xi1>, vector<32x256xf32>
    %204 = vector.extract_strided_slice %189 {offsets = [0, 240], sizes = [32, 16], strides = [1, 1]} : vector<32x256xf32> to vector<32x16xf32>
    %205 = vector.extract_strided_slice %189 {offsets = [0, 0], sizes = [32, 240], strides = [1, 1]} : vector<32x256xf32> to vector<32x240xf32>
    %206 = tpu.concatenate %204, %205 in 1 : vector<32x16xf32>, vector<32x240xf32> -> vector<32x256xf32>
    %c1_i32_60 = arith.constant 1 : i32
    %207 = vector.broadcast %c1_i32_60 : i32 to vector<1x256xi32>
    %208 = arith.cmpi sge, %0, %207 : vector<1x256xi32>
    %cst_61 = arith.constant 0.000000e+00 : f32
    %209 = vector.shape_cast %208 : vector<1x256xi1> to vector<1x256xi1>
    %210 = vector.broadcast %209 : vector<1x256xi1> to vector<32x256xi1>
    %211 = vector.broadcast %cst_61 : f32 to vector<32x256xf32>
    %212 = arith.select %210, %206, %211 : vector<32x256xi1>, vector<32x256xf32>
    %213 = vector.extract_strided_slice %189 {offsets = [0, 241], sizes = [32, 15], strides = [1, 1]} : vector<32x256xf32> to vector<32x15xf32>
    %214 = vector.extract_strided_slice %189 {offsets = [0, 0], sizes = [32, 241], strides = [1, 1]} : vector<32x256xf32> to vector<32x241xf32>
    %215 = tpu.concatenate %213, %214 in 1 : vector<32x15xf32>, vector<32x241xf32> -> vector<32x256xf32>
    %c1_i32_62 = arith.constant 1 : i32
    %216 = vector.broadcast %c1_i32_62 : i32 to vector<1x256xi32>
    %217 = arith.cmpi sge, %0, %216 : vector<1x256xi32>
    %c14_i32_63 = arith.constant 14 : i32
    %218 = vector.broadcast %c14_i32_63 : i32 to vector<1x256xi32>
    %219 = arith.cmpi sle, %1, %218 : vector<1x256xi32>
    %220 = arith.andi %217, %219 : vector<1x256xi1>
    %cst_64 = arith.constant 0.000000e+00 : f32
    %221 = vector.shape_cast %220 : vector<1x256xi1> to vector<1x256xi1>
    %222 = vector.broadcast %221 : vector<1x256xi1> to vector<32x256xi1>
    %223 = vector.broadcast %cst_64 : f32 to vector<32x256xf32>
    %224 = arith.select %222, %215, %223 : vector<32x256xi1>, vector<32x256xf32>
    %225 = vector.extract_strided_slice %189 {offsets = [0, 255], sizes = [32, 1], strides = [1, 1]} : vector<32x256xf32> to vector<32x1xf32>
    %226 = vector.extract_strided_slice %189 {offsets = [0, 0], sizes = [32, 255], strides = [1, 1]} : vector<32x256xf32> to vector<32x255xf32>
    %227 = tpu.concatenate %225, %226 in 1 : vector<32x1xf32>, vector<32x255xf32> -> vector<32x256xf32>
    %c1_i32_65 = arith.constant 1 : i32
    %228 = vector.broadcast %c1_i32_65 : i32 to vector<1x256xi32>
    %229 = arith.cmpi sge, %1, %228 : vector<1x256xi32>
    %cst_66 = arith.constant 0.000000e+00 : f32
    %230 = vector.shape_cast %229 : vector<1x256xi1> to vector<1x256xi1>
    %231 = vector.broadcast %230 : vector<1x256xi1> to vector<32x256xi1>
    %232 = vector.broadcast %cst_66 : f32 to vector<32x256xf32>
    %233 = arith.select %231, %227, %232 : vector<32x256xi1>, vector<32x256xf32>
    %234 = vector.extract_strided_slice %189 {offsets = [0, 1], sizes = [32, 255], strides = [1, 1]} : vector<32x256xf32> to vector<32x255xf32>
    %235 = vector.extract_strided_slice %189 {offsets = [0, 0], sizes = [32, 1], strides = [1, 1]} : vector<32x256xf32> to vector<32x1xf32>
    %236 = tpu.concatenate %234, %235 in 1 : vector<32x255xf32>, vector<32x1xf32> -> vector<32x256xf32>
    %c14_i32_67 = arith.constant 14 : i32
    %237 = vector.broadcast %c14_i32_67 : i32 to vector<1x256xi32>
    %238 = arith.cmpi sle, %1, %237 : vector<1x256xi32>
    %cst_68 = arith.constant 0.000000e+00 : f32
    %239 = vector.shape_cast %238 : vector<1x256xi1> to vector<1x256xi1>
    %240 = vector.broadcast %239 : vector<1x256xi1> to vector<32x256xi1>
    %241 = vector.broadcast %cst_68 : f32 to vector<32x256xf32>
    %242 = arith.select %240, %236, %241 : vector<32x256xi1>, vector<32x256xf32>
    %243 = vector.extract_strided_slice %189 {offsets = [0, 15], sizes = [32, 241], strides = [1, 1]} : vector<32x256xf32> to vector<32x241xf32>
    %244 = vector.extract_strided_slice %189 {offsets = [0, 0], sizes = [32, 15], strides = [1, 1]} : vector<32x256xf32> to vector<32x15xf32>
    %245 = tpu.concatenate %243, %244 in 1 : vector<32x241xf32>, vector<32x15xf32> -> vector<32x256xf32>
    %c14_i32_69 = arith.constant 14 : i32
    %246 = vector.broadcast %c14_i32_69 : i32 to vector<1x256xi32>
    %247 = arith.cmpi sle, %0, %246 : vector<1x256xi32>
    %c1_i32_70 = arith.constant 1 : i32
    %248 = vector.broadcast %c1_i32_70 : i32 to vector<1x256xi32>
    %249 = arith.cmpi sge, %1, %248 : vector<1x256xi32>
    %250 = arith.andi %247, %249 : vector<1x256xi1>
    %cst_71 = arith.constant 0.000000e+00 : f32
    %251 = vector.shape_cast %250 : vector<1x256xi1> to vector<1x256xi1>
    %252 = vector.broadcast %251 : vector<1x256xi1> to vector<32x256xi1>
    %253 = vector.broadcast %cst_71 : f32 to vector<32x256xf32>
    %254 = arith.select %252, %245, %253 : vector<32x256xi1>, vector<32x256xf32>
    %255 = vector.extract_strided_slice %189 {offsets = [0, 16], sizes = [32, 240], strides = [1, 1]} : vector<32x256xf32> to vector<32x240xf32>
    %256 = vector.extract_strided_slice %189 {offsets = [0, 0], sizes = [32, 16], strides = [1, 1]} : vector<32x256xf32> to vector<32x16xf32>
    %257 = tpu.concatenate %255, %256 in 1 : vector<32x240xf32>, vector<32x16xf32> -> vector<32x256xf32>
    %c14_i32_72 = arith.constant 14 : i32
    %258 = vector.broadcast %c14_i32_72 : i32 to vector<1x256xi32>
    %259 = arith.cmpi sle, %0, %258 : vector<1x256xi32>
    %cst_73 = arith.constant 0.000000e+00 : f32
    %260 = vector.shape_cast %259 : vector<1x256xi1> to vector<1x256xi1>
    %261 = vector.broadcast %260 : vector<1x256xi1> to vector<32x256xi1>
    %262 = vector.broadcast %cst_73 : f32 to vector<32x256xf32>
    %263 = arith.select %261, %257, %262 : vector<32x256xi1>, vector<32x256xf32>
    %264 = vector.extract_strided_slice %189 {offsets = [0, 17], sizes = [32, 239], strides = [1, 1]} : vector<32x256xf32> to vector<32x239xf32>
    %265 = vector.extract_strided_slice %189 {offsets = [0, 0], sizes = [32, 17], strides = [1, 1]} : vector<32x256xf32> to vector<32x17xf32>
    %266 = tpu.concatenate %264, %265 in 1 : vector<32x239xf32>, vector<32x17xf32> -> vector<32x256xf32>
    %c14_i32_74 = arith.constant 14 : i32
    %267 = vector.broadcast %c14_i32_74 : i32 to vector<1x256xi32>
    %268 = arith.cmpi sle, %0, %267 : vector<1x256xi32>
    %c14_i32_75 = arith.constant 14 : i32
    %269 = vector.broadcast %c14_i32_75 : i32 to vector<1x256xi32>
    %270 = arith.cmpi sle, %1, %269 : vector<1x256xi32>
    %271 = arith.andi %268, %270 : vector<1x256xi1>
    %cst_76 = arith.constant 0.000000e+00 : f32
    %272 = vector.shape_cast %271 : vector<1x256xi1> to vector<1x256xi1>
    %273 = vector.broadcast %272 : vector<1x256xi1> to vector<32x256xi1>
    %274 = vector.broadcast %cst_76 : f32 to vector<32x256xf32>
    %275 = arith.select %273, %266, %274 : vector<32x256xi1>, vector<32x256xf32>
    %276 = tpu.concatenate %203, %212, %224, %233, %189, %242, %254, %263, %275 in 0 : vector<32x256xf32>, vector<32x256xf32>, vector<32x256xf32>, vector<32x256xf32>, vector<32x256xf32>, vector<32x256xf32>, vector<32x256xf32>, vector<32x256xf32>, vector<32x256xf32> -> vector<288x256xf32>
    %277 = arith.truncf %276 : vector<288x256xf32> to vector<288x256xbf16>
    %cst_77 = arith.constant dense<0.000000e+00> : vector<32x256xf32>
    %278 = tpu.matmul %190, %277, %cst_77 {dimension_numbers = #tpu.dot_dimension_numbers<[1], [0], [0], [1], [0, 0, 1, 1], [], []>} : vector<32x288xbf16>, vector<288x256xbf16>, vector<32x256xf32> -> vector<32x256xf32>
    %279 = vector.broadcast %191 : vector<32x1xf32> to vector<32x256xf32>
    %280 = arith.addf %278, %279 : vector<32x256xf32>
    %cst_78 = arith.constant 0.000000e+00 : f32
    %281 = vector.broadcast %cst_78 : f32 to vector<32x256xf32>
    %282 = arith.maximumf %280, %281 : vector<32x256xf32>
    %c0_79 = arith.constant 0 : index
    %c0_80 = arith.constant 0 : index
    %283 = vector.load %arg8[%c0_79, %c0_80] : memref<32x288xbf16, #tpu.memory_space<vmem>>, vector<32x288xbf16>
    %c0_81 = arith.constant 0 : index
    %c0_82 = arith.constant 0 : index
    %284 = vector.load %arg9[%c0_81, %c0_82] : memref<32x1xf32, #tpu.memory_space<vmem>>, vector<32x1xf32>
    %285 = vector.extract_strided_slice %282 {offsets = [0, 239], sizes = [32, 17], strides = [1, 1]} : vector<32x256xf32> to vector<32x17xf32>
    %286 = vector.extract_strided_slice %282 {offsets = [0, 0], sizes = [32, 239], strides = [1, 1]} : vector<32x256xf32> to vector<32x239xf32>
    %287 = tpu.concatenate %285, %286 in 1 : vector<32x17xf32>, vector<32x239xf32> -> vector<32x256xf32>
    %c1_i32_83 = arith.constant 1 : i32
    %288 = vector.broadcast %c1_i32_83 : i32 to vector<1x256xi32>
    %289 = arith.cmpi sge, %0, %288 : vector<1x256xi32>
    %c1_i32_84 = arith.constant 1 : i32
    %290 = vector.broadcast %c1_i32_84 : i32 to vector<1x256xi32>
    %291 = arith.cmpi sge, %1, %290 : vector<1x256xi32>
    %292 = arith.andi %289, %291 : vector<1x256xi1>
    %cst_85 = arith.constant 0.000000e+00 : f32
    %293 = vector.shape_cast %292 : vector<1x256xi1> to vector<1x256xi1>
    %294 = vector.broadcast %293 : vector<1x256xi1> to vector<32x256xi1>
    %295 = vector.broadcast %cst_85 : f32 to vector<32x256xf32>
    %296 = arith.select %294, %287, %295 : vector<32x256xi1>, vector<32x256xf32>
    %297 = vector.extract_strided_slice %282 {offsets = [0, 240], sizes = [32, 16], strides = [1, 1]} : vector<32x256xf32> to vector<32x16xf32>
    %298 = vector.extract_strided_slice %282 {offsets = [0, 0], sizes = [32, 240], strides = [1, 1]} : vector<32x256xf32> to vector<32x240xf32>
    %299 = tpu.concatenate %297, %298 in 1 : vector<32x16xf32>, vector<32x240xf32> -> vector<32x256xf32>
    %c1_i32_86 = arith.constant 1 : i32
    %300 = vector.broadcast %c1_i32_86 : i32 to vector<1x256xi32>
    %301 = arith.cmpi sge, %0, %300 : vector<1x256xi32>
    %cst_87 = arith.constant 0.000000e+00 : f32
    %302 = vector.shape_cast %301 : vector<1x256xi1> to vector<1x256xi1>
    %303 = vector.broadcast %302 : vector<1x256xi1> to vector<32x256xi1>
    %304 = vector.broadcast %cst_87 : f32 to vector<32x256xf32>
    %305 = arith.select %303, %299, %304 : vector<32x256xi1>, vector<32x256xf32>
    %306 = vector.extract_strided_slice %282 {offsets = [0, 241], sizes = [32, 15], strides = [1, 1]} : vector<32x256xf32> to vector<32x15xf32>
    %307 = vector.extract_strided_slice %282 {offsets = [0, 0], sizes = [32, 241], strides = [1, 1]} : vector<32x256xf32> to vector<32x241xf32>
    %308 = tpu.concatenate %306, %307 in 1 : vector<32x15xf32>, vector<32x241xf32> -> vector<32x256xf32>
    %c1_i32_88 = arith.constant 1 : i32
    %309 = vector.broadcast %c1_i32_88 : i32 to vector<1x256xi32>
    %310 = arith.cmpi sge, %0, %309 : vector<1x256xi32>
    %c14_i32_89 = arith.constant 14 : i32
    %311 = vector.broadcast %c14_i32_89 : i32 to vector<1x256xi32>
    %312 = arith.cmpi sle, %1, %311 : vector<1x256xi32>
    %313 = arith.andi %310, %312 : vector<1x256xi1>
    %cst_90 = arith.constant 0.000000e+00 : f32
    %314 = vector.shape_cast %313 : vector<1x256xi1> to vector<1x256xi1>
    %315 = vector.broadcast %314 : vector<1x256xi1> to vector<32x256xi1>
    %316 = vector.broadcast %cst_90 : f32 to vector<32x256xf32>
    %317 = arith.select %315, %308, %316 : vector<32x256xi1>, vector<32x256xf32>
    %318 = vector.extract_strided_slice %282 {offsets = [0, 255], sizes = [32, 1], strides = [1, 1]} : vector<32x256xf32> to vector<32x1xf32>
    %319 = vector.extract_strided_slice %282 {offsets = [0, 0], sizes = [32, 255], strides = [1, 1]} : vector<32x256xf32> to vector<32x255xf32>
    %320 = tpu.concatenate %318, %319 in 1 : vector<32x1xf32>, vector<32x255xf32> -> vector<32x256xf32>
    %c1_i32_91 = arith.constant 1 : i32
    %321 = vector.broadcast %c1_i32_91 : i32 to vector<1x256xi32>
    %322 = arith.cmpi sge, %1, %321 : vector<1x256xi32>
    %cst_92 = arith.constant 0.000000e+00 : f32
    %323 = vector.shape_cast %322 : vector<1x256xi1> to vector<1x256xi1>
    %324 = vector.broadcast %323 : vector<1x256xi1> to vector<32x256xi1>
    %325 = vector.broadcast %cst_92 : f32 to vector<32x256xf32>
    %326 = arith.select %324, %320, %325 : vector<32x256xi1>, vector<32x256xf32>
    %327 = vector.extract_strided_slice %282 {offsets = [0, 1], sizes = [32, 255], strides = [1, 1]} : vector<32x256xf32> to vector<32x255xf32>
    %328 = vector.extract_strided_slice %282 {offsets = [0, 0], sizes = [32, 1], strides = [1, 1]} : vector<32x256xf32> to vector<32x1xf32>
    %329 = tpu.concatenate %327, %328 in 1 : vector<32x255xf32>, vector<32x1xf32> -> vector<32x256xf32>
    %c14_i32_93 = arith.constant 14 : i32
    %330 = vector.broadcast %c14_i32_93 : i32 to vector<1x256xi32>
    %331 = arith.cmpi sle, %1, %330 : vector<1x256xi32>
    %cst_94 = arith.constant 0.000000e+00 : f32
    %332 = vector.shape_cast %331 : vector<1x256xi1> to vector<1x256xi1>
    %333 = vector.broadcast %332 : vector<1x256xi1> to vector<32x256xi1>
    %334 = vector.broadcast %cst_94 : f32 to vector<32x256xf32>
    %335 = arith.select %333, %329, %334 : vector<32x256xi1>, vector<32x256xf32>
    %336 = vector.extract_strided_slice %282 {offsets = [0, 15], sizes = [32, 241], strides = [1, 1]} : vector<32x256xf32> to vector<32x241xf32>
    %337 = vector.extract_strided_slice %282 {offsets = [0, 0], sizes = [32, 15], strides = [1, 1]} : vector<32x256xf32> to vector<32x15xf32>
    %338 = tpu.concatenate %336, %337 in 1 : vector<32x241xf32>, vector<32x15xf32> -> vector<32x256xf32>
    %c14_i32_95 = arith.constant 14 : i32
    %339 = vector.broadcast %c14_i32_95 : i32 to vector<1x256xi32>
    %340 = arith.cmpi sle, %0, %339 : vector<1x256xi32>
    %c1_i32_96 = arith.constant 1 : i32
    %341 = vector.broadcast %c1_i32_96 : i32 to vector<1x256xi32>
    %342 = arith.cmpi sge, %1, %341 : vector<1x256xi32>
    %343 = arith.andi %340, %342 : vector<1x256xi1>
    %cst_97 = arith.constant 0.000000e+00 : f32
    %344 = vector.shape_cast %343 : vector<1x256xi1> to vector<1x256xi1>
    %345 = vector.broadcast %344 : vector<1x256xi1> to vector<32x256xi1>
    %346 = vector.broadcast %cst_97 : f32 to vector<32x256xf32>
    %347 = arith.select %345, %338, %346 : vector<32x256xi1>, vector<32x256xf32>
    %348 = vector.extract_strided_slice %282 {offsets = [0, 16], sizes = [32, 240], strides = [1, 1]} : vector<32x256xf32> to vector<32x240xf32>
    %349 = vector.extract_strided_slice %282 {offsets = [0, 0], sizes = [32, 16], strides = [1, 1]} : vector<32x256xf32> to vector<32x16xf32>
    %350 = tpu.concatenate %348, %349 in 1 : vector<32x240xf32>, vector<32x16xf32> -> vector<32x256xf32>
    %c14_i32_98 = arith.constant 14 : i32
    %351 = vector.broadcast %c14_i32_98 : i32 to vector<1x256xi32>
    %352 = arith.cmpi sle, %0, %351 : vector<1x256xi32>
    %cst_99 = arith.constant 0.000000e+00 : f32
    %353 = vector.shape_cast %352 : vector<1x256xi1> to vector<1x256xi1>
    %354 = vector.broadcast %353 : vector<1x256xi1> to vector<32x256xi1>
    %355 = vector.broadcast %cst_99 : f32 to vector<32x256xf32>
    %356 = arith.select %354, %350, %355 : vector<32x256xi1>, vector<32x256xf32>
    %357 = vector.extract_strided_slice %282 {offsets = [0, 17], sizes = [32, 239], strides = [1, 1]} : vector<32x256xf32> to vector<32x239xf32>
    %358 = vector.extract_strided_slice %282 {offsets = [0, 0], sizes = [32, 17], strides = [1, 1]} : vector<32x256xf32> to vector<32x17xf32>
    %359 = tpu.concatenate %357, %358 in 1 : vector<32x239xf32>, vector<32x17xf32> -> vector<32x256xf32>
    %c14_i32_100 = arith.constant 14 : i32
    %360 = vector.broadcast %c14_i32_100 : i32 to vector<1x256xi32>
    %361 = arith.cmpi sle, %0, %360 : vector<1x256xi32>
    %c14_i32_101 = arith.constant 14 : i32
    %362 = vector.broadcast %c14_i32_101 : i32 to vector<1x256xi32>
    %363 = arith.cmpi sle, %1, %362 : vector<1x256xi32>
    %364 = arith.andi %361, %363 : vector<1x256xi1>
    %cst_102 = arith.constant 0.000000e+00 : f32
    %365 = vector.shape_cast %364 : vector<1x256xi1> to vector<1x256xi1>
    %366 = vector.broadcast %365 : vector<1x256xi1> to vector<32x256xi1>
    %367 = vector.broadcast %cst_102 : f32 to vector<32x256xf32>
    %368 = arith.select %366, %359, %367 : vector<32x256xi1>, vector<32x256xf32>
    %369 = tpu.concatenate %296, %305, %317, %326, %282, %335, %347, %356, %368 in 0 : vector<32x256xf32>, vector<32x256xf32>, vector<32x256xf32>, vector<32x256xf32>, vector<32x256xf32>, vector<32x256xf32>, vector<32x256xf32>, vector<32x256xf32>, vector<32x256xf32> -> vector<288x256xf32>
    %370 = arith.truncf %369 : vector<288x256xf32> to vector<288x256xbf16>
    %cst_103 = arith.constant dense<0.000000e+00> : vector<32x256xf32>
    %371 = tpu.matmul %283, %370, %cst_103 {dimension_numbers = #tpu.dot_dimension_numbers<[1], [0], [0], [1], [0, 0, 1, 1], [], []>} : vector<32x288xbf16>, vector<288x256xbf16>, vector<32x256xf32> -> vector<32x256xf32>
    %372 = vector.broadcast %284 : vector<32x1xf32> to vector<32x256xf32>
    %373 = arith.addf %371, %372 : vector<32x256xf32>
    %cst_104 = arith.constant 0.000000e+00 : f32
    %374 = vector.broadcast %cst_104 : f32 to vector<32x256xf32>
    %375 = arith.maximumf %373, %374 : vector<32x256xf32>
    %376 = tpu.concatenate %282, %375 in 0 : vector<32x256xf32>, vector<32x256xf32> -> vector<64x256xf32>
    %c0_105 = arith.constant 0 : index
    %c0_106 = arith.constant 0 : index
    %377 = vector.load %arg10[%c0_105, %c0_106] : memref<32x576xbf16, #tpu.memory_space<vmem>>, vector<32x576xbf16>
    %c0_107 = arith.constant 0 : index
    %c0_108 = arith.constant 0 : index
    %378 = vector.load %arg11[%c0_107, %c0_108] : memref<32x1xf32, #tpu.memory_space<vmem>>, vector<32x1xf32>
    %379 = vector.extract_strided_slice %376 {offsets = [0, 239], sizes = [64, 17], strides = [1, 1]} : vector<64x256xf32> to vector<64x17xf32>
    %380 = vector.extract_strided_slice %376 {offsets = [0, 0], sizes = [64, 239], strides = [1, 1]} : vector<64x256xf32> to vector<64x239xf32>
    %381 = tpu.concatenate %379, %380 in 1 : vector<64x17xf32>, vector<64x239xf32> -> vector<64x256xf32>
    %c1_i32_109 = arith.constant 1 : i32
    %382 = vector.broadcast %c1_i32_109 : i32 to vector<1x256xi32>
    %383 = arith.cmpi sge, %0, %382 : vector<1x256xi32>
    %c1_i32_110 = arith.constant 1 : i32
    %384 = vector.broadcast %c1_i32_110 : i32 to vector<1x256xi32>
    %385 = arith.cmpi sge, %1, %384 : vector<1x256xi32>
    %386 = arith.andi %383, %385 : vector<1x256xi1>
    %cst_111 = arith.constant 0.000000e+00 : f32
    %387 = vector.shape_cast %386 : vector<1x256xi1> to vector<1x256xi1>
    %388 = vector.broadcast %387 : vector<1x256xi1> to vector<64x256xi1>
    %389 = vector.broadcast %cst_111 : f32 to vector<64x256xf32>
    %390 = arith.select %388, %381, %389 : vector<64x256xi1>, vector<64x256xf32>
    %391 = vector.extract_strided_slice %376 {offsets = [0, 240], sizes = [64, 16], strides = [1, 1]} : vector<64x256xf32> to vector<64x16xf32>
    %392 = vector.extract_strided_slice %376 {offsets = [0, 0], sizes = [64, 240], strides = [1, 1]} : vector<64x256xf32> to vector<64x240xf32>
    %393 = tpu.concatenate %391, %392 in 1 : vector<64x16xf32>, vector<64x240xf32> -> vector<64x256xf32>
    %c1_i32_112 = arith.constant 1 : i32
    %394 = vector.broadcast %c1_i32_112 : i32 to vector<1x256xi32>
    %395 = arith.cmpi sge, %0, %394 : vector<1x256xi32>
    %cst_113 = arith.constant 0.000000e+00 : f32
    %396 = vector.shape_cast %395 : vector<1x256xi1> to vector<1x256xi1>
    %397 = vector.broadcast %396 : vector<1x256xi1> to vector<64x256xi1>
    %398 = vector.broadcast %cst_113 : f32 to vector<64x256xf32>
    %399 = arith.select %397, %393, %398 : vector<64x256xi1>, vector<64x256xf32>
    %400 = vector.extract_strided_slice %376 {offsets = [0, 241], sizes = [64, 15], strides = [1, 1]} : vector<64x256xf32> to vector<64x15xf32>
    %401 = vector.extract_strided_slice %376 {offsets = [0, 0], sizes = [64, 241], strides = [1, 1]} : vector<64x256xf32> to vector<64x241xf32>
    %402 = tpu.concatenate %400, %401 in 1 : vector<64x15xf32>, vector<64x241xf32> -> vector<64x256xf32>
    %c1_i32_114 = arith.constant 1 : i32
    %403 = vector.broadcast %c1_i32_114 : i32 to vector<1x256xi32>
    %404 = arith.cmpi sge, %0, %403 : vector<1x256xi32>
    %c14_i32_115 = arith.constant 14 : i32
    %405 = vector.broadcast %c14_i32_115 : i32 to vector<1x256xi32>
    %406 = arith.cmpi sle, %1, %405 : vector<1x256xi32>
    %407 = arith.andi %404, %406 : vector<1x256xi1>
    %cst_116 = arith.constant 0.000000e+00 : f32
    %408 = vector.shape_cast %407 : vector<1x256xi1> to vector<1x256xi1>
    %409 = vector.broadcast %408 : vector<1x256xi1> to vector<64x256xi1>
    %410 = vector.broadcast %cst_116 : f32 to vector<64x256xf32>
    %411 = arith.select %409, %402, %410 : vector<64x256xi1>, vector<64x256xf32>
    %412 = vector.extract_strided_slice %376 {offsets = [0, 255], sizes = [64, 1], strides = [1, 1]} : vector<64x256xf32> to vector<64x1xf32>
    %413 = vector.extract_strided_slice %376 {offsets = [0, 0], sizes = [64, 255], strides = [1, 1]} : vector<64x256xf32> to vector<64x255xf32>
    %414 = tpu.concatenate %412, %413 in 1 : vector<64x1xf32>, vector<64x255xf32> -> vector<64x256xf32>
    %c1_i32_117 = arith.constant 1 : i32
    %415 = vector.broadcast %c1_i32_117 : i32 to vector<1x256xi32>
    %416 = arith.cmpi sge, %1, %415 : vector<1x256xi32>
    %cst_118 = arith.constant 0.000000e+00 : f32
    %417 = vector.shape_cast %416 : vector<1x256xi1> to vector<1x256xi1>
    %418 = vector.broadcast %417 : vector<1x256xi1> to vector<64x256xi1>
    %419 = vector.broadcast %cst_118 : f32 to vector<64x256xf32>
    %420 = arith.select %418, %414, %419 : vector<64x256xi1>, vector<64x256xf32>
    %421 = vector.extract_strided_slice %376 {offsets = [0, 1], sizes = [64, 255], strides = [1, 1]} : vector<64x256xf32> to vector<64x255xf32>
    %422 = vector.extract_strided_slice %376 {offsets = [0, 0], sizes = [64, 1], strides = [1, 1]} : vector<64x256xf32> to vector<64x1xf32>
    %423 = tpu.concatenate %421, %422 in 1 : vector<64x255xf32>, vector<64x1xf32> -> vector<64x256xf32>
    %c14_i32_119 = arith.constant 14 : i32
    %424 = vector.broadcast %c14_i32_119 : i32 to vector<1x256xi32>
    %425 = arith.cmpi sle, %1, %424 : vector<1x256xi32>
    %cst_120 = arith.constant 0.000000e+00 : f32
    %426 = vector.shape_cast %425 : vector<1x256xi1> to vector<1x256xi1>
    %427 = vector.broadcast %426 : vector<1x256xi1> to vector<64x256xi1>
    %428 = vector.broadcast %cst_120 : f32 to vector<64x256xf32>
    %429 = arith.select %427, %423, %428 : vector<64x256xi1>, vector<64x256xf32>
    %430 = vector.extract_strided_slice %376 {offsets = [0, 15], sizes = [64, 241], strides = [1, 1]} : vector<64x256xf32> to vector<64x241xf32>
    %431 = vector.extract_strided_slice %376 {offsets = [0, 0], sizes = [64, 15], strides = [1, 1]} : vector<64x256xf32> to vector<64x15xf32>
    %432 = tpu.concatenate %430, %431 in 1 : vector<64x241xf32>, vector<64x15xf32> -> vector<64x256xf32>
    %c14_i32_121 = arith.constant 14 : i32
    %433 = vector.broadcast %c14_i32_121 : i32 to vector<1x256xi32>
    %434 = arith.cmpi sle, %0, %433 : vector<1x256xi32>
    %c1_i32_122 = arith.constant 1 : i32
    %435 = vector.broadcast %c1_i32_122 : i32 to vector<1x256xi32>
    %436 = arith.cmpi sge, %1, %435 : vector<1x256xi32>
    %437 = arith.andi %434, %436 : vector<1x256xi1>
    %cst_123 = arith.constant 0.000000e+00 : f32
    %438 = vector.shape_cast %437 : vector<1x256xi1> to vector<1x256xi1>
    %439 = vector.broadcast %438 : vector<1x256xi1> to vector<64x256xi1>
    %440 = vector.broadcast %cst_123 : f32 to vector<64x256xf32>
    %441 = arith.select %439, %432, %440 : vector<64x256xi1>, vector<64x256xf32>
    %442 = vector.extract_strided_slice %376 {offsets = [0, 16], sizes = [64, 240], strides = [1, 1]} : vector<64x256xf32> to vector<64x240xf32>
    %443 = vector.extract_strided_slice %376 {offsets = [0, 0], sizes = [64, 16], strides = [1, 1]} : vector<64x256xf32> to vector<64x16xf32>
    %444 = tpu.concatenate %442, %443 in 1 : vector<64x240xf32>, vector<64x16xf32> -> vector<64x256xf32>
    %c14_i32_124 = arith.constant 14 : i32
    %445 = vector.broadcast %c14_i32_124 : i32 to vector<1x256xi32>
    %446 = arith.cmpi sle, %0, %445 : vector<1x256xi32>
    %cst_125 = arith.constant 0.000000e+00 : f32
    %447 = vector.shape_cast %446 : vector<1x256xi1> to vector<1x256xi1>
    %448 = vector.broadcast %447 : vector<1x256xi1> to vector<64x256xi1>
    %449 = vector.broadcast %cst_125 : f32 to vector<64x256xf32>
    %450 = arith.select %448, %444, %449 : vector<64x256xi1>, vector<64x256xf32>
    %451 = vector.extract_strided_slice %376 {offsets = [0, 17], sizes = [64, 239], strides = [1, 1]} : vector<64x256xf32> to vector<64x239xf32>
    %452 = vector.extract_strided_slice %376 {offsets = [0, 0], sizes = [64, 17], strides = [1, 1]} : vector<64x256xf32> to vector<64x17xf32>
    %453 = tpu.concatenate %451, %452 in 1 : vector<64x239xf32>, vector<64x17xf32> -> vector<64x256xf32>
    %c14_i32_126 = arith.constant 14 : i32
    %454 = vector.broadcast %c14_i32_126 : i32 to vector<1x256xi32>
    %455 = arith.cmpi sle, %0, %454 : vector<1x256xi32>
    %c14_i32_127 = arith.constant 14 : i32
    %456 = vector.broadcast %c14_i32_127 : i32 to vector<1x256xi32>
    %457 = arith.cmpi sle, %1, %456 : vector<1x256xi32>
    %458 = arith.andi %455, %457 : vector<1x256xi1>
    %cst_128 = arith.constant 0.000000e+00 : f32
    %459 = vector.shape_cast %458 : vector<1x256xi1> to vector<1x256xi1>
    %460 = vector.broadcast %459 : vector<1x256xi1> to vector<64x256xi1>
    %461 = vector.broadcast %cst_128 : f32 to vector<64x256xf32>
    %462 = arith.select %460, %453, %461 : vector<64x256xi1>, vector<64x256xf32>
    %463 = tpu.concatenate %390, %399, %411, %420, %376, %429, %441, %450, %462 in 0 : vector<64x256xf32>, vector<64x256xf32>, vector<64x256xf32>, vector<64x256xf32>, vector<64x256xf32>, vector<64x256xf32>, vector<64x256xf32>, vector<64x256xf32>, vector<64x256xf32> -> vector<576x256xf32>
    %464 = arith.truncf %463 : vector<576x256xf32> to vector<576x256xbf16>
    %cst_129 = arith.constant dense<0.000000e+00> : vector<32x256xf32>
    %465 = tpu.matmul %377, %464, %cst_129 {dimension_numbers = #tpu.dot_dimension_numbers<[1], [0], [0], [1], [0, 0, 1, 1], [], []>} : vector<32x576xbf16>, vector<576x256xbf16>, vector<32x256xf32> -> vector<32x256xf32>
    %466 = vector.broadcast %378 : vector<32x1xf32> to vector<32x256xf32>
    %467 = arith.addf %465, %466 : vector<32x256xf32>
    %cst_130 = arith.constant 0.000000e+00 : f32
    %468 = vector.broadcast %cst_130 : f32 to vector<32x256xf32>
    %469 = arith.maximumf %467, %468 : vector<32x256xf32>
    %470 = tpu.concatenate %189, %469 in 0 : vector<32x256xf32>, vector<32x256xf32> -> vector<64x256xf32>
    %c0_131 = arith.constant 0 : index
    %c0_132 = arith.constant 0 : index
    %471 = vector.load %arg12[%c0_131, %c0_132] : memref<32x576xbf16, #tpu.memory_space<vmem>>, vector<32x576xbf16>
    %c0_133 = arith.constant 0 : index
    %c0_134 = arith.constant 0 : index
    %472 = vector.load %arg13[%c0_133, %c0_134] : memref<32x1xf32, #tpu.memory_space<vmem>>, vector<32x1xf32>
    %473 = vector.extract_strided_slice %470 {offsets = [0, 239], sizes = [64, 17], strides = [1, 1]} : vector<64x256xf32> to vector<64x17xf32>
    %474 = vector.extract_strided_slice %470 {offsets = [0, 0], sizes = [64, 239], strides = [1, 1]} : vector<64x256xf32> to vector<64x239xf32>
    %475 = tpu.concatenate %473, %474 in 1 : vector<64x17xf32>, vector<64x239xf32> -> vector<64x256xf32>
    %c1_i32_135 = arith.constant 1 : i32
    %476 = vector.broadcast %c1_i32_135 : i32 to vector<1x256xi32>
    %477 = arith.cmpi sge, %0, %476 : vector<1x256xi32>
    %c1_i32_136 = arith.constant 1 : i32
    %478 = vector.broadcast %c1_i32_136 : i32 to vector<1x256xi32>
    %479 = arith.cmpi sge, %1, %478 : vector<1x256xi32>
    %480 = arith.andi %477, %479 : vector<1x256xi1>
    %cst_137 = arith.constant 0.000000e+00 : f32
    %481 = vector.shape_cast %480 : vector<1x256xi1> to vector<1x256xi1>
    %482 = vector.broadcast %481 : vector<1x256xi1> to vector<64x256xi1>
    %483 = vector.broadcast %cst_137 : f32 to vector<64x256xf32>
    %484 = arith.select %482, %475, %483 : vector<64x256xi1>, vector<64x256xf32>
    %485 = vector.extract_strided_slice %470 {offsets = [0, 240], sizes = [64, 16], strides = [1, 1]} : vector<64x256xf32> to vector<64x16xf32>
    %486 = vector.extract_strided_slice %470 {offsets = [0, 0], sizes = [64, 240], strides = [1, 1]} : vector<64x256xf32> to vector<64x240xf32>
    %487 = tpu.concatenate %485, %486 in 1 : vector<64x16xf32>, vector<64x240xf32> -> vector<64x256xf32>
    %c1_i32_138 = arith.constant 1 : i32
    %488 = vector.broadcast %c1_i32_138 : i32 to vector<1x256xi32>
    %489 = arith.cmpi sge, %0, %488 : vector<1x256xi32>
    %cst_139 = arith.constant 0.000000e+00 : f32
    %490 = vector.shape_cast %489 : vector<1x256xi1> to vector<1x256xi1>
    %491 = vector.broadcast %490 : vector<1x256xi1> to vector<64x256xi1>
    %492 = vector.broadcast %cst_139 : f32 to vector<64x256xf32>
    %493 = arith.select %491, %487, %492 : vector<64x256xi1>, vector<64x256xf32>
    %494 = vector.extract_strided_slice %470 {offsets = [0, 241], sizes = [64, 15], strides = [1, 1]} : vector<64x256xf32> to vector<64x15xf32>
    %495 = vector.extract_strided_slice %470 {offsets = [0, 0], sizes = [64, 241], strides = [1, 1]} : vector<64x256xf32> to vector<64x241xf32>
    %496 = tpu.concatenate %494, %495 in 1 : vector<64x15xf32>, vector<64x241xf32> -> vector<64x256xf32>
    %c1_i32_140 = arith.constant 1 : i32
    %497 = vector.broadcast %c1_i32_140 : i32 to vector<1x256xi32>
    %498 = arith.cmpi sge, %0, %497 : vector<1x256xi32>
    %c14_i32_141 = arith.constant 14 : i32
    %499 = vector.broadcast %c14_i32_141 : i32 to vector<1x256xi32>
    %500 = arith.cmpi sle, %1, %499 : vector<1x256xi32>
    %501 = arith.andi %498, %500 : vector<1x256xi1>
    %cst_142 = arith.constant 0.000000e+00 : f32
    %502 = vector.shape_cast %501 : vector<1x256xi1> to vector<1x256xi1>
    %503 = vector.broadcast %502 : vector<1x256xi1> to vector<64x256xi1>
    %504 = vector.broadcast %cst_142 : f32 to vector<64x256xf32>
    %505 = arith.select %503, %496, %504 : vector<64x256xi1>, vector<64x256xf32>
    %506 = vector.extract_strided_slice %470 {offsets = [0, 255], sizes = [64, 1], strides = [1, 1]} : vector<64x256xf32> to vector<64x1xf32>
    %507 = vector.extract_strided_slice %470 {offsets = [0, 0], sizes = [64, 255], strides = [1, 1]} : vector<64x256xf32> to vector<64x255xf32>
    %508 = tpu.concatenate %506, %507 in 1 : vector<64x1xf32>, vector<64x255xf32> -> vector<64x256xf32>
    %c1_i32_143 = arith.constant 1 : i32
    %509 = vector.broadcast %c1_i32_143 : i32 to vector<1x256xi32>
    %510 = arith.cmpi sge, %1, %509 : vector<1x256xi32>
    %cst_144 = arith.constant 0.000000e+00 : f32
    %511 = vector.shape_cast %510 : vector<1x256xi1> to vector<1x256xi1>
    %512 = vector.broadcast %511 : vector<1x256xi1> to vector<64x256xi1>
    %513 = vector.broadcast %cst_144 : f32 to vector<64x256xf32>
    %514 = arith.select %512, %508, %513 : vector<64x256xi1>, vector<64x256xf32>
    %515 = vector.extract_strided_slice %470 {offsets = [0, 1], sizes = [64, 255], strides = [1, 1]} : vector<64x256xf32> to vector<64x255xf32>
    %516 = vector.extract_strided_slice %470 {offsets = [0, 0], sizes = [64, 1], strides = [1, 1]} : vector<64x256xf32> to vector<64x1xf32>
    %517 = tpu.concatenate %515, %516 in 1 : vector<64x255xf32>, vector<64x1xf32> -> vector<64x256xf32>
    %c14_i32_145 = arith.constant 14 : i32
    %518 = vector.broadcast %c14_i32_145 : i32 to vector<1x256xi32>
    %519 = arith.cmpi sle, %1, %518 : vector<1x256xi32>
    %cst_146 = arith.constant 0.000000e+00 : f32
    %520 = vector.shape_cast %519 : vector<1x256xi1> to vector<1x256xi1>
    %521 = vector.broadcast %520 : vector<1x256xi1> to vector<64x256xi1>
    %522 = vector.broadcast %cst_146 : f32 to vector<64x256xf32>
    %523 = arith.select %521, %517, %522 : vector<64x256xi1>, vector<64x256xf32>
    %524 = vector.extract_strided_slice %470 {offsets = [0, 15], sizes = [64, 241], strides = [1, 1]} : vector<64x256xf32> to vector<64x241xf32>
    %525 = vector.extract_strided_slice %470 {offsets = [0, 0], sizes = [64, 15], strides = [1, 1]} : vector<64x256xf32> to vector<64x15xf32>
    %526 = tpu.concatenate %524, %525 in 1 : vector<64x241xf32>, vector<64x15xf32> -> vector<64x256xf32>
    %c14_i32_147 = arith.constant 14 : i32
    %527 = vector.broadcast %c14_i32_147 : i32 to vector<1x256xi32>
    %528 = arith.cmpi sle, %0, %527 : vector<1x256xi32>
    %c1_i32_148 = arith.constant 1 : i32
    %529 = vector.broadcast %c1_i32_148 : i32 to vector<1x256xi32>
    %530 = arith.cmpi sge, %1, %529 : vector<1x256xi32>
    %531 = arith.andi %528, %530 : vector<1x256xi1>
    %cst_149 = arith.constant 0.000000e+00 : f32
    %532 = vector.shape_cast %531 : vector<1x256xi1> to vector<1x256xi1>
    %533 = vector.broadcast %532 : vector<1x256xi1> to vector<64x256xi1>
    %534 = vector.broadcast %cst_149 : f32 to vector<64x256xf32>
    %535 = arith.select %533, %526, %534 : vector<64x256xi1>, vector<64x256xf32>
    %536 = vector.extract_strided_slice %470 {offsets = [0, 16], sizes = [64, 240], strides = [1, 1]} : vector<64x256xf32> to vector<64x240xf32>
    %537 = vector.extract_strided_slice %470 {offsets = [0, 0], sizes = [64, 16], strides = [1, 1]} : vector<64x256xf32> to vector<64x16xf32>
    %538 = tpu.concatenate %536, %537 in 1 : vector<64x240xf32>, vector<64x16xf32> -> vector<64x256xf32>
    %c14_i32_150 = arith.constant 14 : i32
    %539 = vector.broadcast %c14_i32_150 : i32 to vector<1x256xi32>
    %540 = arith.cmpi sle, %0, %539 : vector<1x256xi32>
    %cst_151 = arith.constant 0.000000e+00 : f32
    %541 = vector.shape_cast %540 : vector<1x256xi1> to vector<1x256xi1>
    %542 = vector.broadcast %541 : vector<1x256xi1> to vector<64x256xi1>
    %543 = vector.broadcast %cst_151 : f32 to vector<64x256xf32>
    %544 = arith.select %542, %538, %543 : vector<64x256xi1>, vector<64x256xf32>
    %545 = vector.extract_strided_slice %470 {offsets = [0, 17], sizes = [64, 239], strides = [1, 1]} : vector<64x256xf32> to vector<64x239xf32>
    %546 = vector.extract_strided_slice %470 {offsets = [0, 0], sizes = [64, 17], strides = [1, 1]} : vector<64x256xf32> to vector<64x17xf32>
    %547 = tpu.concatenate %545, %546 in 1 : vector<64x239xf32>, vector<64x17xf32> -> vector<64x256xf32>
    %c14_i32_152 = arith.constant 14 : i32
    %548 = vector.broadcast %c14_i32_152 : i32 to vector<1x256xi32>
    %549 = arith.cmpi sle, %0, %548 : vector<1x256xi32>
    %c14_i32_153 = arith.constant 14 : i32
    %550 = vector.broadcast %c14_i32_153 : i32 to vector<1x256xi32>
    %551 = arith.cmpi sle, %1, %550 : vector<1x256xi32>
    %552 = arith.andi %549, %551 : vector<1x256xi1>
    %cst_154 = arith.constant 0.000000e+00 : f32
    %553 = vector.shape_cast %552 : vector<1x256xi1> to vector<1x256xi1>
    %554 = vector.broadcast %553 : vector<1x256xi1> to vector<64x256xi1>
    %555 = vector.broadcast %cst_154 : f32 to vector<64x256xf32>
    %556 = arith.select %554, %547, %555 : vector<64x256xi1>, vector<64x256xf32>
    %557 = tpu.concatenate %484, %493, %505, %514, %470, %523, %535, %544, %556 in 0 : vector<64x256xf32>, vector<64x256xf32>, vector<64x256xf32>, vector<64x256xf32>, vector<64x256xf32>, vector<64x256xf32>, vector<64x256xf32>, vector<64x256xf32>, vector<64x256xf32> -> vector<576x256xf32>
    %558 = arith.truncf %557 : vector<576x256xf32> to vector<576x256xbf16>
    %cst_155 = arith.constant dense<0.000000e+00> : vector<32x256xf32>
    %559 = tpu.matmul %471, %558, %cst_155 {dimension_numbers = #tpu.dot_dimension_numbers<[1], [0], [0], [1], [0, 0, 1, 1], [], []>} : vector<32x576xbf16>, vector<576x256xbf16>, vector<32x256xf32> -> vector<32x256xf32>
    %560 = vector.broadcast %472 : vector<32x1xf32> to vector<32x256xf32>
    %561 = arith.addf %559, %560 : vector<32x256xf32>
    %cst_156 = arith.constant 0.000000e+00 : f32
    %562 = vector.broadcast %cst_156 : f32 to vector<32x256xf32>
    %563 = arith.maximumf %561, %562 : vector<32x256xf32>
    %564 = tpu.concatenate %96, %563 in 0 : vector<32x256xf32>, vector<32x256xf32> -> vector<64x256xf32>
    %c0_157 = arith.constant 0 : index
    %c0_158 = arith.constant 0 : index
    %565 = vector.load %arg14[%c0_157, %c0_158] : memref<24x576xbf16, #tpu.memory_space<vmem>>, vector<24x576xbf16>
    %c0_159 = arith.constant 0 : index
    %c0_160 = arith.constant 0 : index
    %566 = vector.load %arg15[%c0_159, %c0_160] : memref<24x1xf32, #tpu.memory_space<vmem>>, vector<24x1xf32>
    %567 = vector.extract_strided_slice %564 {offsets = [0, 239], sizes = [64, 17], strides = [1, 1]} : vector<64x256xf32> to vector<64x17xf32>
    %568 = vector.extract_strided_slice %564 {offsets = [0, 0], sizes = [64, 239], strides = [1, 1]} : vector<64x256xf32> to vector<64x239xf32>
    %569 = tpu.concatenate %567, %568 in 1 : vector<64x17xf32>, vector<64x239xf32> -> vector<64x256xf32>
    %c1_i32_161 = arith.constant 1 : i32
    %570 = vector.broadcast %c1_i32_161 : i32 to vector<1x256xi32>
    %571 = arith.cmpi sge, %0, %570 : vector<1x256xi32>
    %c1_i32_162 = arith.constant 1 : i32
    %572 = vector.broadcast %c1_i32_162 : i32 to vector<1x256xi32>
    %573 = arith.cmpi sge, %1, %572 : vector<1x256xi32>
    %574 = arith.andi %571, %573 : vector<1x256xi1>
    %cst_163 = arith.constant 0.000000e+00 : f32
    %575 = vector.shape_cast %574 : vector<1x256xi1> to vector<1x256xi1>
    %576 = vector.broadcast %575 : vector<1x256xi1> to vector<64x256xi1>
    %577 = vector.broadcast %cst_163 : f32 to vector<64x256xf32>
    %578 = arith.select %576, %569, %577 : vector<64x256xi1>, vector<64x256xf32>
    %579 = vector.extract_strided_slice %564 {offsets = [0, 240], sizes = [64, 16], strides = [1, 1]} : vector<64x256xf32> to vector<64x16xf32>
    %580 = vector.extract_strided_slice %564 {offsets = [0, 0], sizes = [64, 240], strides = [1, 1]} : vector<64x256xf32> to vector<64x240xf32>
    %581 = tpu.concatenate %579, %580 in 1 : vector<64x16xf32>, vector<64x240xf32> -> vector<64x256xf32>
    %c1_i32_164 = arith.constant 1 : i32
    %582 = vector.broadcast %c1_i32_164 : i32 to vector<1x256xi32>
    %583 = arith.cmpi sge, %0, %582 : vector<1x256xi32>
    %cst_165 = arith.constant 0.000000e+00 : f32
    %584 = vector.shape_cast %583 : vector<1x256xi1> to vector<1x256xi1>
    %585 = vector.broadcast %584 : vector<1x256xi1> to vector<64x256xi1>
    %586 = vector.broadcast %cst_165 : f32 to vector<64x256xf32>
    %587 = arith.select %585, %581, %586 : vector<64x256xi1>, vector<64x256xf32>
    %588 = vector.extract_strided_slice %564 {offsets = [0, 241], sizes = [64, 15], strides = [1, 1]} : vector<64x256xf32> to vector<64x15xf32>
    %589 = vector.extract_strided_slice %564 {offsets = [0, 0], sizes = [64, 241], strides = [1, 1]} : vector<64x256xf32> to vector<64x241xf32>
    %590 = tpu.concatenate %588, %589 in 1 : vector<64x15xf32>, vector<64x241xf32> -> vector<64x256xf32>
    %c1_i32_166 = arith.constant 1 : i32
    %591 = vector.broadcast %c1_i32_166 : i32 to vector<1x256xi32>
    %592 = arith.cmpi sge, %0, %591 : vector<1x256xi32>
    %c14_i32_167 = arith.constant 14 : i32
    %593 = vector.broadcast %c14_i32_167 : i32 to vector<1x256xi32>
    %594 = arith.cmpi sle, %1, %593 : vector<1x256xi32>
    %595 = arith.andi %592, %594 : vector<1x256xi1>
    %cst_168 = arith.constant 0.000000e+00 : f32
    %596 = vector.shape_cast %595 : vector<1x256xi1> to vector<1x256xi1>
    %597 = vector.broadcast %596 : vector<1x256xi1> to vector<64x256xi1>
    %598 = vector.broadcast %cst_168 : f32 to vector<64x256xf32>
    %599 = arith.select %597, %590, %598 : vector<64x256xi1>, vector<64x256xf32>
    %600 = vector.extract_strided_slice %564 {offsets = [0, 255], sizes = [64, 1], strides = [1, 1]} : vector<64x256xf32> to vector<64x1xf32>
    %601 = vector.extract_strided_slice %564 {offsets = [0, 0], sizes = [64, 255], strides = [1, 1]} : vector<64x256xf32> to vector<64x255xf32>
    %602 = tpu.concatenate %600, %601 in 1 : vector<64x1xf32>, vector<64x255xf32> -> vector<64x256xf32>
    %c1_i32_169 = arith.constant 1 : i32
    %603 = vector.broadcast %c1_i32_169 : i32 to vector<1x256xi32>
    %604 = arith.cmpi sge, %1, %603 : vector<1x256xi32>
    %cst_170 = arith.constant 0.000000e+00 : f32
    %605 = vector.shape_cast %604 : vector<1x256xi1> to vector<1x256xi1>
    %606 = vector.broadcast %605 : vector<1x256xi1> to vector<64x256xi1>
    %607 = vector.broadcast %cst_170 : f32 to vector<64x256xf32>
    %608 = arith.select %606, %602, %607 : vector<64x256xi1>, vector<64x256xf32>
    %609 = vector.extract_strided_slice %564 {offsets = [0, 1], sizes = [64, 255], strides = [1, 1]} : vector<64x256xf32> to vector<64x255xf32>
    %610 = vector.extract_strided_slice %564 {offsets = [0, 0], sizes = [64, 1], strides = [1, 1]} : vector<64x256xf32> to vector<64x1xf32>
    %611 = tpu.concatenate %609, %610 in 1 : vector<64x255xf32>, vector<64x1xf32> -> vector<64x256xf32>
    %c14_i32_171 = arith.constant 14 : i32
    %612 = vector.broadcast %c14_i32_171 : i32 to vector<1x256xi32>
    %613 = arith.cmpi sle, %1, %612 : vector<1x256xi32>
    %cst_172 = arith.constant 0.000000e+00 : f32
    %614 = vector.shape_cast %613 : vector<1x256xi1> to vector<1x256xi1>
    %615 = vector.broadcast %614 : vector<1x256xi1> to vector<64x256xi1>
    %616 = vector.broadcast %cst_172 : f32 to vector<64x256xf32>
    %617 = arith.select %615, %611, %616 : vector<64x256xi1>, vector<64x256xf32>
    %618 = vector.extract_strided_slice %564 {offsets = [0, 15], sizes = [64, 241], strides = [1, 1]} : vector<64x256xf32> to vector<64x241xf32>
    %619 = vector.extract_strided_slice %564 {offsets = [0, 0], sizes = [64, 15], strides = [1, 1]} : vector<64x256xf32> to vector<64x15xf32>
    %620 = tpu.concatenate %618, %619 in 1 : vector<64x241xf32>, vector<64x15xf32> -> vector<64x256xf32>
    %c14_i32_173 = arith.constant 14 : i32
    %621 = vector.broadcast %c14_i32_173 : i32 to vector<1x256xi32>
    %622 = arith.cmpi sle, %0, %621 : vector<1x256xi32>
    %c1_i32_174 = arith.constant 1 : i32
    %623 = vector.broadcast %c1_i32_174 : i32 to vector<1x256xi32>
    %624 = arith.cmpi sge, %1, %623 : vector<1x256xi32>
    %625 = arith.andi %622, %624 : vector<1x256xi1>
    %cst_175 = arith.constant 0.000000e+00 : f32
    %626 = vector.shape_cast %625 : vector<1x256xi1> to vector<1x256xi1>
    %627 = vector.broadcast %626 : vector<1x256xi1> to vector<64x256xi1>
    %628 = vector.broadcast %cst_175 : f32 to vector<64x256xf32>
    %629 = arith.select %627, %620, %628 : vector<64x256xi1>, vector<64x256xf32>
    %630 = vector.extract_strided_slice %564 {offsets = [0, 16], sizes = [64, 240], strides = [1, 1]} : vector<64x256xf32> to vector<64x240xf32>
    %631 = vector.extract_strided_slice %564 {offsets = [0, 0], sizes = [64, 16], strides = [1, 1]} : vector<64x256xf32> to vector<64x16xf32>
    %632 = tpu.concatenate %630, %631 in 1 : vector<64x240xf32>, vector<64x16xf32> -> vector<64x256xf32>
    %c14_i32_176 = arith.constant 14 : i32
    %633 = vector.broadcast %c14_i32_176 : i32 to vector<1x256xi32>
    %634 = arith.cmpi sle, %0, %633 : vector<1x256xi32>
    %cst_177 = arith.constant 0.000000e+00 : f32
    %635 = vector.shape_cast %634 : vector<1x256xi1> to vector<1x256xi1>
    %636 = vector.broadcast %635 : vector<1x256xi1> to vector<64x256xi1>
    %637 = vector.broadcast %cst_177 : f32 to vector<64x256xf32>
    %638 = arith.select %636, %632, %637 : vector<64x256xi1>, vector<64x256xf32>
    %639 = vector.extract_strided_slice %564 {offsets = [0, 17], sizes = [64, 239], strides = [1, 1]} : vector<64x256xf32> to vector<64x239xf32>
    %640 = vector.extract_strided_slice %564 {offsets = [0, 0], sizes = [64, 17], strides = [1, 1]} : vector<64x256xf32> to vector<64x17xf32>
    %641 = tpu.concatenate %639, %640 in 1 : vector<64x239xf32>, vector<64x17xf32> -> vector<64x256xf32>
    %c14_i32_178 = arith.constant 14 : i32
    %642 = vector.broadcast %c14_i32_178 : i32 to vector<1x256xi32>
    %643 = arith.cmpi sle, %0, %642 : vector<1x256xi32>
    %c14_i32_179 = arith.constant 14 : i32
    %644 = vector.broadcast %c14_i32_179 : i32 to vector<1x256xi32>
    %645 = arith.cmpi sle, %1, %644 : vector<1x256xi32>
    %646 = arith.andi %643, %645 : vector<1x256xi1>
    %cst_180 = arith.constant 0.000000e+00 : f32
    %647 = vector.shape_cast %646 : vector<1x256xi1> to vector<1x256xi1>
    %648 = vector.broadcast %647 : vector<1x256xi1> to vector<64x256xi1>
    %649 = vector.broadcast %cst_180 : f32 to vector<64x256xf32>
    %650 = arith.select %648, %641, %649 : vector<64x256xi1>, vector<64x256xf32>
    %651 = tpu.concatenate %578, %587, %599, %608, %564, %617, %629, %638, %650 in 0 : vector<64x256xf32>, vector<64x256xf32>, vector<64x256xf32>, vector<64x256xf32>, vector<64x256xf32>, vector<64x256xf32>, vector<64x256xf32>, vector<64x256xf32>, vector<64x256xf32> -> vector<576x256xf32>
    %652 = arith.truncf %651 : vector<576x256xf32> to vector<576x256xbf16>
    %cst_181 = arith.constant dense<0.000000e+00> : vector<24x256xf32>
    %653 = tpu.matmul %565, %652, %cst_181 {dimension_numbers = #tpu.dot_dimension_numbers<[1], [0], [0], [1], [0, 0, 1, 1], [], []>} : vector<24x576xbf16>, vector<576x256xbf16>, vector<24x256xf32> -> vector<24x256xf32>
    %654 = vector.broadcast %566 : vector<24x1xf32> to vector<24x256xf32>
    %655 = arith.addf %653, %654 : vector<24x256xf32>
    %656 = math.tanh %655 : vector<24x256xf32>
    %657 = vector.extract_strided_slice %656 {offsets = [0, 0], sizes = [3, 256], strides = [1, 1]} : vector<24x256xf32> to vector<3x256xf32>
    %658 = arith.mulf %3, %3 : vector<3x256xf32>
    %659 = arith.subf %658, %3 : vector<3x256xf32>
    %660 = arith.mulf %657, %659 : vector<3x256xf32>
    %661 = arith.addf %3, %660 : vector<3x256xf32>
    %662 = vector.extract_strided_slice %656 {offsets = [3, 0], sizes = [3, 256], strides = [1, 1]} : vector<24x256xf32> to vector<3x256xf32>
    %663 = arith.mulf %661, %661 : vector<3x256xf32>
    %664 = arith.subf %663, %661 : vector<3x256xf32>
    %665 = arith.mulf %662, %664 : vector<3x256xf32>
    %666 = arith.addf %661, %665 : vector<3x256xf32>
    %667 = vector.extract_strided_slice %656 {offsets = [6, 0], sizes = [3, 256], strides = [1, 1]} : vector<24x256xf32> to vector<3x256xf32>
    %668 = arith.mulf %666, %666 : vector<3x256xf32>
    %669 = arith.subf %668, %666 : vector<3x256xf32>
    %670 = arith.mulf %667, %669 : vector<3x256xf32>
    %671 = arith.addf %666, %670 : vector<3x256xf32>
    %672 = vector.extract_strided_slice %656 {offsets = [9, 0], sizes = [3, 256], strides = [1, 1]} : vector<24x256xf32> to vector<3x256xf32>
    %673 = arith.mulf %671, %671 : vector<3x256xf32>
    %674 = arith.subf %673, %671 : vector<3x256xf32>
    %675 = arith.mulf %672, %674 : vector<3x256xf32>
    %676 = arith.addf %671, %675 : vector<3x256xf32>
    %c0_182 = arith.constant 0 : index
    %c0_183 = arith.constant 0 : index
    %677 = vector.load %arg16[%c0_182, %c0_183] : memref<3x256xf32, #tpu.memory_space<vmem>>, vector<3x256xf32>
    tpu.vector_store %arg16[%c0_182, %c0_183], %676 {strides = array<i32>} : memref<3x256xf32, #tpu.memory_space<vmem>>, vector<3x256xf32>,
    %678 = vector.extract_strided_slice %656 {offsets = [12, 0], sizes = [3, 256], strides = [1, 1]} : vector<24x256xf32> to vector<3x256xf32>
    %679 = arith.mulf %676, %676 : vector<3x256xf32>
    %680 = arith.subf %679, %676 : vector<3x256xf32>
    %681 = arith.mulf %678, %680 : vector<3x256xf32>
    %682 = arith.addf %676, %681 : vector<3x256xf32>
    %683 = vector.extract_strided_slice %656 {offsets = [15, 0], sizes = [3, 256], strides = [1, 1]} : vector<24x256xf32> to vector<3x256xf32>
    %684 = arith.mulf %682, %682 : vector<3x256xf32>
    %685 = arith.subf %684, %682 : vector<3x256xf32>
    %686 = arith.mulf %683, %685 : vector<3x256xf32>
    %687 = arith.addf %682, %686 : vector<3x256xf32>
    %688 = vector.extract_strided_slice %656 {offsets = [18, 0], sizes = [3, 256], strides = [1, 1]} : vector<24x256xf32> to vector<3x256xf32>
    %689 = arith.mulf %687, %687 : vector<3x256xf32>
    %690 = arith.subf %689, %687 : vector<3x256xf32>
    %691 = arith.mulf %688, %690 : vector<3x256xf32>
    %692 = arith.addf %687, %691 : vector<3x256xf32>
    %693 = vector.extract_strided_slice %656 {offsets = [21, 0], sizes = [3, 256], strides = [1, 1]} : vector<24x256xf32> to vector<3x256xf32>
    %694 = arith.mulf %692, %692 : vector<3x256xf32>
    %695 = arith.subf %694, %692 : vector<3x256xf32>
    %696 = arith.mulf %693, %695 : vector<3x256xf32>
    %697 = arith.addf %692, %696 : vector<3x256xf32>
    %c0_184 = arith.constant 0 : index
    %c0_185 = arith.constant 0 : index
    %698 = vector.load %arg17[%c0_184, %c0_185] : memref<3x256xf32, #tpu.memory_space<vmem>>, vector<3x256xf32>
    tpu.vector_store %arg17[%c0_184, %c0_185], %697 {strides = array<i32>} : memref<3x256xf32, #tpu.memory_space<vmem>>, vector<3x256xf32>,
    %c0_186 = arith.constant 0 : index
    %c0_187 = arith.constant 0 : index
    %699 = vector.load %arg18[%c0_186, %c0_187] : memref<24x256xf32, #tpu.memory_space<vmem>>, vector<24x256xf32>
    tpu.vector_store %arg18[%c0_186, %c0_187], %656 {strides = array<i32>} : memref<24x256xf32, #tpu.memory_space<vmem>>, vector<24x256xf32>,
    return
  }
}

</mosaic_0001>

<llo_original>
// kernel: squeeze.1
$region0: #{squeeze.1}
  %s0 = inlined_call_operand.vmem [shape: f32[1,3,16,16], index: 0, kind: input, shape index: {}]
  %s1 = inlined_call_operand.vmem [shape: f32[3,256], index: 1, kind: output, shape index: {}]
  $region1: #{squeeze.1} parent=0
    #allocation0 [shape = 'u8[8192]{0}', space=vmem, size = 0x2000, scoped, tag = 'scoped mem for output reshape']
    %v2 = vld [vmem:[%s0] ss:$8 sm:$0xf]
    %s3 = smov 48
    %v4 = vld [vmem:[%s0] ss:$8 sm:%s3]
    %vm5 = vcmask 1045508
    %v6 = vsel %vm5, %v4, %v2
    %vm7 = vcmask 130048
    %8 = vst.msk [vmem:[#allocation0] ss:$8 sm:$0x3] %vm7, %v6
    %s9 = scalar_lea.vmem [#allocation0], 4294967281
    %10 = vst.msk [vmem:[%s9] ss:$8 sm:$0xc] %vm7, %v6
    %s11 = scalar_lea.vmem [#allocation0], 4294967266
    %12 = vst.msk [vmem:[%s11] ss:$8 sm:$0x30] %vm7, %v6
    %s13 = scalar_lea.vmem %s0, 7
    %s14 = smov 3
    %v15 = vld [vmem:[%s13] ss:$16 sm:%s14]
    %s16 = scalar_lea.vmem %s0, 87
    %s17 = smov 12
    %v18 = vld [vmem:[%s16] ss:$-24 sm:%s17]
    %vm19 = vcmask 1043458
    %v20 = vsel %vm19, %v18, %v15
    %s21 = scalar_lea.vmem %s0, 4294967263
    %s22 = smov 48
    %v23 = vld [vmem:[%s21] ss:$16 sm:%s22]
    %vm24 = vcmask 1045508
    %v25 = vsel %vm24, %v23, %v20
    %26 = vrot.lane.b32.xlu0 %v25, 112
    %v27 = vpop.permute.xlu0 %26
    %vm28 = vcmask 1048448
    %29 = vst.msk [vmem:[#allocation0] sm:$0x7] %vm28, %v27
    %s30 = scalar_lea.vmem [#allocation0], 5
    %31 = vst.msk [vmem:[%s30] sm:$0x38] %vm28, %v27
    %s32 = scalar_lea.vmem %s0, 6
    %s33 = smov 3
    %v34 = vld [vmem:[%s32] ss:$16 sm:%s33]
    %s35 = scalar_lea.vmem %s0, 86
    %s36 = smov 12
    %v37 = vld [vmem:[%s35] ss:$-24 sm:%s36]
    %vm38 = vcmask 1043458
    %v39 = vsel %vm38, %v37, %v34
    %s40 = scalar_lea.vmem %s0, 4294967262
    %s41 = smov 48
    %v42 = vld [vmem:[%s40] ss:$16 sm:%s41]
    %vm43 = vcmask 1045508
    %v44 = vsel %vm43, %v42, %v39
    %45 = vrot.lane.b32.xlu0 %v44, 96
    %v46 = vpop.permute.xlu0 %45
    %vm47 = vcmask 917248
    %48 = vst.msk [vmem:[#allocation0] sm:$0x7] %vm47, %v46
    %s49 = scalar_lea.vmem [#allocation0], 5
    %50 = vst.msk [vmem:[%s49] sm:$0x38] %vm47, %v46
    %s51 = scalar_lea.vmem %s0, 5
    %s52 = smov 3
    %v53 = vld [vmem:[%s51] ss:$16 sm:%s52]
    %s54 = scalar_lea.vmem %s0, 85
    %s55 = smov 12
    %v56 = vld [vmem:[%s54] ss:$-24 sm:%s55]
    %vm57 = vcmask 1043458
    %v58 = vsel %vm57, %v56, %v53
    %s59 = scalar_lea.vmem %s0, 4294967261
    %s60 = smov 48
    %v61 = vld [vmem:[%s59] ss:$16 sm:%s60]
    %vm62 = vcmask 1045508
    %v63 = vsel %vm62, %v61, %v58
    %64 = vrot.lane.b32.xlu0 %v63, 80
    %v65 = vpop.permute.xlu0 %64
    %vm66 = vcmask 786048
    %67 = vst.msk [vmem:[#allocation0] sm:$0x7] %vm66, %v65
    %s68 = scalar_lea.vmem [#allocation0], 5
    %69 = vst.msk [vmem:[%s68] sm:$0x38] %vm66, %v65
    %s70 = scalar_lea.vmem %s0, 4
    %s71 = smov 3
    %v72 = vld [vmem:[%s70] ss:$16 sm:%s71]
    %s73 = scalar_lea.vmem %s0, 84
    %s74 = smov 12
    %v75 = vld [vmem:[%s73] ss:$-24 sm:%s74]
    %vm76 = vcmask 1043458
    %v77 = vsel %vm76, %v75, %v72
    %s78 = scalar_lea.vmem %s0, 4294967260
    %s79 = smov 48
    %v80 = vld [vmem:[%s78] ss:$16 sm:%s79]
    %vm81 = vcmask 1045508
    %v82 = vsel %vm81, %v80, %v77
    %83 = vrot.lane.b32.xlu0 %v82, 64
    %v84 = vpop.permute.xlu0 %83
    %vm85 = vcmask 654848
    %86 = vst.msk [vmem:[#allocation0] sm:$0x7] %vm85, %v84
    %s87 = scalar_lea.vmem [#allocation0], 5
    %88 = vst.msk [vmem:[%s87] sm:$0x38] %vm85, %v84
    %s89 = scalar_lea.vmem %s0, 3
    %s90 = smov 3
    %v91 = vld [vmem:[%s89] ss:$16 sm:%s90]
    %s92 = scalar_lea.vmem %s0, 83
    %s93 = smov 12
    %v94 = vld [vmem:[%s92] ss:$-24 sm:%s93]
    %vm95 = vcmask 1043458
    %v96 = vsel %vm95, %v94, %v91
    %s97 = scalar_lea.vmem %s0, 4294967259
    %s98 = smov 48
    %v99 = vld [vmem:[%s97] ss:$16 sm:%s98]
    %vm100 = vcmask 1045508
    %v101 = vsel %vm100, %v99, %v96
    %102 = vrot.lane.b32.xlu0 %v101, 48
    %v103 = vpop.permute.xlu0 %102
    %vm104 = vcmask 523648
    %105 = vst.msk [vmem:[#allocation0] sm:$0x7] %vm104, %v103
    %s106 = scalar_lea.vmem [#allocation0], 5
    %107 = vst.msk [vmem:[%s106] sm:$0x38] %vm104, %v103
    %s108 = scalar_lea.vmem %s0, 2
    %s109 = smov 3
    %v110 = vld [vmem:[%s108] ss:$16 sm:%s109]
    %s111 = scalar_lea.vmem %s0, 82
    %s112 = smov 12
    %v113 = vld [vmem:[%s111] ss:$-24 sm:%s112]
    %vm114 = vcmask 1043458
    %v115 = vsel %vm114, %v113, %v110
    %s116 = scalar_lea.vmem %s0, 4294967258
    %s117 = smov 48
    %v118 = vld [vmem:[%s116] ss:$16 sm:%s117]
    %vm119 = vcmask 1045508
    %v120 = vsel %vm119, %v118, %v115
    %121 = vrot.lane.b32.xlu0 %v120, 32
    %v122 = vpop.permute.xlu0 %121
    %vm123 = vcmask 392448
    %124 = vst.msk [vmem:[#allocation0] sm:$0x7] %vm123, %v122
    %s125 = scalar_lea.vmem [#allocation0], 5
    %126 = vst.msk [vmem:[%s125] sm:$0x38] %vm123, %v122
    %s127 = scalar_lea.vmem %s0, 1
    %s128 = smov 3
    %v129 = vld [vmem:[%s127] ss:$16 sm:%s128]
    %s130 = scalar_lea.vmem %s0, 81
    %s131 = smov 12
    %v132 = vld [vmem:[%s130] ss:$-24 sm:%s131]
    %vm133 = vcmask 1043458
    %v134 = vsel %vm133, %v132, %v129
    %s135 = scalar_lea.vmem %s0, 4294967257
    %s136 = smov 48
    %v137 = vld [vmem:[%s135] ss:$16 sm:%s136]
    %vm138 = vcmask 1045508
    %v139 = vsel %vm138, %v137, %v134
    %140 = vrot.lane.b32.xlu0 %v139, 16
    %v141 = vpop.permute.xlu0 %140
    %vm142 = vcmask 261248
    %143 = vst.msk [vmem:[#allocation0] sm:$0x7] %vm142, %v141
    %s144 = scalar_lea.vmem [#allocation0], 5
    %145 = vst.msk [vmem:[%s144] sm:$0x38] %vm142, %v141
    %s147 = sshllo.u32 0, 4
    %v149 = vld [vmem:[#allocation0] sm:%s147]
    %s150 = sshllo.u32 0, 4
    %151 = vst [vmem:[%s1] sm:%s150] %v149
    %s152 = scalar_lea.vmem [#allocation0], 8
    %v153 = vld [vmem:[%s152] sm:%s147]
    %s154 = sshllo.u32 0, 4
    %s155 = scalar_lea.vmem %s1, 4
    %156 = vst [vmem:[%s155] sm:%s154] %v153

// kernel: enhance_net_forward.1
$region0: #{enhance_net_forward.1}
  #allocation0 [shape = 'u32[]', space=smem, size = 0x4, offset = 0x4, fixed_abs, tag = 'smem constant byte address 0x4 - core index']
  #allocation1 [shape = 'u32[144,128]{1,0:T(1,128)}', space=vmem, size = 0x12000, scoped, tag = 'internal scratch']
  %s0 = inlined_call_operand.vmem [shape: s32[2,256], index: 0, kind: input, shape index: {}]
  %s1 = inlined_call_operand.vmem [shape: f32[4,256], index: 1, kind: input, shape index: {}]
  %s2 = inlined_call_operand.vmem [shape: bf16[32,36], index: 2, kind: input, shape index: {}]
  %s3 = inlined_call_operand.vmem [shape: f32[32,1], index: 3, kind: input, shape index: {}]
  %s4 = inlined_call_operand.vmem [shape: bf16[32,288], index: 4, kind: input, shape index: {}]
  %s5 = inlined_call_operand.vmem [shape: f32[32,1], index: 5, kind: input, shape index: {}]
  %s6 = inlined_call_operand.vmem [shape: bf16[32,288], index: 6, kind: input, shape index: {}]
  %s7 = inlined_call_operand.vmem [shape: f32[32,1], index: 7, kind: input, shape index: {}]
  %s8 = inlined_call_operand.vmem [shape: bf16[32,288], index: 8, kind: input, shape index: {}]
  %s9 = inlined_call_operand.vmem [shape: f32[32,1], index: 9, kind: input, shape index: {}]
  %s10 = inlined_call_operand.vmem [shape: bf16[32,576], index: 10, kind: input, shape index: {}]
  %s11 = inlined_call_operand.vmem [shape: f32[32,1], index: 11, kind: input, shape index: {}]
  %s12 = inlined_call_operand.vmem [shape: bf16[32,576], index: 12, kind: input, shape index: {}]
  %s13 = inlined_call_operand.vmem [shape: f32[32,1], index: 13, kind: input, shape index: {}]
  %s14 = inlined_call_operand.vmem [shape: bf16[24,576], index: 14, kind: input, shape index: {}]
  %s15 = inlined_call_operand.vmem [shape: f32[24,1], index: 15, kind: input, shape index: {}]
  %s16 = inlined_call_operand.vmem [shape: f32[3,256], index: 16, kind: output, shape index: {0}]
  %s17 = inlined_call_operand.vmem [shape: f32[3,256], index: 17, kind: output, shape index: {1}]
  %s18 = inlined_call_operand.vmem [shape: f32[24,256], index: 18, kind: output, shape index: {2}]
  %19 = xla_tuple %s16, %s17, %s18
  %s20 = sld [smem:[#allocation0]]
  $region90: #{enhance_net_forward.1} parent=0
    _
  %s22 = ssub.s32 1, %s20
  %s23 = scalar_select 0, %s22, %s20
  // Predicated region
  $region2: #{enhance_net_forward.1} parent=0 // pred_check
    _
  $region3: #{enhance_net_forward.1} parent=0 // pred_check_branch
    %25 = sbr.rel (0) target = $region5
  $region4: #{enhance_net_forward.1} parent=0 // pred_region
    _
  $region5: #{enhance_net_forward.1} parent=0 // pred_fallthru
    _
  // Predicated region
  $region6: #{enhance_net_forward.1} parent=0 // pred_check
    _
  $region7: #{enhance_net_forward.1} parent=0 // pred_check_branch
    %27 = sbr.rel (0) target = $region9
  $region8: #{enhance_net_forward.1} parent=0 // pred_region
    _
  $region9: #{enhance_net_forward.1} parent=0 // pred_fallthru
    _
  // Predicated region
  $region10: #{enhance_net_forward.1} parent=0 // pred_check
    _
  $region11: #{enhance_net_forward.1} parent=0 // pred_check_branch
    %29 = sbr.rel (0) target = $region13
  $region12: #{enhance_net_forward.1} parent=0 // pred_region
    _
  $region13: #{enhance_net_forward.1} parent=0 // pred_fallthru
    _
  // Predicated region
  $region14: #{enhance_net_forward.1} parent=0 // pred_check
    _
  $region15: #{enhance_net_forward.1} parent=0 // pred_check_branch
    %31 = sbr.rel (0) target = $region17
  $region16: #{enhance_net_forward.1} parent=0 // pred_region
    _
  $region17: #{enhance_net_forward.1} parent=0 // pred_fallthru
    _
  // Predicated region
  $region18: #{enhance_net_forward.1} parent=0 // pred_check
    _
  $region19: #{enhance_net_forward.1} parent=0 // pred_check_branch
    %33 = sbr.rel (0) target = $region21
  $region20: #{enhance_net_forward.1} parent=0 // pred_region
    _
  $region21: #{enhance_net_forward.1} parent=0 // pred_fallthru
    _
  // Predicated region
  $region22: #{enhance_net_forward.1} parent=0 // pred_check
    _
  $region23: #{enhance_net_forward.1} parent=0 // pred_check_branch
    %35 = sbr.rel (0) target = $region25
  $region24: #{enhance_net_forward.1} parent=0 // pred_region
    _
  $region25: #{enhance_net_forward.1} parent=0 // pred_fallthru
    _
  // Predicated region
  $region26: #{enhance_net_forward.1} parent=0 // pred_check
    _
  $region27: #{enhance_net_forward.1} parent=0 // pred_check_branch
    %37 = sbr.rel (0) target = $region29
  $region28: #{enhance_net_forward.1} parent=0 // pred_region
    _
  $region29: #{enhance_net_forward.1} parent=0 // pred_fallthru
    _
  // Predicated region
  $region30: #{enhance_net_forward.1} parent=0 // pred_check
    _
  $region31: #{enhance_net_forward.1} parent=0 // pred_check_branch
    %39 = sbr.rel (0) target = $region33
  $region32: #{enhance_net_forward.1} parent=0 // pred_region
    _
  $region33: #{enhance_net_forward.1} parent=0 // pred_fallthru
    _
  // Predicated region
  $region34: #{enhance_net_forward.1} parent=0 // pred_check
    _
  $region35: #{enhance_net_forward.1} parent=0 // pred_check_branch
    %41 = sbr.rel (0) target = $region37
  $region36: #{enhance_net_forward.1} parent=0 // pred_region
    _
  $region37: #{enhance_net_forward.1} parent=0 // pred_fallthru
    _
  // Predicated region
  $region38: #{enhance_net_forward.1} parent=0 // pred_check
    _
  $region39: #{enhance_net_forward.1} parent=0 // pred_check_branch
    %43 = sbr.rel (0) target = $region41
  $region40: #{enhance_net_forward.1} parent=0 // pred_region
    _
  $region41: #{enhance_net_forward.1} parent=0 // pred_fallthru
    _
  // Predicated region
  $region42: #{enhance_net_forward.1} parent=0 // pred_check
    _
  $region43: #{enhance_net_forward.1} parent=0 // pred_check_branch
    %45 = sbr.rel (0) target = $region45
  $region44: #{enhance_net_forward.1} parent=0 // pred_region
    _
  $region45: #{enhance_net_forward.1} parent=0 // pred_fallthru
    _
  // Predicated region
  $region46: #{enhance_net_forward.1} parent=0 // pred_check
    _
  $region47: #{enhance_net_forward.1} parent=0 // pred_check_branch
    %47 = sbr.rel (0) target = $region49
  $region48: #{enhance_net_forward.1} parent=0 // pred_region
    _
  $region49: #{enhance_net_forward.1} parent=0 // pred_fallthru
    _
  // Predicated region
  $region50: #{enhance_net_forward.1} parent=0 // pred_check
    _
  $region51: #{enhance_net_forward.1} parent=0 // pred_check_branch
    %49 = sbr.rel (0) target = $region53
  $region52: #{enhance_net_forward.1} parent=0 // pred_region
    _
  $region53: #{enhance_net_forward.1} parent=0 // pred_fallthru
    _
  // Predicated region
  $region54: #{enhance_net_forward.1} parent=0 // pred_check
    _
  $region55: #{enhance_net_forward.1} parent=0 // pred_check_branch
    %51 = sbr.rel (0) target = $region57
  $region56: #{enhance_net_forward.1} parent=0 // pred_region
    _
  $region57: #{enhance_net_forward.1} parent=0 // pred_fallthru
    _
  // Predicated region
  $region58: #{enhance_net_forward.1} parent=0 // pred_check
    _
  $region59: #{enhance_net_forward.1} parent=0 // pred_check_branch
    %53 = sbr.rel (0) target = $region61
  $region60: #{enhance_net_forward.1} parent=0 // pred_region
    _
  $region61: #{enhance_net_forward.1} parent=0 // pred_fallthru
    _
  // Predicated region
  $region62: #{enhance_net_forward.1} parent=0 // pred_check
    _
  $region63: #{enhance_net_forward.1} parent=0 // pred_check_branch
    %55 = sbr.rel (0) target = $region65
  $region64: #{enhance_net_forward.1} parent=0 // pred_region
    _
  $region65: #{enhance_net_forward.1} parent=0 // pred_fallthru
    _
  %v57 = vld [vmem:[%s0] ss:$2 sm:$0x3]
  %s58 = scalar_lea.vmem %s0, 1
  %v59 = vld [vmem:[%s58] ss:$2 sm:$0x3]
  %v60 = vld [vmem:[%s1] sm:$0xff]
  %v61 = vld [vmem:[%s2] sm:$0xf]
  %v62 = vld [vmem:[%s2 + $0x4] sm:$0xf]
  %v63 = vld [vmem:[%s2 + $0x8] sm:$0xf]
  %v64 = vld [vmem:[%s2 + $0xc] sm:$0xf]
  %v65 = vld [vmem:[%s3] sm:$0xff]
  %v66 = vld [vmem:[%s3 + $0x8] sm:$0xff]
  %v67 = vld [vmem:[%s3 + $0x10] sm:$0xff]
  %v68 = vld [vmem:[%s3 + $0x18] sm:$0xff]
  %v70 = vcombine.high %v60, %v60
  %71 = vrot.lane.b32.xlu0 %v70, 17
  %v72 = vpop.permute.xlu0 %71
  %74 = vrot.lane.b32.xlu0 %v60, 17
  %v75 = vpop.permute.xlu0 %74
  %vm76 = vcmask 138240
  %v77 = vsel %vm76, %v75, %v72
  %v80 = vsel %vm76, %v72, %v75
  %vm81 = vcmp.ge.s32.totalorder %v57, 1
  %vm82 = vcmp.ge.s32.totalorder %v59, 1
  %vm83 = vmand %vm81, %vm82
  %v84 = vsel %vm83, 1, 0
  %v85 = vlaneseq
  %v86 = vshrl.u32 %v85, 7
  %v87 = vsub.s32 0, %v86
  %v88 = vrot.slane %v84, %v87
  %v89 = vlaneseq
  %v90 = vshrl.u32 %v89, 7
  %v91 = vsub.s32 1, %v90
  %v92 = vrot.slane %v84, %v91
  %vm93 = vcmp.eq.s32.totalorder %v88, 1
  %vm94 = vcmp.eq.s32.totalorder %v92, 1
  %v95 = vsel %vm93, %v80, 0.0
  %v96 = vsel %vm94, %v77, 0.0
  %97 = vrot.lane.b32.xlu0 %v70, 16
  %v98 = vpop.permute.xlu0 %97
  %100 = vrot.lane.b32.xlu0 %v60, 16
  %v101 = vpop.permute.xlu0 %100
  %vm102 = vcmask 130048
  %v103 = vsel %vm102, %v101, %v98
  %v106 = vsel %vm102, %v98, %v101
  %v107 = vsel %vm81, 1, 0
  %v108 = vlaneseq
  %v109 = vshrl.u32 %v108, 7
  %v110 = vsub.s32 0, %v109
  %v111 = vrot.slane %v107, %v110
  %v112 = vlaneseq
  %v113 = vshrl.u32 %v112, 7
  %v114 = vsub.s32 1, %v113
  %v115 = vrot.slane %v107, %v114
  %vm116 = vcmp.eq.s32.totalorder %v111, 1
  %vm117 = vcmp.eq.s32.totalorder %v115, 1
  %v118 = vsel %vm116, %v106, 0.0
  %v119 = vsel %vm117, %v103, 0.0
  %120 = vrot.lane.b32.xlu0 %v70, 15
  %v121 = vpop.permute.xlu0 %120
  %123 = vrot.lane.b32.xlu0 %v60, 15
  %v124 = vpop.permute.xlu0 %123
  %vm125 = vcmask 121856
  %v126 = vsel %vm125, %v124, %v121
  %v129 = vsel %vm125, %v121, %v124
  %vm130 = vcmp.le.s32.totalorder %v59, 14
  %vm131 = vmand %vm81, %vm130
  %v132 = vsel %vm131, 1, 0
  %v133 = vlaneseq
  %v134 = vshrl.u32 %v133, 7
  %v135 = vsub.s32 0, %v134
  %v136 = vrot.slane %v132, %v135
  %v137 = vlaneseq
  %v138 = vshrl.u32 %v137, 7
  %v139 = vsub.s32 1, %v138
  %v140 = vrot.slane %v132, %v139
  %vm141 = vcmp.eq.s32.totalorder %v136, 1
  %vm142 = vcmp.eq.s32.totalorder %v140, 1
  %v143 = vsel %vm141, %v129, 0.0
  %v144 = vsel %vm142, %v126, 0.0
  %145 = vrot.lane.b32.xlu0 %v70, 1
  %v146 = vpop.permute.xlu0 %145
  %148 = vrot.lane.b32.xlu0 %v60, 1
  %v149 = vpop.permute.xlu0 %148
  %vm150 = vcmask 7168
  %v151 = vsel %vm150, %v149, %v146
  %v154 = vsel %vm150, %v146, %v149
  %v155 = vsel %vm82, 1, 0
  %v156 = vlaneseq
  %v157 = vshrl.u32 %v156, 7
  %v158 = vsub.s32 0, %v157
  %v159 = vrot.slane %v155, %v158
  %v160 = vlaneseq
  %v161 = vshrl.u32 %v160, 7
  %v162 = vsub.s32 1, %v161
  %v163 = vrot.slane %v155, %v162
  %vm164 = vcmp.eq.s32.totalorder %v159, 1
  %vm165 = vcmp.eq.s32.totalorder %v163, 1
  %v166 = vsel %vm164, %v154, 0.0
  %v167 = vsel %vm165, %v151, 0.0
  %168 = vrot.lane.b32.xlu0 %v60, 127
  %v169 = vpop.permute.xlu0 %168
  %170 = vrot.lane.b32.xlu0 %v70, 127
  %v171 = vpop.permute.xlu0 %170
  %vm172 = vcmask 1039360
  %v173 = vsel %vm172, %v169, %v171
  %v177 = vsel %vm172, %v171, %v169
  %v178 = vsel %vm130, 1, 0
  %v179 = vlaneseq
  %v180 = vshrl.u32 %v179, 7
  %v181 = vsub.s32 0, %v180
  %v182 = vrot.slane %v178, %v181
  %v183 = vlaneseq
  %v184 = vshrl.u32 %v183, 7
  %v185 = vsub.s32 1, %v184
  %v186 = vrot.slane %v178, %v185
  %vm187 = vcmp.eq.s32.totalorder %v182, 1
  %vm188 = vcmp.eq.s32.totalorder %v186, 1
  %v189 = vsel %vm187, %v173, 0.0
  %v190 = vsel %vm188, %v177, 0.0
  %191 = vrot.lane.b32.xlu0 %v60, 113
  %v192 = vpop.permute.xlu0 %191
  %193 = vrot.lane.b32.xlu0 %v70, 113
  %v194 = vpop.permute.xlu0 %193
  %vm195 = vcmask 924672
  %v196 = vsel %vm195, %v192, %v194
  %v200 = vsel %vm195, %v194, %v192
  %vm201 = vcmp.le.s32.totalorder %v57, 14
  %vm202 = vmand %vm201, %vm82
  %v203 = vsel %vm202, 1, 0
  %v204 = vlaneseq
  %v205 = vshrl.u32 %v204, 7
  %v206 = vsub.s32 0, %v205
  %v207 = vrot.slane %v203, %v206
  %v208 = vlaneseq
  %v209 = vshrl.u32 %v208, 7
  %v210 = vsub.s32 1, %v209
  %v211 = vrot.slane %v203, %v210
  %vm212 = vcmp.eq.s32.totalorder %v207, 1
  %vm213 = vcmp.eq.s32.totalorder %v211, 1
  %v214 = vsel %vm212, %v196, 0.0
  %v215 = vsel %vm213, %v200, 0.0
  %216 = vrot.lane.b32.xlu0 %v60, 112
  %v217 = vpop.permute.xlu0 %216
  %218 = vrot.lane.b32.xlu0 %v70, 112
  %v219 = vpop.permute.xlu0 %218
  %vm220 = vcmask 916480
  %v221 = vsel %vm220, %v217, %v219
  %v225 = vsel %vm220, %v219, %v217
  %v226 = vsel %vm201, 1, 0
  %v227 = vlaneseq
  %v228 = vshrl.u32 %v227, 7
  %v229 = vsub.s32 0, %v228
  %v230 = vrot.slane %v226, %v229
  %v231 = vlaneseq
  %v232 = vshrl.u32 %v231, 7
  %v233 = vsub.s32 1, %v232
  %v234 = vrot.slane %v226, %v233
  %vm235 = vcmp.eq.s32.totalorder %v230, 1
  %vm236 = vcmp.eq.s32.totalorder %v234, 1
  %v237 = vsel %vm235, %v221, 0.0
  %v238 = vsel %vm236, %v225, 0.0
  %239 = vrot.lane.b32.xlu0 %v60, 111
  %v240 = vpop.permute.xlu0 %239
  %241 = vrot.lane.b32.xlu0 %v70, 111
  %v242 = vpop.permute.xlu0 %241
  %vm243 = vcmask 908288
  %v244 = vsel %vm243, %v240, %v242
  %v248 = vsel %vm243, %v242, %v240
  %vm249 = vmand %vm201, %vm130
  %v250 = vsel %vm249, 1, 0
  %v251 = vlaneseq
  %v252 = vshrl.u32 %v251, 7
  %v253 = vsub.s32 0, %v252
  %v254 = vrot.slane %v250, %v253
  %v255 = vlaneseq
  %v256 = vshrl.u32 %v255, 7
  %v257 = vsub.s32 1, %v256
  %v258 = vrot.slane %v250, %v257
  %vm259 = vcmp.eq.s32.totalorder %v254, 1
  %vm260 = vcmp.eq.s32.totalorder %v258, 1
  %v261 = vsel %vm259, %v244, 0.0
  %v262 = vsel %vm260, %v248, 0.0
  %v265 = vrot.slane %v118, 4
  %v266 = vrot.slane %v119, 4
  %v271 = vrot.slane %v166, 4
  %v272 = vrot.slane %v167, 4
  %v278 = vrot.slane %v189, 4
  %v279 = vrot.slane %v190, 4
  %v284 = vrot.slane %v237, 4
  %v285 = vrot.slane %v238, 4
  %vm288 = vcmask 1043456
  %v289 = vsel %vm288, %v95, %v265
  %v290 = vsel %vm288, %v96, %v266
  %v291 = vsel %vm288, %v143, %v271
  %v292 = vsel %vm288, %v144, %v272
  %v293 = vsel %vm288, %v60, %v278
  %v294 = vsel %vm288, %v70, %v279
  %v295 = vsel %vm288, %v214, %v284
  %v296 = vsel %vm288, %v215, %v285
  %v297 = vpack.c.bf16 %v291, %v289
  %v298 = vpack.c.bf16 %v292, %v290
  %v299 = vpack.c.bf16 %v295, %v293
  %v300 = vpack.c.bf16 %v296, %v294
  %v301 = vpack.c.bf16 %v261, %v261
  %v302 = vpack.c.bf16 %v262, %v262
  %304 = vset.pattern.permute.xlu0 0
  %305 = vperm.xlu0 %304, %v65
  %v306 = vpop.permute.xlu0 %305
  %309 = vset.pattern.permute.xlu0 0
  %310 = vperm.xlu0 %309, %v66
  %v311 = vpop.permute.xlu0 %310
  %314 = vset.pattern.permute.xlu0 0
  %315 = vperm.xlu0 %314, %v67
  %v316 = vpop.permute.xlu0 %315
  %319 = vset.pattern.permute.xlu0 0
  %320 = vperm.xlu0 %319, %v68
  %v321 = vpop.permute.xlu0 %320
  %v327 = vunpack.c.l.b16 %v61
  %v328 = vunpack.c.l.b16 %v62
  %v329 = vunpack.c.l.b16 %v63
  %v330 = vunpack.c.l.b16 %v64
  %v331 = vpack.c.b16 %v328, %v327
  %v332 = vpack.c.b16 %v330, %v329
  %vm333 = vcmask 293888
  %v335 = vsel %vm333, %v331, 0
  %v338 = vsel %vm333, %v332, 0
  %vm340 = vcmask 1041408
  %v342 = vsel %vm340, %v301, 0
  %v345 = vsel %vm340, %v302, 0
  %347 = vmatprep.subr.bf16.mxu0 %v298
  %348 = vmatpush1.bf16.msra.mxu0 %v297
  %349 = vmatprep.subr.bf16.mxu0 %v300
  %350 = vmatpush1.bf16.msra.mxu0 %v299
  %351 = vmatprep.subr.bf16.mxu0 %v345
  %352 = vmatpush1.bf16.msra.mxu0 %v342
  %353 = vmatprep.subr.bf16.mxu0 0
  %354 = vmatpush1.bf16.msra.mxu0 0
  %355 = vmatprep.subr.bf16.mxu0 0
  %356 = vmatpush1.bf16.msra.mxu0 0
  %357 = vmatprep.subr.bf16.mxu0 0
  %358 = vmatpush1.bf16.msra.mxu0 0
  %359 = vmatprep.subr.bf16.mxu0 0
  %360 = vmatpush1.bf16.msra.mxu0 0
  %361 = vmatprep.subr.bf16.mxu0 0
  %362 = vmatpush1.bf16.msra.mxu0 0
  %363 = vmatprep.subr.bf16.mxu0 0
  %364 = vmatpush1.bf16.msra.mxu0 0
  %365 = vmatprep.subr.bf16.mxu0 0
  %366 = vmatpush1.bf16.msra.mxu0 0
  %367 = vmatprep.subr.bf16.mxu0 0
  %368 = vmatpush1.bf16.msra.mxu0 0
  %369 = vmatprep.subr.bf16.mxu0 0
  %370 = vmatpush1.bf16.msra.mxu0 0
  %371 = vmatprep.subr.bf16.mxu0 0
  %372 = vmatpush1.bf16.msra.mxu0 0
  %373 = vmatprep.subr.bf16.mxu0 0
  %374 = vmatpush1.bf16.msra.mxu0 0
  %375 = vmatprep.subr.bf16.mxu0 0
  %376 = vmatpush1.bf16.msra.mxu0 0
  %377 = vmatprep.subr.bf16.mxu0 0
  %378 = vmatpush1.bf16.msra.mxu0 0
  %379 = vmatprep.mubr.bf16.mxu0 0
  %380 = vmatmul.mubr.bf16.gmra.mrb[0].mxu0 %v335
  %v381 = vpop.f32.mrb[0].mxu0
  %v382 = vadd.f32 %v306, %v381
  %v383 = vpop.f32.mrb[0].mxu0
  %v384 = vadd.f32 %v306, %v383
  %v385 = vpop.f32.mrb[0].mxu0
  %v386 = vadd.f32 %v311, %v385
  %v387 = vpop.f32.mrb[0].mxu0
  %v388 = vadd.f32 %v311, %v387
  %389 = vmatprep.mubr.bf16.mxu0 0
  %390 = vmatmul.mubr.bf16.gmra.mrb[0].mxu0 %v338
  %v391 = vpop.f32.mrb[0].mxu0
  %v392 = vadd.f32 %v316, %v391
  %v393 = vpop.f32.mrb[0].mxu0
  %v394 = vadd.f32 %v316, %v393
  %v395 = vpop.f32.mrb[0].mxu0
  %v396 = vadd.f32 %v321, %v395
  %v397 = vpop.f32.mrb[0].mxu0
  %v398 = vadd.f32 %v321, %v397
  %399 = vdwg.mxu0
  %v400 = vmax.f32 %v382, 0.0
  %v401 = vmax.f32 %v384, 0.0
  %v402 = vmax.f32 %v386, 0.0
  %v403 = vmax.f32 %v388, 0.0
  %v404 = vmax.f32 %v392, 0.0
  %v405 = vmax.f32 %v394, 0.0
  %v406 = vmax.f32 %v396, 0.0
  %v407 = vmax.f32 %v398, 0.0
  %v408 = vld [vmem:[%s4] sm:$0xff]
  %v409 = vld [vmem:[%s4 + $0x8] sm:$0xf]
  %v410 = vld [vmem:[%s4 + $0xc] sm:$0xff]
  %v411 = vld [vmem:[%s4 + $0x14] sm:$0xf]
  %v412 = vld [vmem:[%s4 + $0x18] sm:$0xff]
  %v413 = vld [vmem:[%s4 + $0x20] sm:$0xf]
  %v414 = vld [vmem:[%s4 + $0x24] sm:$0xff]
  %v415 = vld [vmem:[%s4 + $0x2c] sm:$0xf]
  %v416 = vld [vmem:[%s5] sm:$0xff]
  %v417 = vld [vmem:[%s5 + $0x8] sm:$0xff]
  %v418 = vld [vmem:[%s5 + $0x10] sm:$0xff]
  %v419 = vld [vmem:[%s5 + $0x18] sm:$0xff]
  %424 = vrot.lane.b32.xlu0 %v401, 17
  %v425 = vpop.permute.xlu0 %424
  %426 = vrot.lane.b32.xlu0 %v403, 17
  %v427 = vpop.permute.xlu0 %426
  %428 = vrot.lane.b32.xlu0 %v405, 17
  %v429 = vpop.permute.xlu0 %428
  %430 = vrot.lane.b32.xlu0 %v407, 17
  %v431 = vpop.permute.xlu0 %430
  %440 = vrot.lane.b32.xlu0 %v400, 17
  %v441 = vpop.permute.xlu0 %440
  %442 = vrot.lane.b32.xlu0 %v402, 17
  %v443 = vpop.permute.xlu0 %442
  %444 = vrot.lane.b32.xlu0 %v404, 17
  %v445 = vpop.permute.xlu0 %444
  %446 = vrot.lane.b32.xlu0 %v406, 17
  %v447 = vpop.permute.xlu0 %446
  %v448 = vsel %vm76, %v441, %v425
  %v449 = vsel %vm76, %v443, %v427
  %v450 = vsel %vm76, %v445, %v429
  %v451 = vsel %vm76, %v447, %v431
  %v460 = vsel %vm76, %v425, %v441
  %v461 = vsel %vm76, %v427, %v443
  %v462 = vsel %vm76, %v429, %v445
  %v463 = vsel %vm76, %v431, %v447
  %v464 = vsel %vm93, %v460, 0.0
  %v465 = vsel %vm94, %v448, 0.0
  %v466 = vsel %vm93, %v461, 0.0
  %v467 = vsel %vm94, %v449, 0.0
  %v468 = vsel %vm93, %v462, 0.0
  %v469 = vsel %vm94, %v450, 0.0
  %v470 = vsel %vm93, %v463, 0.0
  %v471 = vsel %vm94, %v451, 0.0
  %472 = vrot.lane.b32.xlu0 %v401, 16
  %v473 = vpop.permute.xlu0 %472
  %474 = vrot.lane.b32.xlu0 %v403, 16
  %v475 = vpop.permute.xlu0 %474
  %476 = vrot.lane.b32.xlu0 %v405, 16
  %v477 = vpop.permute.xlu0 %476
  %478 = vrot.lane.b32.xlu0 %v407, 16
  %v479 = vpop.permute.xlu0 %478
  %484 = vrot.lane.b32.xlu0 %v400, 16
  %v485 = vpop.permute.xlu0 %484
  %486 = vrot.lane.b32.xlu0 %v402, 16
  %v487 = vpop.permute.xlu0 %486
  %488 = vrot.lane.b32.xlu0 %v404, 16
  %v489 = vpop.permute.xlu0 %488
  %490 = vrot.lane.b32.xlu0 %v406, 16
  %v491 = vpop.permute.xlu0 %490
  %v492 = vsel %vm102, %v485, %v473
  %v493 = vsel %vm102, %v487, %v475
  %v494 = vsel %vm102, %v489, %v477
  %v495 = vsel %vm102, %v491, %v479
  %v504 = vsel %vm102, %v473, %v485
  %v505 = vsel %vm102, %v475, %v487
  %v506 = vsel %vm102, %v477, %v489
  %v507 = vsel %vm102, %v479, %v491
  %v508 = vsel %vm116, %v504, 0.0
  %v509 = vsel %vm117, %v492, 0.0
  %v510 = vsel %vm116, %v505, 0.0
  %v511 = vsel %vm117, %v493, 0.0
  %v512 = vsel %vm116, %v506, 0.0
  %v513 = vsel %vm117, %v494, 0.0
  %v514 = vsel %vm116, %v507, 0.0
  %v515 = vsel %vm117, %v495, 0.0
  %516 = vrot.lane.b32.xlu0 %v401, 15
  %v517 = vpop.permute.xlu0 %516
  %518 = vrot.lane.b32.xlu0 %v403, 15
  %v519 = vpop.permute.xlu0 %518
  %520 = vrot.lane.b32.xlu0 %v405, 15
  %v521 = vpop.permute.xlu0 %520
  %522 = vrot.lane.b32.xlu0 %v407, 15
  %v523 = vpop.permute.xlu0 %522
  %528 = vrot.lane.b32.xlu0 %v400, 15
  %v529 = vpop.permute.xlu0 %528
  %530 = vrot.lane.b32.xlu0 %v402, 15
  %v531 = vpop.permute.xlu0 %530
  %532 = vrot.lane.b32.xlu0 %v404, 15
  %v533 = vpop.permute.xlu0 %532
  %534 = vrot.lane.b32.xlu0 %v406, 15
  %v535 = vpop.permute.xlu0 %534
  %v536 = vsel %vm125, %v529, %v517
  %v537 = vsel %vm125, %v531, %v519
  %v538 = vsel %vm125, %v533, %v521
  %v539 = vsel %vm125, %v535, %v523
  %v548 = vsel %vm125, %v517, %v529
  %v549 = vsel %vm125, %v519, %v531
  %v550 = vsel %vm125, %v521, %v533
  %v551 = vsel %vm125, %v523, %v535
  %v552 = vsel %vm141, %v548, 0.0
  %v553 = vsel %vm142, %v536, 0.0
  %v554 = vsel %vm141, %v549, 0.0
  %v555 = vsel %vm142, %v537, 0.0
  %v556 = vsel %vm141, %v550, 0.0
  %v557 = vsel %vm142, %v538, 0.0
  %v558 = vsel %vm141, %v551, 0.0
  %v559 = vsel %vm142, %v539, 0.0
  %560 = vrot.lane.b32.xlu0 %v401, 1
  %v561 = vpop.permute.xlu0 %560
  %562 = vrot.lane.b32.xlu0 %v403, 1
  %v563 = vpop.permute.xlu0 %562
  %564 = vrot.lane.b32.xlu0 %v405, 1
  %v565 = vpop.permute.xlu0 %564
  %566 = vrot.lane.b32.xlu0 %v407, 1
  %v567 = vpop.permute.xlu0 %566
  %572 = vrot.lane.b32.xlu0 %v400, 1
  %v573 = vpop.permute.xlu0 %572
  %574 = vrot.lane.b32.xlu0 %v402, 1
  %v575 = vpop.permute.xlu0 %574
  %576 = vrot.lane.b32.xlu0 %v404, 1
  %v577 = vpop.permute.xlu0 %576
  %578 = vrot.lane.b32.xlu0 %v406, 1
  %v579 = vpop.permute.xlu0 %578
  %v580 = vsel %vm150, %v573, %v561
  %v581 = vsel %vm150, %v575, %v563
  %v582 = vsel %vm150, %v577, %v565
  %v583 = vsel %vm150, %v579, %v567
  %v592 = vsel %vm150, %v561, %v573
  %v593 = vsel %vm150, %v563, %v575
  %v594 = vsel %vm150, %v565, %v577
  %v595 = vsel %vm150, %v567, %v579
  %v596 = vsel %vm164, %v592, 0.0
  %v597 = vsel %vm165, %v580, 0.0
  %v598 = vsel %vm164, %v593, 0.0
  %v599 = vsel %vm165, %v581, 0.0
  %v600 = vsel %vm164, %v594, 0.0
  %v601 = vsel %vm165, %v582, 0.0
  %v602 = vsel %vm164, %v595, 0.0
  %v603 = vsel %vm165, %v583, 0.0
  %604 = vrot.lane.b32.xlu0 %v400, 127
  %v605 = vpop.permute.xlu0 %604
  %606 = vrot.lane.b32.xlu0 %v401, 127
  %v607 = vpop.permute.xlu0 %606
  %608 = vrot.lane.b32.xlu0 %v402, 127
  %v609 = vpop.permute.xlu0 %608
  %610 = vrot.lane.b32.xlu0 %v403, 127
  %v611 = vpop.permute.xlu0 %610
  %612 = vrot.lane.b32.xlu0 %v404, 127
  %v613 = vpop.permute.xlu0 %612
  %614 = vrot.lane.b32.xlu0 %v405, 127
  %v615 = vpop.permute.xlu0 %614
  %616 = vrot.lane.b32.xlu0 %v406, 127
  %v617 = vpop.permute.xlu0 %616
  %618 = vrot.lane.b32.xlu0 %v407, 127
  %v619 = vpop.permute.xlu0 %618
  %v620 = vsel %vm172, %v605, %v607
  %v621 = vsel %vm172, %v609, %v611
  %v622 = vsel %vm172, %v613, %v615
  %v623 = vsel %vm172, %v617, %v619
  %v636 = vsel %vm172, %v607, %v605
  %v637 = vsel %vm172, %v611, %v609
  %v638 = vsel %vm172, %v615, %v613
  %v639 = vsel %vm172, %v619, %v617
  %v640 = vsel %vm187, %v620, 0.0
  %v641 = vsel %vm188, %v636, 0.0
  %v642 = vsel %vm187, %v621, 0.0
  %v643 = vsel %vm188, %v637, 0.0
  %v644 = vsel %vm187, %v622, 0.0
  %v645 = vsel %vm188, %v638, 0.0
  %v646 = vsel %vm187, %v623, 0.0
  %v647 = vsel %vm188, %v639, 0.0
  %648 = vrot.lane.b32.xlu0 %v400, 113
  %v649 = vpop.permute.xlu0 %648
  %650 = vrot.lane.b32.xlu0 %v401, 113
  %v651 = vpop.permute.xlu0 %650
  %652 = vrot.lane.b32.xlu0 %v402, 113
  %v653 = vpop.permute.xlu0 %652
  %654 = vrot.lane.b32.xlu0 %v403, 113
  %v655 = vpop.permute.xlu0 %654
  %656 = vrot.lane.b32.xlu0 %v404, 113
  %v657 = vpop.permute.xlu0 %656
  %658 = vrot.lane.b32.xlu0 %v405, 113
  %v659 = vpop.permute.xlu0 %658
  %660 = vrot.lane.b32.xlu0 %v406, 113
  %v661 = vpop.permute.xlu0 %660
  %662 = vrot.lane.b32.xlu0 %v407, 113
  %v663 = vpop.permute.xlu0 %662
  %v664 = vsel %vm195, %v649, %v651
  %v665 = vsel %vm195, %v653, %v655
  %v666 = vsel %vm195, %v657, %v659
  %v667 = vsel %vm195, %v661, %v663
  %v680 = vsel %vm195, %v651, %v649
  %v681 = vsel %vm195, %v655, %v653
  %v682 = vsel %vm195, %v659, %v657
  %v683 = vsel %vm195, %v663, %v661
  %v684 = vsel %vm212, %v664, 0.0
  %v685 = vsel %vm213, %v680, 0.0
  %v686 = vsel %vm212, %v665, 0.0
  %v687 = vsel %vm213, %v681, 0.0
  %v688 = vsel %vm212, %v666, 0.0
  %v689 = vsel %vm213, %v682, 0.0
  %v690 = vsel %vm212, %v667, 0.0
  %v691 = vsel %vm213, %v683, 0.0
  %692 = vrot.lane.b32.xlu0 %v400, 112
  %v693 = vpop.permute.xlu0 %692
  %694 = vrot.lane.b32.xlu0 %v401, 112
  %v695 = vpop.permute.xlu0 %694
  %696 = vrot.lane.b32.xlu0 %v402, 112
  %v697 = vpop.permute.xlu0 %696
  %698 = vrot.lane.b32.xlu0 %v403, 112
  %v699 = vpop.permute.xlu0 %698
  %700 = vrot.lane.b32.xlu0 %v404, 112
  %v701 = vpop.permute.xlu0 %700
  %702 = vrot.lane.b32.xlu0 %v405, 112
  %v703 = vpop.permute.xlu0 %702
  %704 = vrot.lane.b32.xlu0 %v406, 112
  %v705 = vpop.permute.xlu0 %704
  %706 = vrot.lane.b32.xlu0 %v407, 112
  %v707 = vpop.permute.xlu0 %706
  %v708 = vsel %vm220, %v693, %v695
  %v709 = vsel %vm220, %v697, %v699
  %v710 = vsel %vm220, %v701, %v703
  %v711 = vsel %vm220, %v705, %v707
  %v724 = vsel %vm220, %v695, %v693
  %v725 = vsel %vm220, %v699, %v697
  %v726 = vsel %vm220, %v703, %v701
  %v727 = vsel %vm220, %v707, %v705
  %v728 = vsel %vm235, %v708, 0.0
  %v729 = vsel %vm236, %v724, 0.0
  %v730 = vsel %vm235, %v709, 0.0
  %v731 = vsel %vm236, %v725, 0.0
  %v732 = vsel %vm235, %v710, 0.0
  %v733 = vsel %vm236, %v726, 0.0
  %v734 = vsel %vm235, %v711, 0.0
  %v735 = vsel %vm236, %v727, 0.0
  %736 = vrot.lane.b32.xlu0 %v400, 111
  %v737 = vpop.permute.xlu0 %736
  %738 = vrot.lane.b32.xlu0 %v401, 111
  %v739 = vpop.permute.xlu0 %738
  %740 = vrot.lane.b32.xlu0 %v402, 111
  %v741 = vpop.permute.xlu0 %740
  %742 = vrot.lane.b32.xlu0 %v403, 111
  %v743 = vpop.permute.xlu0 %742
  %744 = vrot.lane.b32.xlu0 %v404, 111
  %v745 = vpop.permute.xlu0 %744
  %746 = vrot.lane.b32.xlu0 %v405, 111
  %v747 = vpop.permute.xlu0 %746
  %748 = vrot.lane.b32.xlu0 %v406, 111
  %v749 = vpop.permute.xlu0 %748
  %750 = vrot.lane.b32.xlu0 %v407, 111
  %v751 = vpop.permute.xlu0 %750
  %v752 = vsel %vm243, %v737, %v739
  %v753 = vsel %vm243, %v741, %v743
  %v754 = vsel %vm243, %v745, %v747
  %v755 = vsel %vm243, %v749, %v751
  %v768 = vsel %vm243, %v739, %v737
  %v769 = vsel %vm243, %v743, %v741
  %v770 = vsel %vm243, %v747, %v745
  %v771 = vsel %vm243, %v751, %v749
  %v772 = vsel %vm259, %v752, 0.0
  %v773 = vsel %vm260, %v768, 0.0
  %v774 = vsel %vm259, %v753, 0.0
  %v775 = vsel %vm260, %v769, 0.0
  %v776 = vsel %vm259, %v754, 0.0
  %v777 = vsel %vm260, %v770, 0.0
  %v778 = vsel %vm259, %v755, 0.0
  %v779 = vsel %vm260, %v771, 0.0
  %v780 = vpack.c.bf16 %v466, %v464
  %v781 = vpack.c.bf16 %v467, %v465
  %v782 = vpack.c.bf16 %v470, %v468
  %v783 = vpack.c.bf16 %v471, %v469
  %v784 = vpack.c.bf16 %v510, %v508
  %v785 = vpack.c.bf16 %v511, %v509
  %v786 = vpack.c.bf16 %v514, %v512
  %v787 = vpack.c.bf16 %v515, %v513
  %v788 = vpack.c.bf16 %v554, %v552
  %v789 = vpack.c.bf16 %v555, %v553
  %v790 = vpack.c.bf16 %v558, %v556
  %v791 = vpack.c.bf16 %v559, %v557
  %v792 = vpack.c.bf16 %v598, %v596
  %v793 = vpack.c.bf16 %v599, %v597
  %v794 = vpack.c.bf16 %v602, %v600
  %v795 = vpack.c.bf16 %v603, %v601
  %v796 = vpack.c.bf16 %v402, %v400
  %v797 = vpack.c.bf16 %v403, %v401
  %v798 = vpack.c.bf16 %v406, %v404
  %v799 = vpack.c.bf16 %v407, %v405
  %v800 = vpack.c.bf16 %v642, %v640
  %v801 = vpack.c.bf16 %v643, %v641
  %v802 = vpack.c.bf16 %v646, %v644
  %v803 = vpack.c.bf16 %v647, %v645
  %v804 = vpack.c.bf16 %v686, %v684
  %v805 = vpack.c.bf16 %v687, %v685
  %v806 = vpack.c.bf16 %v690, %v688
  %v807 = vpack.c.bf16 %v691, %v689
  %v808 = vpack.c.bf16 %v730, %v728
  %v809 = vpack.c.bf16 %v731, %v729
  %v810 = vpack.c.bf16 %v734, %v732
  %v811 = vpack.c.bf16 %v735, %v733
  %v812 = vpack.c.bf16 %v774, %v772
  %v813 = vpack.c.bf16 %v775, %v773
  %v814 = vpack.c.bf16 %v778, %v776
  %v815 = vpack.c.bf16 %v779, %v777
  %817 = vset.pattern.permute.xlu0 0
  %818 = vperm.xlu0 %817, %v416
  %v819 = vpop.permute.xlu0 %818
  %822 = vset.pattern.permute.xlu0 0
  %823 = vperm.xlu0 %822, %v417
  %v824 = vpop.permute.xlu0 %823
  %827 = vset.pattern.permute.xlu0 0
  %828 = vperm.xlu0 %827, %v418
  %v829 = vpop.permute.xlu0 %828
  %832 = vset.pattern.permute.xlu0 0
  %833 = vperm.xlu0 %832, %v419
  %v834 = vpop.permute.xlu0 %833
  %v844 = vunpack.c.l.b16 %v408
  %v845 = vunpack.c.h.b16 %v408
  %v846 = vunpack.c.l.b16 %v409
  %v847 = vunpack.c.l.b16 %v410
  %v848 = vunpack.c.h.b16 %v410
  %v849 = vunpack.c.l.b16 %v411
  %v850 = vunpack.c.l.b16 %v412
  %v851 = vunpack.c.h.b16 %v412
  %v852 = vunpack.c.l.b16 %v413
  %v853 = vunpack.c.l.b16 %v414
  %v854 = vunpack.c.h.b16 %v414
  %v855 = vunpack.c.l.b16 %v415
  %v856 = vpack.c.b16 %v847, %v844
  %v857 = vpack.c.b16 %v848, %v845
  %v858 = vpack.c.b16 %v849, %v846
  %v859 = vpack.c.b16 %v853, %v850
  %v860 = vpack.c.b16 %v854, %v851
  %v861 = vpack.c.b16 %v855, %v852
  %vm866 = vcmask 261120
  %v868 = vsel %vm866, %v858, 0
  %v871 = vsel %vm866, %v861, 0
  %873 = vmatprep.subr.bf16.mxu0 %v781
  %874 = vmatpush1.bf16.msra.mxu0 %v780
  %875 = vmatprep.subr.bf16.mxu0 %v783
  %876 = vmatpush1.bf16.msra.mxu0 %v782
  %877 = vmatprep.subr.bf16.mxu0 %v785
  %878 = vmatpush1.bf16.msra.mxu0 %v784
  %879 = vmatprep.subr.bf16.mxu0 %v787
  %880 = vmatpush1.bf16.msra.mxu0 %v786
  %881 = vmatprep.subr.bf16.mxu0 %v789
  %882 = vmatpush1.bf16.msra.mxu0 %v788
  %883 = vmatprep.subr.bf16.mxu0 %v791
  %884 = vmatpush1.bf16.msra.mxu0 %v790
  %885 = vmatprep.subr.bf16.mxu0 %v793
  %886 = vmatpush1.bf16.msra.mxu0 %v792
  %887 = vmatprep.subr.bf16.mxu0 %v795
  %888 = vmatpush1.bf16.msra.mxu0 %v794
  %889 = vmatprep.subr.bf16.mxu0 %v797
  %890 = vmatpush1.bf16.msra.mxu0 %v796
  %891 = vmatprep.subr.bf16.mxu0 %v799
  %892 = vmatpush1.bf16.msra.mxu0 %v798
  %893 = vmatprep.subr.bf16.mxu0 %v801
  %894 = vmatpush1.bf16.msra.mxu0 %v800
  %895 = vmatprep.subr.bf16.mxu0 %v803
  %896 = vmatpush1.bf16.msra.mxu0 %v802
  %897 = vmatprep.subr.bf16.mxu0 %v805
  %898 = vmatpush1.bf16.msra.mxu0 %v804
  %899 = vmatprep.subr.bf16.mxu0 %v807
  %900 = vmatpush1.bf16.msra.mxu0 %v806
  %901 = vmatprep.subr.bf16.mxu0 %v809
  %902 = vmatpush1.bf16.msra.mxu0 %v808
  %903 = vmatprep.subr.bf16.mxu0 %v811
  %904 = vmatpush1.bf16.msra.mxu0 %v810
  %905 = vmatprep.mubr.bf16.mxu0 %v857
  %906 = vmatmul.mubr.bf16.gmra.mrb[0].mxu0 %v856
  %v907 = vpop.f32.mrb[0].mxu0
  %v908 = vadd.f32 %v819, %v907
  %v909 = vpop.f32.mrb[0].mxu0
  %v910 = vadd.f32 %v819, %v909
  %v911 = vpop.f32.mrb[0].mxu0
  %v912 = vadd.f32 %v824, %v911
  %v913 = vpop.f32.mrb[0].mxu0
  %v914 = vadd.f32 %v824, %v913
  %915 = vmatprep.mubr.bf16.mxu0 %v860
  %916 = vmatmul.mubr.bf16.gmra.mrb[0].mxu0 %v859
  %v917 = vpop.f32.mrb[0].mxu0
  %v918 = vadd.f32 %v829, %v917
  %v919 = vpop.f32.mrb[0].mxu0
  %v920 = vadd.f32 %v829, %v919
  %v921 = vpop.f32.mrb[0].mxu0
  %v922 = vadd.f32 %v834, %v921
  %v923 = vpop.f32.mrb[0].mxu0
  %v924 = vadd.f32 %v834, %v923
  %925 = vdwg.mxu0
  %926 = vmatprep.subr.bf16.mxu0 %v813
  %927 = vmatpush1.bf16.msra.mxu0 %v812
  %928 = vmatprep.subr.bf16.mxu0 %v815
  %929 = vmatpush1.bf16.msra.mxu0 %v814
  %930 = vmatprep.subr.bf16.mxu0 0
  %931 = vmatpush1.bf16.msra.mxu0 0
  %932 = vmatprep.subr.bf16.mxu0 0
  %933 = vmatpush1.bf16.msra.mxu0 0
  %934 = vmatprep.subr.bf16.mxu0 0
  %935 = vmatpush1.bf16.msra.mxu0 0
  %936 = vmatprep.subr.bf16.mxu0 0
  %937 = vmatpush1.bf16.msra.mxu0 0
  %938 = vmatprep.subr.bf16.mxu0 0
  %939 = vmatpush1.bf16.msra.mxu0 0
  %940 = vmatprep.subr.bf16.mxu0 0
  %941 = vmatpush1.bf16.msra.mxu0 0
  %942 = vmatprep.subr.bf16.mxu0 0
  %943 = vmatpush1.bf16.msra.mxu0 0
  %944 = vmatprep.subr.bf16.mxu0 0
  %945 = vmatpush1.bf16.msra.mxu0 0
  %946 = vmatprep.subr.bf16.mxu0 0
  %947 = vmatpush1.bf16.msra.mxu0 0
  %948 = vmatprep.subr.bf16.mxu0 0
  %949 = vmatpush1.bf16.msra.mxu0 0
  %950 = vmatprep.subr.bf16.mxu0 0
  %951 = vmatpush1.bf16.msra.mxu0 0
  %952 = vmatprep.subr.bf16.mxu0 0
  %953 = vmatpush1.bf16.msra.mxu0 0
  %954 = vmatprep.subr.bf16.mxu0 0
  %955 = vmatpush1.bf16.msra.mxu0 0
  %956 = vmatprep.subr.bf16.mxu0 0
  %957 = vmatpush1.bf16.msra.mxu0 0
  %958 = vmatprep.mubr.bf16.mxu0 0
  %959 = vmatmul.mubr.bf16.gmra.mrb[0].mxu0 %v868
  %v960 = vpop.f32.mrb[0].mxu0
  %v961 = vadd.f32 %v908, %v960
  %v962 = vpop.f32.mrb[0].mxu0
  %v963 = vadd.f32 %v910, %v962
  %v964 = vpop.f32.mrb[0].mxu0
  %v965 = vadd.f32 %v912, %v964
  %v966 = vpop.f32.mrb[0].mxu0
  %v967 = vadd.f32 %v914, %v966
  %968 = vmatprep.mubr.bf16.mxu0 0
  %969 = vmatmul.mubr.bf16.gmra.mrb[0].mxu0 %v871
  %v970 = vpop.f32.mrb[0].mxu0
  %v971 = vadd.f32 %v918, %v970
  %v972 = vpop.f32.mrb[0].mxu0
  %v973 = vadd.f32 %v920, %v972
  %v974 = vpop.f32.mrb[0].mxu0
  %v975 = vadd.f32 %v922, %v974
  %v976 = vpop.f32.mrb[0].mxu0
  %v977 = vadd.f32 %v924, %v976
  %978 = vdwg.mxu0
  %v979 = vmax.f32 %v961, 0.0
  %v980 = vmax.f32 %v963, 0.0
  %v981 = vmax.f32 %v965, 0.0
  %v982 = vmax.f32 %v967, 0.0
  %v983 = vmax.f32 %v971, 0.0
  %v984 = vmax.f32 %v973, 0.0
  %v985 = vmax.f32 %v975, 0.0
  %v986 = vmax.f32 %v977, 0.0
  %v987 = vld [vmem:[%s6] sm:$0xff]
  %v988 = vld [vmem:[%s6 + $0x8] sm:$0xf]
  %v989 = vld [vmem:[%s6 + $0xc] sm:$0xff]
  %v990 = vld [vmem:[%s6 + $0x14] sm:$0xf]
  %v991 = vld [vmem:[%s6 + $0x18] sm:$0xff]
  %v992 = vld [vmem:[%s6 + $0x20] sm:$0xf]
  %v993 = vld [vmem:[%s6 + $0x24] sm:$0xff]
  %v994 = vld [vmem:[%s6 + $0x2c] sm:$0xf]
  %v995 = vld [vmem:[%s7] sm:$0xff]
  %v996 = vld [vmem:[%s7 + $0x8] sm:$0xff]
  %v997 = vld [vmem:[%s7 + $0x10] sm:$0xff]
  %v998 = vld [vmem:[%s7 + $0x18] sm:$0xff]
  %1003 = vrot.lane.b32.xlu0 %v980, 17
  %v1004 = vpop.permute.xlu0 %1003
  %1005 = vrot.lane.b32.xlu0 %v982, 17
  %v1006 = vpop.permute.xlu0 %1005
  %1007 = vrot.lane.b32.xlu0 %v984, 17
  %v1008 = vpop.permute.xlu0 %1007
  %1009 = vrot.lane.b32.xlu0 %v986, 17
  %v1010 = vpop.permute.xlu0 %1009
  %1019 = vrot.lane.b32.xlu0 %v979, 17
  %v1020 = vpop.permute.xlu0 %1019
  %1021 = vrot.lane.b32.xlu0 %v981, 17
  %v1022 = vpop.permute.xlu0 %1021
  %1023 = vrot.lane.b32.xlu0 %v983, 17
  %v1024 = vpop.permute.xlu0 %1023
  %1025 = vrot.lane.b32.xlu0 %v985, 17
  %v1026 = vpop.permute.xlu0 %1025
  %v1027 = vsel %vm76, %v1020, %v1004
  %v1028 = vsel %vm76, %v1022, %v1006
  %v1029 = vsel %vm76, %v1024, %v1008
  %v1030 = vsel %vm76, %v1026, %v1010
  %v1039 = vsel %vm76, %v1004, %v1020
  %v1040 = vsel %vm76, %v1006, %v1022
  %v1041 = vsel %vm76, %v1008, %v1024
  %v1042 = vsel %vm76, %v1010, %v1026
  %v1043 = vsel %vm93, %v1039, 0.0
  %v1044 = vsel %vm94, %v1027, 0.0
  %v1045 = vsel %vm93, %v1040, 0.0
  %v1046 = vsel %vm94, %v1028, 0.0
  %v1047 = vsel %vm93, %v1041, 0.0
  %v1048 = vsel %vm94, %v1029, 0.0
  %v1049 = vsel %vm93, %v1042, 0.0
  %v1050 = vsel %vm94, %v1030, 0.0
  %1051 = vrot.lane.b32.xlu0 %v980, 16
  %v1052 = vpop.permute.xlu0 %1051
  %1053 = vrot.lane.b32.xlu0 %v982, 16
  %v1054 = vpop.permute.xlu0 %1053
  %1055 = vrot.lane.b32.xlu0 %v984, 16
  %v1056 = vpop.permute.xlu0 %1055
  %1057 = vrot.lane.b32.xlu0 %v986, 16
  %v1058 = vpop.permute.xlu0 %1057
  %1063 = vrot.lane.b32.xlu0 %v979, 16
  %v1064 = vpop.permute.xlu0 %1063
  %1065 = vrot.lane.b32.xlu0 %v981, 16
  %v1066 = vpop.permute.xlu0 %1065
  %1067 = vrot.lane.b32.xlu0 %v983, 16
  %v1068 = vpop.permute.xlu0 %1067
  %1069 = vrot.lane.b32.xlu0 %v985, 16
  %v1070 = vpop.permute.xlu0 %1069
  %v1071 = vsel %vm102, %v1064, %v1052
  %v1072 = vsel %vm102, %v1066, %v1054
  %v1073 = vsel %vm102, %v1068, %v1056
  %v1074 = vsel %vm102, %v1070, %v1058
  %v1083 = vsel %vm102, %v1052, %v1064
  %v1084 = vsel %vm102, %v1054, %v1066
  %v1085 = vsel %vm102, %v1056, %v1068
  %v1086 = vsel %vm102, %v1058, %v1070
  %v1087 = vsel %vm116, %v1083, 0.0
  %v1088 = vsel %vm117, %v1071, 0.0
  %v1089 = vsel %vm116, %v1084, 0.0
  %v1090 = vsel %vm117, %v1072, 0.0
  %v1091 = vsel %vm116, %v1085, 0.0
  %v1092 = vsel %vm117, %v1073, 0.0
  %v1093 = vsel %vm116, %v1086, 0.0
  %v1094 = vsel %vm117, %v1074, 0.0
  %1095 = vrot.lane.b32.xlu0 %v980, 15
  %v1096 = vpop.permute.xlu0 %1095
  %1097 = vrot.lane.b32.xlu0 %v982, 15
  %v1098 = vpop.permute.xlu0 %1097
  %1099 = vrot.lane.b32.xlu0 %v984, 15
  %v1100 = vpop.permute.xlu0 %1099
  %1101 = vrot.lane.b32.xlu0 %v986, 15
  %v1102 = vpop.permute.xlu0 %1101
  %1107 = vrot.lane.b32.xlu0 %v979, 15
  %v1108 = vpop.permute.xlu0 %1107
  %1109 = vrot.lane.b32.xlu0 %v981, 15
  %v1110 = vpop.permute.xlu0 %1109
  %1111 = vrot.lane.b32.xlu0 %v983, 15
  %v1112 = vpop.permute.xlu0 %1111
  %1113 = vrot.lane.b32.xlu0 %v985, 15
  %v1114 = vpop.permute.xlu0 %1113
  %v1115 = vsel %vm125, %v1108, %v1096
  %v1116 = vsel %vm125, %v1110, %v1098
  %v1117 = vsel %vm125, %v1112, %v1100
  %v1118 = vsel %vm125, %v1114, %v1102
  %v1127 = vsel %vm125, %v1096, %v1108
  %v1128 = vsel %vm125, %v1098, %v1110
  %v1129 = vsel %vm125, %v1100, %v1112
  %v1130 = vsel %vm125, %v1102, %v1114
  %v1131 = vsel %vm141, %v1127, 0.0
  %v1132 = vsel %vm142, %v1115, 0.0
  %v1133 = vsel %vm141, %v1128, 0.0
  %v1134 = vsel %vm142, %v1116, 0.0
  %v1135 = vsel %vm141, %v1129, 0.0
  %v1136 = vsel %vm142, %v1117, 0.0
  %v1137 = vsel %vm141, %v1130, 0.0
  %v1138 = vsel %vm142, %v1118, 0.0
  %1139 = vrot.lane.b32.xlu0 %v980, 1
  %v1140 = vpop.permute.xlu0 %1139
  %1141 = vrot.lane.b32.xlu0 %v982, 1
  %v1142 = vpop.permute.xlu0 %1141
  %1143 = vrot.lane.b32.xlu0 %v984, 1
  %v1144 = vpop.permute.xlu0 %1143
  %1145 = vrot.lane.b32.xlu0 %v986, 1
  %v1146 = vpop.permute.xlu0 %1145
  %1151 = vrot.lane.b32.xlu0 %v979, 1
  %v1152 = vpop.permute.xlu0 %1151
  %1153 = vrot.lane.b32.xlu0 %v981, 1
  %v1154 = vpop.permute.xlu0 %1153
  %1155 = vrot.lane.b32.xlu0 %v983, 1
  %v1156 = vpop.permute.xlu0 %1155
  %1157 = vrot.lane.b32.xlu0 %v985, 1
  %v1158 = vpop.permute.xlu0 %1157
  %v1159 = vsel %vm150, %v1152, %v1140
  %v1160 = vsel %vm150, %v1154, %v1142
  %v1161 = vsel %vm150, %v1156, %v1144
  %v1162 = vsel %vm150, %v1158, %v1146
  %v1171 = vsel %vm150, %v1140, %v1152
  %v1172 = vsel %vm150, %v1142, %v1154
  %v1173 = vsel %vm150, %v1144, %v1156
  %v1174 = vsel %vm150, %v1146, %v1158
  %v1175 = vsel %vm164, %v1171, 0.0
  %v1176 = vsel %vm165, %v1159, 0.0
  %v1177 = vsel %vm164, %v1172, 0.0
  %v1178 = vsel %vm165, %v1160, 0.0
  %v1179 = vsel %vm164, %v1173, 0.0
  %v1180 = vsel %vm165, %v1161, 0.0
  %v1181 = vsel %vm164, %v1174, 0.0
  %v1182 = vsel %vm165, %v1162, 0.0
  %1183 = vrot.lane.b32.xlu0 %v979, 127
  %v1184 = vpop.permute.xlu0 %1183
  %1185 = vrot.lane.b32.xlu0 %v980, 127
  %v1186 = vpop.permute.xlu0 %1185
  %1187 = vrot.lane.b32.xlu0 %v981, 127
  %v1188 = vpop.permute.xlu0 %1187
  %1189 = vrot.lane.b32.xlu0 %v982, 127
  %v1190 = vpop.permute.xlu0 %1189
  %1191 = vrot.lane.b32.xlu0 %v983, 127
  %v1192 = vpop.permute.xlu0 %1191
  %1193 = vrot.lane.b32.xlu0 %v984, 127
  %v1194 = vpop.permute.xlu0 %1193
  %1195 = vrot.lane.b32.xlu0 %v985, 127
  %v1196 = vpop.permute.xlu0 %1195
  %1197 = vrot.lane.b32.xlu0 %v986, 127
  %v1198 = vpop.permute.xlu0 %1197
  %v1199 = vsel %vm172, %v1184, %v1186
  %v1200 = vsel %vm172, %v1188, %v1190
  %v1201 = vsel %vm172, %v1192, %v1194
  %v1202 = vsel %vm172, %v1196, %v1198
  %v1215 = vsel %vm172, %v1186, %v1184
  %v1216 = vsel %vm172, %v1190, %v1188
  %v1217 = vsel %vm172, %v1194, %v1192
  %v1218 = vsel %vm172, %v1198, %v1196
  %v1219 = vsel %vm187, %v1199, 0.0
  %v1220 = vsel %vm188, %v1215, 0.0
  %v1221 = vsel %vm187, %v1200, 0.0
  %v1222 = vsel %vm188, %v1216, 0.0
  %v1223 = vsel %vm187, %v1201, 0.0
  %v1224 = vsel %vm188, %v1217, 0.0
  %v1225 = vsel %vm187, %v1202, 0.0
  %v1226 = vsel %vm188, %v1218, 0.0
  %1227 = vrot.lane.b32.xlu0 %v979, 113
  %v1228 = vpop.permute.xlu0 %1227
  %1229 = vrot.lane.b32.xlu0 %v980, 113
  %v1230 = vpop.permute.xlu0 %1229
  %1231 = vrot.lane.b32.xlu0 %v981, 113
  %v1232 = vpop.permute.xlu0 %1231
  %1233 = vrot.lane.b32.xlu0 %v982, 113
  %v1234 = vpop.permute.xlu0 %1233
  %1235 = vrot.lane.b32.xlu0 %v983, 113
  %v1236 = vpop.permute.xlu0 %1235
  %1237 = vrot.lane.b32.xlu0 %v984, 113
  %v1238 = vpop.permute.xlu0 %1237
  %1239 = vrot.lane.b32.xlu0 %v985, 113
  %v1240 = vpop.permute.xlu0 %1239
  %1241 = vrot.lane.b32.xlu0 %v986, 113
  %v1242 = vpop.permute.xlu0 %1241
  %v1243 = vsel %vm195, %v1228, %v1230
  %v1244 = vsel %vm195, %v1232, %v1234
  %v1245 = vsel %vm195, %v1236, %v1238
  %v1246 = vsel %vm195, %v1240, %v1242
  %v1259 = vsel %vm195, %v1230, %v1228
  %v1260 = vsel %vm195, %v1234, %v1232
  %v1261 = vsel %vm195, %v1238, %v1236
  %v1262 = vsel %vm195, %v1242, %v1240
  %v1263 = vsel %vm212, %v1243, 0.0
  %v1264 = vsel %vm213, %v1259, 0.0
  %v1265 = vsel %vm212, %v1244, 0.0
  %v1266 = vsel %vm213, %v1260, 0.0
  %v1267 = vsel %vm212, %v1245, 0.0
  %v1268 = vsel %vm213, %v1261, 0.0
  %v1269 = vsel %vm212, %v1246, 0.0
  %v1270 = vsel %vm213, %v1262, 0.0
  %1271 = vrot.lane.b32.xlu0 %v979, 112
  %v1272 = vpop.permute.xlu0 %1271
  %1273 = vrot.lane.b32.xlu0 %v980, 112
  %v1274 = vpop.permute.xlu0 %1273
  %1275 = vrot.lane.b32.xlu0 %v981, 112
  %v1276 = vpop.permute.xlu0 %1275
  %1277 = vrot.lane.b32.xlu0 %v982, 112
  %v1278 = vpop.permute.xlu0 %1277
  %1279 = vrot.lane.b32.xlu0 %v983, 112
  %v1280 = vpop.permute.xlu0 %1279
  %1281 = vrot.lane.b32.xlu0 %v984, 112
  %v1282 = vpop.permute.xlu0 %1281
  %1283 = vrot.lane.b32.xlu0 %v985, 112
  %v1284 = vpop.permute.xlu0 %1283
  %1285 = vrot.lane.b32.xlu0 %v986, 112
  %v1286 = vpop.permute.xlu0 %1285
  %v1287 = vsel %vm220, %v1272, %v1274
  %v1288 = vsel %vm220, %v1276, %v1278
  %v1289 = vsel %vm220, %v1280, %v1282
  %v1290 = vsel %vm220, %v1284, %v1286
  %v1303 = vsel %vm220, %v1274, %v1272
  %v1304 = vsel %vm220, %v1278, %v1276
  %v1305 = vsel %vm220, %v1282, %v1280
  %v1306 = vsel %vm220, %v1286, %v1284
  %v1307 = vsel %vm235, %v1287, 0.0
  %v1308 = vsel %vm236, %v1303, 0.0
  %v1309 = vsel %vm235, %v1288, 0.0
  %v1310 = vsel %vm236, %v1304, 0.0
  %v1311 = vsel %vm235, %v1289, 0.0
  %v1312 = vsel %vm236, %v1305, 0.0
  %v1313 = vsel %vm235, %v1290, 0.0
  %v1314 = vsel %vm236, %v1306, 0.0
  %1315 = vrot.lane.b32.xlu0 %v979, 111
  %v1316 = vpop.permute.xlu0 %1315
  %1317 = vrot.lane.b32.xlu0 %v980, 111
  %v1318 = vpop.permute.xlu0 %1317
  %1319 = vrot.lane.b32.xlu0 %v981, 111
  %v1320 = vpop.permute.xlu0 %1319
  %1321 = vrot.lane.b32.xlu0 %v982, 111
  %v1322 = vpop.permute.xlu0 %1321
  %1323 = vrot.lane.b32.xlu0 %v983, 111
  %v1324 = vpop.permute.xlu0 %1323
  %1325 = vrot.lane.b32.xlu0 %v984, 111
  %v1326 = vpop.permute.xlu0 %1325
  %1327 = vrot.lane.b32.xlu0 %v985, 111
  %v1328 = vpop.permute.xlu0 %1327
  %1329 = vrot.lane.b32.xlu0 %v986, 111
  %v1330 = vpop.permute.xlu0 %1329
  %v1331 = vsel %vm243, %v1316, %v1318
  %v1332 = vsel %vm243, %v1320, %v1322
  %v1333 = vsel %vm243, %v1324, %v1326
  %v1334 = vsel %vm243, %v1328, %v1330
  %v1347 = vsel %vm243, %v1318, %v1316
  %v1348 = vsel %vm243, %v1322, %v1320
  %v1349 = vsel %vm243, %v1326, %v1324
  %v1350 = vsel %vm243, %v1330, %v1328
  %v1351 = vsel %vm259, %v1331, 0.0
  %v1352 = vsel %vm260, %v1347, 0.0
  %v1353 = vsel %vm259, %v1332, 0.0
  %v1354 = vsel %vm260, %v1348, 0.0
  %v1355 = vsel %vm259, %v1333, 0.0
  %v1356 = vsel %vm260, %v1349, 0.0
  %v1357 = vsel %vm259, %v1334, 0.0
  %v1358 = vsel %vm260, %v1350, 0.0
  %v1359 = vpack.c.bf16 %v1045, %v1043
  %v1360 = vpack.c.bf16 %v1046, %v1044
  %v1361 = vpack.c.bf16 %v1049, %v1047
  %v1362 = vpack.c.bf16 %v1050, %v1048
  %v1363 = vpack.c.bf16 %v1089, %v1087
  %v1364 = vpack.c.bf16 %v1090, %v1088
  %v1365 = vpack.c.bf16 %v1093, %v1091
  %v1366 = vpack.c.bf16 %v1094, %v1092
  %v1367 = vpack.c.bf16 %v1133, %v1131
  %v1368 = vpack.c.bf16 %v1134, %v1132
  %v1369 = vpack.c.bf16 %v1137, %v1135
  %v1370 = vpack.c.bf16 %v1138, %v1136
  %v1371 = vpack.c.bf16 %v1177, %v1175
  %v1372 = vpack.c.bf16 %v1178, %v1176
  %v1373 = vpack.c.bf16 %v1181, %v1179
  %v1374 = vpack.c.bf16 %v1182, %v1180
  %v1375 = vpack.c.bf16 %v981, %v979
  %v1376 = vpack.c.bf16 %v982, %v980
  %v1377 = vpack.c.bf16 %v985, %v983
  %v1378 = vpack.c.bf16 %v986, %v984
  %v1379 = vpack.c.bf16 %v1221, %v1219
  %v1380 = vpack.c.bf16 %v1222, %v1220
  %v1381 = vpack.c.bf16 %v1225, %v1223
  %v1382 = vpack.c.bf16 %v1226, %v1224
  %v1383 = vpack.c.bf16 %v1265, %v1263
  %v1384 = vpack.c.bf16 %v1266, %v1264
  %v1385 = vpack.c.bf16 %v1269, %v1267
  %v1386 = vpack.c.bf16 %v1270, %v1268
  %v1387 = vpack.c.bf16 %v1309, %v1307
  %v1388 = vpack.c.bf16 %v1310, %v1308
  %v1389 = vpack.c.bf16 %v1313, %v1311
  %v1390 = vpack.c.bf16 %v1314, %v1312
  %v1391 = vpack.c.bf16 %v1353, %v1351
  %v1392 = vpack.c.bf16 %v1354, %v1352
  %v1393 = vpack.c.bf16 %v1357, %v1355
  %v1394 = vpack.c.bf16 %v1358, %v1356
  %1396 = vset.pattern.permute.xlu0 0
  %1397 = vperm.xlu0 %1396, %v995
  %v1398 = vpop.permute.xlu0 %1397
  %1401 = vset.pattern.permute.xlu0 0
  %1402 = vperm.xlu0 %1401, %v996
  %v1403 = vpop.permute.xlu0 %1402
  %1406 = vset.pattern.permute.xlu0 0
  %1407 = vperm.xlu0 %1406, %v997
  %v1408 = vpop.permute.xlu0 %1407
  %1411 = vset.pattern.permute.xlu0 0
  %1412 = vperm.xlu0 %1411, %v998
  %v1413 = vpop.permute.xlu0 %1412
  %v1423 = vunpack.c.l.b16 %v987
  %v1424 = vunpack.c.h.b16 %v987
  %v1425 = vunpack.c.l.b16 %v988
  %v1426 = vunpack.c.l.b16 %v989
  %v1427 = vunpack.c.h.b16 %v989
  %v1428 = vunpack.c.l.b16 %v990
  %v1429 = vunpack.c.l.b16 %v991
  %v1430 = vunpack.c.h.b16 %v991
  %v1431 = vunpack.c.l.b16 %v992
  %v1432 = vunpack.c.l.b16 %v993
  %v1433 = vunpack.c.h.b16 %v993
  %v1434 = vunpack.c.l.b16 %v994
  %v1435 = vpack.c.b16 %v1426, %v1423
  %v1436 = vpack.c.b16 %v1427, %v1424
  %v1437 = vpack.c.b16 %v1428, %v1425
  %v1438 = vpack.c.b16 %v1432, %v1429
  %v1439 = vpack.c.b16 %v1433, %v1430
  %v1440 = vpack.c.b16 %v1434, %v1431
  %v1446 = vsel %vm866, %v1437, 0
  %v1449 = vsel %vm866, %v1440, 0
  %1451 = vmatprep.subr.bf16.mxu0 %v1360
  %1452 = vmatpush1.bf16.msra.mxu0 %v1359
  %1453 = vmatprep.subr.bf16.mxu0 %v1362
  %1454 = vmatpush1.bf16.msra.mxu0 %v1361
  %1455 = vmatprep.subr.bf16.mxu0 %v1364
  %1456 = vmatpush1.bf16.msra.mxu0 %v1363
  %1457 = vmatprep.subr.bf16.mxu0 %v1366
  %1458 = vmatpush1.bf16.msra.mxu0 %v1365
  %1459 = vmatprep.subr.bf16.mxu0 %v1368
  %1460 = vmatpush1.bf16.msra.mxu0 %v1367
  %1461 = vmatprep.subr.bf16.mxu0 %v1370
  %1462 = vmatpush1.bf16.msra.mxu0 %v1369
  %1463 = vmatprep.subr.bf16.mxu0 %v1372
  %1464 = vmatpush1.bf16.msra.mxu0 %v1371
  %1465 = vmatprep.subr.bf16.mxu0 %v1374
  %1466 = vmatpush1.bf16.msra.mxu0 %v1373
  %1467 = vmatprep.subr.bf16.mxu0 %v1376
  %1468 = vmatpush1.bf16.msra.mxu0 %v1375
  %1469 = vmatprep.subr.bf16.mxu0 %v1378
  %1470 = vmatpush1.bf16.msra.mxu0 %v1377
  %1471 = vmatprep.subr.bf16.mxu0 %v1380
  %1472 = vmatpush1.bf16.msra.mxu0 %v1379
  %1473 = vmatprep.subr.bf16.mxu0 %v1382
  %1474 = vmatpush1.bf16.msra.mxu0 %v1381
  %1475 = vmatprep.subr.bf16.mxu0 %v1384
  %1476 = vmatpush1.bf16.msra.mxu0 %v1383
  %1477 = vmatprep.subr.bf16.mxu0 %v1386
  %1478 = vmatpush1.bf16.msra.mxu0 %v1385
  %1479 = vmatprep.subr.bf16.mxu0 %v1388
  %1480 = vmatpush1.bf16.msra.mxu0 %v1387
  %1481 = vmatprep.subr.bf16.mxu0 %v1390
  %1482 = vmatpush1.bf16.msra.mxu0 %v1389
  %1483 = vmatprep.mubr.bf16.mxu0 %v1436
  %1484 = vmatmul.mubr.bf16.gmra.mrb[0].mxu0 %v1435
  %v1485 = vpop.f32.mrb[0].mxu0
  %v1486 = vadd.f32 %v1398, %v1485
  %v1487 = vpop.f32.mrb[0].mxu0
  %v1488 = vadd.f32 %v1398, %v1487
  %v1489 = vpop.f32.mrb[0].mxu0
  %v1490 = vadd.f32 %v1403, %v1489
  %v1491 = vpop.f32.mrb[0].mxu0
  %v1492 = vadd.f32 %v1403, %v1491
  %1493 = vmatprep.mubr.bf16.mxu0 %v1439
  %1494 = vmatmul.mubr.bf16.gmra.mrb[0].mxu0 %v1438
  %v1495 = vpop.f32.mrb[0].mxu0
  %v1496 = vadd.f32 %v1408, %v1495
  %v1497 = vpop.f32.mrb[0].mxu0
  %v1498 = vadd.f32 %v1408, %v1497
  %v1499 = vpop.f32.mrb[0].mxu0
  %v1500 = vadd.f32 %v1413, %v1499
  %v1501 = vpop.f32.mrb[0].mxu0
  %v1502 = vadd.f32 %v1413, %v1501
  %1503 = vdwg.mxu0
  %1504 = vmatprep.subr.bf16.mxu0 %v1392
  %1505 = vmatpush1.bf16.msra.mxu0 %v1391
  %1506 = vmatprep.subr.bf16.mxu0 %v1394
  %1507 = vmatpush1.bf16.msra.mxu0 %v1393
  %1508 = vmatprep.subr.bf16.mxu0 0
  %1509 = vmatpush1.bf16.msra.mxu0 0
  %1510 = vmatprep.subr.bf16.mxu0 0
  %1511 = vmatpush1.bf16.msra.mxu0 0
  %1512 = vmatprep.subr.bf16.mxu0 0
  %1513 = vmatpush1.bf16.msra.mxu0 0
  %1514 = vmatprep.subr.bf16.mxu0 0
  %1515 = vmatpush1.bf16.msra.mxu0 0
  %1516 = vmatprep.subr.bf16.mxu0 0
  %1517 = vmatpush1.bf16.msra.mxu0 0
  %1518 = vmatprep.subr.bf16.mxu0 0
  %1519 = vmatpush1.bf16.msra.mxu0 0
  %1520 = vmatprep.subr.bf16.mxu0 0
  %1521 = vmatpush1.bf16.msra.mxu0 0
  %1522 = vmatprep.subr.bf16.mxu0 0
  %1523 = vmatpush1.bf16.msra.mxu0 0
  %1524 = vmatprep.subr.bf16.mxu0 0
  %1525 = vmatpush1.bf16.msra.mxu0 0
  %1526 = vmatprep.subr.bf16.mxu0 0
  %1527 = vmatpush1.bf16.msra.mxu0 0
  %1528 = vmatprep.subr.bf16.mxu0 0
  %1529 = vmatpush1.bf16.msra.mxu0 0
  %1530 = vmatprep.subr.bf16.mxu0 0
  %1531 = vmatpush1.bf16.msra.mxu0 0
  %1532 = vmatprep.subr.bf16.mxu0 0
  %1533 = vmatpush1.bf16.msra.mxu0 0
  %1534 = vmatprep.subr.bf16.mxu0 0
  %1535 = vmatpush1.bf16.msra.mxu0 0
  %1536 = vmatprep.mubr.bf16.mxu0 0
  %1537 = vmatmul.mubr.bf16.gmra.mrb[0].mxu0 %v1446
  %v1538 = vpop.f32.mrb[0].mxu0
  %v1539 = vadd.f32 %v1486, %v1538
  %v1540 = vpop.f32.mrb[0].mxu0
  %v1541 = vadd.f32 %v1488, %v1540
  %v1542 = vpop.f32.mrb[0].mxu0
  %v1543 = vadd.f32 %v1490, %v1542
  %v1544 = vpop.f32.mrb[0].mxu0
  %v1545 = vadd.f32 %v1492, %v1544
  %1546 = vmatprep.mubr.bf16.mxu0 0
  %1547 = vmatmul.mubr.bf16.gmra.mrb[0].mxu0 %v1449
  %v1548 = vpop.f32.mrb[0].mxu0
  %v1549 = vadd.f32 %v1496, %v1548
  %v1550 = vpop.f32.mrb[0].mxu0
  %v1551 = vadd.f32 %v1498, %v1550
  %v1552 = vpop.f32.mrb[0].mxu0
  %v1553 = vadd.f32 %v1500, %v1552
  %v1554 = vpop.f32.mrb[0].mxu0
  %v1555 = vadd.f32 %v1502, %v1554
  %1556 = vdwg.mxu0
  %v1557 = vmax.f32 %v1539, 0.0
  %v1558 = vmax.f32 %v1541, 0.0
  %v1559 = vmax.f32 %v1543, 0.0
  %v1560 = vmax.f32 %v1545, 0.0
  %v1561 = vmax.f32 %v1549, 0.0
  %v1562 = vmax.f32 %v1551, 0.0
  %v1563 = vmax.f32 %v1553, 0.0
  %v1564 = vmax.f32 %v1555, 0.0
  %v1565 = vld [vmem:[%s8] sm:$0xff]
  %v1566 = vld [vmem:[%s8 + $0x8] sm:$0xf]
  %v1567 = vld [vmem:[%s8 + $0xc] sm:$0xff]
  %v1568 = vld [vmem:[%s8 + $0x14] sm:$0xf]
  %v1569 = vld [vmem:[%s8 + $0x18] sm:$0xff]
  %v1570 = vld [vmem:[%s8 + $0x20] sm:$0xf]
  %v1571 = vld [vmem:[%s8 + $0x24] sm:$0xff]
  %v1572 = vld [vmem:[%s8 + $0x2c] sm:$0xf]
  %v1573 = vld [vmem:[%s9] sm:$0xff]
  %v1574 = vld [vmem:[%s9 + $0x8] sm:$0xff]
  %v1575 = vld [vmem:[%s9 + $0x10] sm:$0xff]
  %v1576 = vld [vmem:[%s9 + $0x18] sm:$0xff]
  %1581 = vrot.lane.b32.xlu0 %v1558, 17
  %v1582 = vpop.permute.xlu0 %1581
  %1583 = vrot.lane.b32.xlu0 %v1560, 17
  %v1584 = vpop.permute.xlu0 %1583
  %1585 = vrot.lane.b32.xlu0 %v1562, 17
  %v1586 = vpop.permute.xlu0 %1585
  %1587 = vrot.lane.b32.xlu0 %v1564, 17
  %v1588 = vpop.permute.xlu0 %1587
  %1597 = vrot.lane.b32.xlu0 %v1557, 17
  %v1598 = vpop.permute.xlu0 %1597
  %1599 = vrot.lane.b32.xlu0 %v1559, 17
  %v1600 = vpop.permute.xlu0 %1599
  %1601 = vrot.lane.b32.xlu0 %v1561, 17
  %v1602 = vpop.permute.xlu0 %1601
  %1603 = vrot.lane.b32.xlu0 %v1563, 17
  %v1604 = vpop.permute.xlu0 %1603
  %v1605 = vsel %vm76, %v1598, %v1582
  %v1606 = vsel %vm76, %v1600, %v1584
  %v1607 = vsel %vm76, %v1602, %v1586
  %v1608 = vsel %vm76, %v1604, %v1588
  %v1617 = vsel %vm76, %v1582, %v1598
  %v1618 = vsel %vm76, %v1584, %v1600
  %v1619 = vsel %vm76, %v1586, %v1602
  %v1620 = vsel %vm76, %v1588, %v1604
  %v1621 = vsel %vm93, %v1617, 0.0
  %v1622 = vsel %vm94, %v1605, 0.0
  %v1623 = vsel %vm93, %v1618, 0.0
  %v1624 = vsel %vm94, %v1606, 0.0
  %v1625 = vsel %vm93, %v1619, 0.0
  %v1626 = vsel %vm94, %v1607, 0.0
  %v1627 = vsel %vm93, %v1620, 0.0
  %v1628 = vsel %vm94, %v1608, 0.0
  %1629 = vrot.lane.b32.xlu0 %v1558, 16
  %v1630 = vpop.permute.xlu0 %1629
  %1631 = vrot.lane.b32.xlu0 %v1560, 16
  %v1632 = vpop.permute.xlu0 %1631
  %1633 = vrot.lane.b32.xlu0 %v1562, 16
  %v1634 = vpop.permute.xlu0 %1633
  %1635 = vrot.lane.b32.xlu0 %v1564, 16
  %v1636 = vpop.permute.xlu0 %1635
  %1641 = vrot.lane.b32.xlu0 %v1557, 16
  %v1642 = vpop.permute.xlu0 %1641
  %1643 = vrot.lane.b32.xlu0 %v1559, 16
  %v1644 = vpop.permute.xlu0 %1643
  %1645 = vrot.lane.b32.xlu0 %v1561, 16
  %v1646 = vpop.permute.xlu0 %1645
  %1647 = vrot.lane.b32.xlu0 %v1563, 16
  %v1648 = vpop.permute.xlu0 %1647
  %v1649 = vsel %vm102, %v1642, %v1630
  %v1650 = vsel %vm102, %v1644, %v1632
  %v1651 = vsel %vm102, %v1646, %v1634
  %v1652 = vsel %vm102, %v1648, %v1636
  %v1661 = vsel %vm102, %v1630, %v1642
  %v1662 = vsel %vm102, %v1632, %v1644
  %v1663 = vsel %vm102, %v1634, %v1646
  %v1664 = vsel %vm102, %v1636, %v1648
  %v1665 = vsel %vm116, %v1661, 0.0
  %v1666 = vsel %vm117, %v1649, 0.0
  %v1667 = vsel %vm116, %v1662, 0.0
  %v1668 = vsel %vm117, %v1650, 0.0
  %v1669 = vsel %vm116, %v1663, 0.0
  %v1670 = vsel %vm117, %v1651, 0.0
  %v1671 = vsel %vm116, %v1664, 0.0
  %v1672 = vsel %vm117, %v1652, 0.0
  %1673 = vrot.lane.b32.xlu0 %v1558, 15
  %v1674 = vpop.permute.xlu0 %1673
  %1675 = vrot.lane.b32.xlu0 %v1560, 15
  %v1676 = vpop.permute.xlu0 %1675
  %1677 = vrot.lane.b32.xlu0 %v1562, 15
  %v1678 = vpop.permute.xlu0 %1677
  %1679 = vrot.lane.b32.xlu0 %v1564, 15
  %v1680 = vpop.permute.xlu0 %1679
  %1685 = vrot.lane.b32.xlu0 %v1557, 15
  %v1686 = vpop.permute.xlu0 %1685
  %1687 = vrot.lane.b32.xlu0 %v1559, 15
  %v1688 = vpop.permute.xlu0 %1687
  %1689 = vrot.lane.b32.xlu0 %v1561, 15
  %v1690 = vpop.permute.xlu0 %1689
  %1691 = vrot.lane.b32.xlu0 %v1563, 15
  %v1692 = vpop.permute.xlu0 %1691
  %v1693 = vsel %vm125, %v1686, %v1674
  %v1694 = vsel %vm125, %v1688, %v1676
  %v1695 = vsel %vm125, %v1690, %v1678
  %v1696 = vsel %vm125, %v1692, %v1680
  %v1705 = vsel %vm125, %v1674, %v1686
  %v1706 = vsel %vm125, %v1676, %v1688
  %v1707 = vsel %vm125, %v1678, %v1690
  %v1708 = vsel %vm125, %v1680, %v1692
  %v1709 = vsel %vm141, %v1705, 0.0
  %v1710 = vsel %vm142, %v1693, 0.0
  %v1711 = vsel %vm141, %v1706, 0.0
  %v1712 = vsel %vm142, %v1694, 0.0
  %v1713 = vsel %vm141, %v1707, 0.0
  %v1714 = vsel %vm142, %v1695, 0.0
  %v1715 = vsel %vm141, %v1708, 0.0
  %v1716 = vsel %vm142, %v1696, 0.0
  %1717 = vrot.lane.b32.xlu0 %v1558, 1
  %v1718 = vpop.permute.xlu0 %1717
  %1719 = vrot.lane.b32.xlu0 %v1560, 1
  %v1720 = vpop.permute.xlu0 %1719
  %1721 = vrot.lane.b32.xlu0 %v1562, 1
  %v1722 = vpop.permute.xlu0 %1721
  %1723 = vrot.lane.b32.xlu0 %v1564, 1
  %v1724 = vpop.permute.xlu0 %1723
  %1729 = vrot.lane.b32.xlu0 %v1557, 1
  %v1730 = vpop.permute.xlu0 %1729
  %1731 = vrot.lane.b32.xlu0 %v1559, 1
  %v1732 = vpop.permute.xlu0 %1731
  %1733 = vrot.lane.b32.xlu0 %v1561, 1
  %v1734 = vpop.permute.xlu0 %1733
  %1735 = vrot.lane.b32.xlu0 %v1563, 1
  %v1736 = vpop.permute.xlu0 %1735
  %v1737 = vsel %vm150, %v1730, %v1718
  %v1738 = vsel %vm150, %v1732, %v1720
  %v1739 = vsel %vm150, %v1734, %v1722
  %v1740 = vsel %vm150, %v1736, %v1724
  %v1749 = vsel %vm150, %v1718, %v1730
  %v1750 = vsel %vm150, %v1720, %v1732
  %v1751 = vsel %vm150, %v1722, %v1734
  %v1752 = vsel %vm150, %v1724, %v1736
  %v1753 = vsel %vm164, %v1749, 0.0
  %v1754 = vsel %vm165, %v1737, 0.0
  %v1755 = vsel %vm164, %v1750, 0.0
  %v1756 = vsel %vm165, %v1738, 0.0
  %v1757 = vsel %vm164, %v1751, 0.0
  %v1758 = vsel %vm165, %v1739, 0.0
  %v1759 = vsel %vm164, %v1752, 0.0
  %v1760 = vsel %vm165, %v1740, 0.0
  %1761 = vrot.lane.b32.xlu0 %v1557, 127
  %v1762 = vpop.permute.xlu0 %1761
  %1763 = vrot.lane.b32.xlu0 %v1558, 127
  %v1764 = vpop.permute.xlu0 %1763
  %1765 = vrot.lane.b32.xlu0 %v1559, 127
  %v1766 = vpop.permute.xlu0 %1765
  %1767 = vrot.lane.b32.xlu0 %v1560, 127
  %v1768 = vpop.permute.xlu0 %1767
  %1769 = vrot.lane.b32.xlu0 %v1561, 127
  %v1770 = vpop.permute.xlu0 %1769
  %1771 = vrot.lane.b32.xlu0 %v1562, 127
  %v1772 = vpop.permute.xlu0 %1771
  %1773 = vrot.lane.b32.xlu0 %v1563, 127
  %v1774 = vpop.permute.xlu0 %1773
  %1775 = vrot.lane.b32.xlu0 %v1564, 127
  %v1776 = vpop.permute.xlu0 %1775
  %v1777 = vsel %vm172, %v1762, %v1764
  %v1778 = vsel %vm172, %v1766, %v1768
  %v1779 = vsel %vm172, %v1770, %v1772
  %v1780 = vsel %vm172, %v1774, %v1776
  %v1793 = vsel %vm172, %v1764, %v1762
  %v1794 = vsel %vm172, %v1768, %v1766
  %v1795 = vsel %vm172, %v1772, %v1770
  %v1796 = vsel %vm172, %v1776, %v1774
  %v1797 = vsel %vm187, %v1777, 0.0
  %v1798 = vsel %vm188, %v1793, 0.0
  %v1799 = vsel %vm187, %v1778, 0.0
  %v1800 = vsel %vm188, %v1794, 0.0
  %v1801 = vsel %vm187, %v1779, 0.0
  %v1802 = vsel %vm188, %v1795, 0.0
  %v1803 = vsel %vm187, %v1780, 0.0
  %v1804 = vsel %vm188, %v1796, 0.0
  %1805 = vrot.lane.b32.xlu0 %v1557, 113
  %v1806 = vpop.permute.xlu0 %1805
  %1807 = vrot.lane.b32.xlu0 %v1558, 113
  %v1808 = vpop.permute.xlu0 %1807
  %1809 = vrot.lane.b32.xlu0 %v1559, 113
  %v1810 = vpop.permute.xlu0 %1809
  %1811 = vrot.lane.b32.xlu0 %v1560, 113
  %v1812 = vpop.permute.xlu0 %1811
  %1813 = vrot.lane.b32.xlu0 %v1561, 113
  %v1814 = vpop.permute.xlu0 %1813
  %1815 = vrot.lane.b32.xlu0 %v1562, 113
  %v1816 = vpop.permute.xlu0 %1815
  %1817 = vrot.lane.b32.xlu0 %v1563, 113
  %v1818 = vpop.permute.xlu0 %1817
  %1819 = vrot.lane.b32.xlu0 %v1564, 113
  %v1820 = vpop.permute.xlu0 %1819
  %v1821 = vsel %vm195, %v1806, %v1808
  %v1822 = vsel %vm195, %v1810, %v1812
  %v1823 = vsel %vm195, %v1814, %v1816
  %v1824 = vsel %vm195, %v1818, %v1820
  %v1837 = vsel %vm195, %v1808, %v1806
  %v1838 = vsel %vm195, %v1812, %v1810
  %v1839 = vsel %vm195, %v1816, %v1814
  %v1840 = vsel %vm195, %v1820, %v1818
  %v1841 = vsel %vm212, %v1821, 0.0
  %v1842 = vsel %vm213, %v1837, 0.0
  %v1843 = vsel %vm212, %v1822, 0.0
  %v1844 = vsel %vm213, %v1838, 0.0
  %v1845 = vsel %vm212, %v1823, 0.0
  %v1846 = vsel %vm213, %v1839, 0.0
  %v1847 = vsel %vm212, %v1824, 0.0
  %v1848 = vsel %vm213, %v1840, 0.0
  %1849 = vrot.lane.b32.xlu0 %v1557, 112
  %v1850 = vpop.permute.xlu0 %1849
  %1851 = vrot.lane.b32.xlu0 %v1558, 112
  %v1852 = vpop.permute.xlu0 %1851
  %1853 = vrot.lane.b32.xlu0 %v1559, 112
  %v1854 = vpop.permute.xlu0 %1853
  %1855 = vrot.lane.b32.xlu0 %v1560, 112
  %v1856 = vpop.permute.xlu0 %1855
  %1857 = vrot.lane.b32.xlu0 %v1561, 112
  %v1858 = vpop.permute.xlu0 %1857
  %1859 = vrot.lane.b32.xlu0 %v1562, 112
  %v1860 = vpop.permute.xlu0 %1859
  %1861 = vrot.lane.b32.xlu0 %v1563, 112
  %v1862 = vpop.permute.xlu0 %1861
  %1863 = vrot.lane.b32.xlu0 %v1564, 112
  %v1864 = vpop.permute.xlu0 %1863
  %v1865 = vsel %vm220, %v1850, %v1852
  %v1866 = vsel %vm220, %v1854, %v1856
  %v1867 = vsel %vm220, %v1858, %v1860
  %v1868 = vsel %vm220, %v1862, %v1864
  %v1881 = vsel %vm220, %v1852, %v1850
  %v1882 = vsel %vm220, %v1856, %v1854
  %v1883 = vsel %vm220, %v1860, %v1858
  %v1884 = vsel %vm220, %v1864, %v1862
  %v1885 = vsel %vm235, %v1865, 0.0
  %v1886 = vsel %vm236, %v1881, 0.0
  %v1887 = vsel %vm235, %v1866, 0.0
  %v1888 = vsel %vm236, %v1882, 0.0
  %v1889 = vsel %vm235, %v1867, 0.0
  %v1890 = vsel %vm236, %v1883, 0.0
  %v1891 = vsel %vm235, %v1868, 0.0
  %v1892 = vsel %vm236, %v1884, 0.0
  %1893 = vrot.lane.b32.xlu0 %v1557, 111
  %v1894 = vpop.permute.xlu0 %1893
  %1895 = vrot.lane.b32.xlu0 %v1558, 111
  %v1896 = vpop.permute.xlu0 %1895
  %1897 = vrot.lane.b32.xlu0 %v1559, 111
  %v1898 = vpop.permute.xlu0 %1897
  %1899 = vrot.lane.b32.xlu0 %v1560, 111
  %v1900 = vpop.permute.xlu0 %1899
  %1901 = vrot.lane.b32.xlu0 %v1561, 111
  %v1902 = vpop.permute.xlu0 %1901
  %1903 = vrot.lane.b32.xlu0 %v1562, 111
  %v1904 = vpop.permute.xlu0 %1903
  %1905 = vrot.lane.b32.xlu0 %v1563, 111
  %v1906 = vpop.permute.xlu0 %1905
  %1907 = vrot.lane.b32.xlu0 %v1564, 111
  %v1908 = vpop.permute.xlu0 %1907
  %v1909 = vsel %vm243, %v1894, %v1896
  %v1910 = vsel %vm243, %v1898, %v1900
  %v1911 = vsel %vm243, %v1902, %v1904
  %v1912 = vsel %vm243, %v1906, %v1908
  %v1925 = vsel %vm243, %v1896, %v1894
  %v1926 = vsel %vm243, %v1900, %v1898
  %v1927 = vsel %vm243, %v1904, %v1902
  %v1928 = vsel %vm243, %v1908, %v1906
  %v1929 = vsel %vm259, %v1909, 0.0
  %v1930 = vsel %vm260, %v1925, 0.0
  %v1931 = vsel %vm259, %v1910, 0.0
  %v1932 = vsel %vm260, %v1926, 0.0
  %v1933 = vsel %vm259, %v1911, 0.0
  %v1934 = vsel %vm260, %v1927, 0.0
  %v1935 = vsel %vm259, %v1912, 0.0
  %v1936 = vsel %vm260, %v1928, 0.0
  %v1937 = vpack.c.bf16 %v1623, %v1621
  %v1938 = vpack.c.bf16 %v1624, %v1622
  %v1939 = vpack.c.bf16 %v1627, %v1625
  %v1940 = vpack.c.bf16 %v1628, %v1626
  %v1941 = vpack.c.bf16 %v1667, %v1665
  %v1942 = vpack.c.bf16 %v1668, %v1666
  %v1943 = vpack.c.bf16 %v1671, %v1669
  %v1944 = vpack.c.bf16 %v1672, %v1670
  %v1945 = vpack.c.bf16 %v1711, %v1709
  %v1946 = vpack.c.bf16 %v1712, %v1710
  %v1947 = vpack.c.bf16 %v1715, %v1713
  %v1948 = vpack.c.bf16 %v1716, %v1714
  %v1949 = vpack.c.bf16 %v1755, %v1753
  %v1950 = vpack.c.bf16 %v1756, %v1754
  %v1951 = vpack.c.bf16 %v1759, %v1757
  %v1952 = vpack.c.bf16 %v1760, %v1758
  %v1953 = vpack.c.bf16 %v1559, %v1557
  %v1954 = vpack.c.bf16 %v1560, %v1558
  %v1955 = vpack.c.bf16 %v1563, %v1561
  %v1956 = vpack.c.bf16 %v1564, %v1562
  %v1957 = vpack.c.bf16 %v1799, %v1797
  %v1958 = vpack.c.bf16 %v1800, %v1798
  %v1959 = vpack.c.bf16 %v1803, %v1801
  %v1960 = vpack.c.bf16 %v1804, %v1802
  %v1961 = vpack.c.bf16 %v1843, %v1841
  %v1962 = vpack.c.bf16 %v1844, %v1842
  %v1963 = vpack.c.bf16 %v1847, %v1845
  %v1964 = vpack.c.bf16 %v1848, %v1846
  %v1965 = vpack.c.bf16 %v1887, %v1885
  %v1966 = vpack.c.bf16 %v1888, %v1886
  %v1967 = vpack.c.bf16 %v1891, %v1889
  %v1968 = vpack.c.bf16 %v1892, %v1890
  %v1969 = vpack.c.bf16 %v1931, %v1929
  %v1970 = vpack.c.bf16 %v1932, %v1930
  %v1971 = vpack.c.bf16 %v1935, %v1933
  %v1972 = vpack.c.bf16 %v1936, %v1934
  %1974 = vset.pattern.permute.xlu0 0
  %1975 = vperm.xlu0 %1974, %v1573
  %v1976 = vpop.permute.xlu0 %1975
  %1979 = vset.pattern.permute.xlu0 0
  %1980 = vperm.xlu0 %1979, %v1574
  %v1981 = vpop.permute.xlu0 %1980
  %1984 = vset.pattern.permute.xlu0 0
  %1985 = vperm.xlu0 %1984, %v1575
  %v1986 = vpop.permute.xlu0 %1985
  %1989 = vset.pattern.permute.xlu0 0
  %1990 = vperm.xlu0 %1989, %v1576
  %v1991 = vpop.permute.xlu0 %1990
  %v2001 = vunpack.c.l.b16 %v1565
  %v2002 = vunpack.c.h.b16 %v1565
  %v2003 = vunpack.c.l.b16 %v1566
  %v2004 = vunpack.c.l.b16 %v1567
  %v2005 = vunpack.c.h.b16 %v1567
  %v2006 = vunpack.c.l.b16 %v1568
  %v2007 = vunpack.c.l.b16 %v1569
  %v2008 = vunpack.c.h.b16 %v1569
  %v2009 = vunpack.c.l.b16 %v1570
  %v2010 = vunpack.c.l.b16 %v1571
  %v2011 = vunpack.c.h.b16 %v1571
  %v2012 = vunpack.c.l.b16 %v1572
  %v2013 = vpack.c.b16 %v2004, %v2001
  %v2014 = vpack.c.b16 %v2005, %v2002
  %v2015 = vpack.c.b16 %v2006, %v2003
  %v2016 = vpack.c.b16 %v2010, %v2007
  %v2017 = vpack.c.b16 %v2011, %v2008
  %v2018 = vpack.c.b16 %v2012, %v2009
  %v2024 = vsel %vm866, %v2015, 0
  %v2027 = vsel %vm866, %v2018, 0
  %2029 = vmatprep.subr.bf16.mxu0 %v1938
  %2030 = vmatpush1.bf16.msra.mxu0 %v1937
  %2031 = vmatprep.subr.bf16.mxu0 %v1940
  %2032 = vmatpush1.bf16.msra.mxu0 %v1939
  %2033 = vmatprep.subr.bf16.mxu0 %v1942
  %2034 = vmatpush1.bf16.msra.mxu0 %v1941
  %2035 = vmatprep.subr.bf16.mxu0 %v1944
  %2036 = vmatpush1.bf16.msra.mxu0 %v1943
  %2037 = vmatprep.subr.bf16.mxu0 %v1946
  %2038 = vmatpush1.bf16.msra.mxu0 %v1945
  %2039 = vmatprep.subr.bf16.mxu0 %v1948
  %2040 = vmatpush1.bf16.msra.mxu0 %v1947
  %2041 = vmatprep.subr.bf16.mxu0 %v1950
  %2042 = vmatpush1.bf16.msra.mxu0 %v1949
  %2043 = vmatprep.subr.bf16.mxu0 %v1952
  %2044 = vmatpush1.bf16.msra.mxu0 %v1951
  %2045 = vmatprep.subr.bf16.mxu0 %v1954
  %2046 = vmatpush1.bf16.msra.mxu0 %v1953
  %2047 = vmatprep.subr.bf16.mxu0 %v1956
  %2048 = vmatpush1.bf16.msra.mxu0 %v1955
  %2049 = vmatprep.subr.bf16.mxu0 %v1958
  %2050 = vmatpush1.bf16.msra.mxu0 %v1957
  %2051 = vmatprep.subr.bf16.mxu0 %v1960
  %2052 = vmatpush1.bf16.msra.mxu0 %v1959
  %2053 = vmatprep.subr.bf16.mxu0 %v1962
  %2054 = vmatpush1.bf16.msra.mxu0 %v1961
  %2055 = vmatprep.subr.bf16.mxu0 %v1964
  %2056 = vmatpush1.bf16.msra.mxu0 %v1963
  %2057 = vmatprep.subr.bf16.mxu0 %v1966
  %2058 = vmatpush1.bf16.msra.mxu0 %v1965
  %2059 = vmatprep.subr.bf16.mxu0 %v1968
  %2060 = vmatpush1.bf16.msra.mxu0 %v1967
  %2061 = vmatprep.mubr.bf16.mxu0 %v2014
  %2062 = vmatmul.mubr.bf16.gmra.mrb[0].mxu0 %v2013
  %v2063 = vpop.f32.mrb[0].mxu0
  %v2064 = vadd.f32 %v1976, %v2063
  %v2065 = vpop.f32.mrb[0].mxu0
  %v2066 = vadd.f32 %v1976, %v2065
  %v2067 = vpop.f32.mrb[0].mxu0
  %v2068 = vadd.f32 %v1981, %v2067
  %v2069 = vpop.f32.mrb[0].mxu0
  %v2070 = vadd.f32 %v1981, %v2069
  %2071 = vmatprep.mubr.bf16.mxu0 %v2017
  %2072 = vmatmul.mubr.bf16.gmra.mrb[0].mxu0 %v2016
  %v2073 = vpop.f32.mrb[0].mxu0
  %v2074 = vadd.f32 %v1986, %v2073
  %v2075 = vpop.f32.mrb[0].mxu0
  %v2076 = vadd.f32 %v1986, %v2075
  %v2077 = vpop.f32.mrb[0].mxu0
  %v2078 = vadd.f32 %v1991, %v2077
  %v2079 = vpop.f32.mrb[0].mxu0
  %v2080 = vadd.f32 %v1991, %v2079
  %2081 = vdwg.mxu0
  %2082 = vmatprep.subr.bf16.mxu0 %v1970
  %2083 = vmatpush1.bf16.msra.mxu0 %v1969
  %2084 = vmatprep.subr.bf16.mxu0 %v1972
  %2085 = vmatpush1.bf16.msra.mxu0 %v1971
  %2086 = vmatprep.subr.bf16.mxu0 0
  %2087 = vmatpush1.bf16.msra.mxu0 0
  %2088 = vmatprep.subr.bf16.mxu0 0
  %2089 = vmatpush1.bf16.msra.mxu0 0
  %2090 = vmatprep.subr.bf16.mxu0 0
  %2091 = vmatpush1.bf16.msra.mxu0 0
  %2092 = vmatprep.subr.bf16.mxu0 0
  %2093 = vmatpush1.bf16.msra.mxu0 0
  %2094 = vmatprep.subr.bf16.mxu0 0
  %2095 = vmatpush1.bf16.msra.mxu0 0
  %2096 = vmatprep.subr.bf16.mxu0 0
  %2097 = vmatpush1.bf16.msra.mxu0 0
  %2098 = vmatprep.subr.bf16.mxu0 0
  %2099 = vmatpush1.bf16.msra.mxu0 0
  %2100 = vmatprep.subr.bf16.mxu0 0
  %2101 = vmatpush1.bf16.msra.mxu0 0
  %2102 = vmatprep.subr.bf16.mxu0 0
  %2103 = vmatpush1.bf16.msra.mxu0 0
  %2104 = vmatprep.subr.bf16.mxu0 0
  %2105 = vmatpush1.bf16.msra.mxu0 0
  %2106 = vmatprep.subr.bf16.mxu0 0
  %2107 = vmatpush1.bf16.msra.mxu0 0
  %2108 = vmatprep.subr.bf16.mxu0 0
  %2109 = vmatpush1.bf16.msra.mxu0 0
  %2110 = vmatprep.subr.bf16.mxu0 0
  %2111 = vmatpush1.bf16.msra.mxu0 0
  %2112 = vmatprep.subr.bf16.mxu0 0
  %2113 = vmatpush1.bf16.msra.mxu0 0
  %2114 = vmatprep.mubr.bf16.mxu0 0
  %2115 = vmatmul.mubr.bf16.gmra.mrb[0].mxu0 %v2024
  %v2116 = vpop.f32.mrb[0].mxu0
  %v2117 = vadd.f32 %v2064, %v2116
  %v2118 = vpop.f32.mrb[0].mxu0
  %v2119 = vadd.f32 %v2066, %v2118
  %v2120 = vpop.f32.mrb[0].mxu0
  %v2121 = vadd.f32 %v2068, %v2120
  %v2122 = vpop.f32.mrb[0].mxu0
  %v2123 = vadd.f32 %v2070, %v2122
  %2124 = vmatprep.mubr.bf16.mxu0 0
  %2125 = vmatmul.mubr.bf16.gmra.mrb[0].mxu0 %v2027
  %v2126 = vpop.f32.mrb[0].mxu0
  %v2127 = vadd.f32 %v2074, %v2126
  %v2128 = vpop.f32.mrb[0].mxu0
  %v2129 = vadd.f32 %v2076, %v2128
  %v2130 = vpop.f32.mrb[0].mxu0
  %v2131 = vadd.f32 %v2078, %v2130
  %v2132 = vpop.f32.mrb[0].mxu0
  %v2133 = vadd.f32 %v2080, %v2132
  %2134 = vdwg.mxu0
  %v2135 = vmax.f32 %v2117, 0.0
  %v2136 = vmax.f32 %v2119, 0.0
  %v2137 = vmax.f32 %v2121, 0.0
  %v2138 = vmax.f32 %v2123, 0.0
  %v2139 = vmax.f32 %v2127, 0.0
  %v2140 = vmax.f32 %v2129, 0.0
  %v2141 = vmax.f32 %v2131, 0.0
  %v2142 = vmax.f32 %v2133, 0.0
  %v2143 = vld [vmem:[%s10] sm:$0xff]
  %v2144 = vld [vmem:[%s10 + $0x8] sm:$0xff]
  %v2145 = vld [vmem:[%s10 + $0x10] sm:$0xf]
  %v2146 = vld [vmem:[%s10 + $0x14] sm:$0xff]
  %v2147 = vld [vmem:[%s10 + $0x1c] sm:$0xff]
  %v2148 = vld [vmem:[%s10 + $0x24] sm:$0xf]
  %v2149 = vld [vmem:[%s10 + $0x28] sm:$0xff]
  %v2150 = vld [vmem:[%s10 + $0x30] sm:$0xff]
  %v2151 = vld [vmem:[%s10 + $0x38] sm:$0xf]
  %v2152 = vld [vmem:[%s10 + $0x3c] sm:$0xff]
  %v2153 = vld [vmem:[%s10 + $0x44] sm:$0xff]
  %v2154 = vld [vmem:[%s10 + $0x4c] sm:$0xf]
  %v2155 = vld [vmem:[%s11] sm:$0xff]
  %v2156 = vld [vmem:[%s11 + $0x8] sm:$0xff]
  %v2157 = vld [vmem:[%s11 + $0x10] sm:$0xff]
  %v2158 = vld [vmem:[%s11 + $0x18] sm:$0xff]
  %2163 = vrot.lane.b32.xlu0 %v2136, 17
  %v2164 = vpop.permute.xlu0 %2163
  %2165 = vrot.lane.b32.xlu0 %v2138, 17
  %v2166 = vpop.permute.xlu0 %2165
  %2167 = vrot.lane.b32.xlu0 %v2140, 17
  %v2168 = vpop.permute.xlu0 %2167
  %2169 = vrot.lane.b32.xlu0 %v2142, 17
  %v2170 = vpop.permute.xlu0 %2169
  %2179 = vrot.lane.b32.xlu0 %v2135, 17
  %v2180 = vpop.permute.xlu0 %2179
  %2181 = vrot.lane.b32.xlu0 %v2137, 17
  %v2182 = vpop.permute.xlu0 %2181
  %2183 = vrot.lane.b32.xlu0 %v2139, 17
  %v2184 = vpop.permute.xlu0 %2183
  %2185 = vrot.lane.b32.xlu0 %v2141, 17
  %v2186 = vpop.permute.xlu0 %2185
  %v2187 = vsel %vm76, %v2180, %v2164
  %v2188 = vsel %vm76, %v2182, %v2166
  %v2189 = vsel %vm76, %v2184, %v2168
  %v2190 = vsel %vm76, %v2186, %v2170
  %v2199 = vsel %vm76, %v2164, %v2180
  %v2200 = vsel %vm76, %v2166, %v2182
  %v2201 = vsel %vm76, %v2168, %v2184
  %v2202 = vsel %vm76, %v2170, %v2186
  %v2203 = vsel %vm93, %v2199, 0.0
  %v2204 = vsel %vm94, %v2187, 0.0
  %v2205 = vsel %vm93, %v2200, 0.0
  %v2206 = vsel %vm94, %v2188, 0.0
  %v2207 = vsel %vm93, %v2201, 0.0
  %v2208 = vsel %vm94, %v2189, 0.0
  %v2209 = vsel %vm93, %v2202, 0.0
  %v2210 = vsel %vm94, %v2190, 0.0
  %2211 = vrot.lane.b32.xlu0 %v2136, 16
  %v2212 = vpop.permute.xlu0 %2211
  %2213 = vrot.lane.b32.xlu0 %v2138, 16
  %v2214 = vpop.permute.xlu0 %2213
  %2215 = vrot.lane.b32.xlu0 %v2140, 16
  %v2216 = vpop.permute.xlu0 %2215
  %2217 = vrot.lane.b32.xlu0 %v2142, 16
  %v2218 = vpop.permute.xlu0 %2217
  %2223 = vrot.lane.b32.xlu0 %v2135, 16
  %v2224 = vpop.permute.xlu0 %2223
  %2225 = vrot.lane.b32.xlu0 %v2137, 16
  %v2226 = vpop.permute.xlu0 %2225
  %2227 = vrot.lane.b32.xlu0 %v2139, 16
  %v2228 = vpop.permute.xlu0 %2227
  %2229 = vrot.lane.b32.xlu0 %v2141, 16
  %v2230 = vpop.permute.xlu0 %2229
  %v2231 = vsel %vm102, %v2224, %v2212
  %v2232 = vsel %vm102, %v2226, %v2214
  %v2233 = vsel %vm102, %v2228, %v2216
  %v2234 = vsel %vm102, %v2230, %v2218
  %v2243 = vsel %vm102, %v2212, %v2224
  %v2244 = vsel %vm102, %v2214, %v2226
  %v2245 = vsel %vm102, %v2216, %v2228
  %v2246 = vsel %vm102, %v2218, %v2230
  %v2247 = vsel %vm116, %v2243, 0.0
  %v2248 = vsel %vm117, %v2231, 0.0
  %v2249 = vsel %vm116, %v2244, 0.0
  %v2250 = vsel %vm117, %v2232, 0.0
  %v2251 = vsel %vm116, %v2245, 0.0
  %v2252 = vsel %vm117, %v2233, 0.0
  %v2253 = vsel %vm116, %v2246, 0.0
  %v2254 = vsel %vm117, %v2234, 0.0
  %2255 = vrot.lane.b32.xlu0 %v2136, 15
  %v2256 = vpop.permute.xlu0 %2255
  %2257 = vrot.lane.b32.xlu0 %v2138, 15
  %v2258 = vpop.permute.xlu0 %2257
  %2259 = vrot.lane.b32.xlu0 %v2140, 15
  %v2260 = vpop.permute.xlu0 %2259
  %2261 = vrot.lane.b32.xlu0 %v2142, 15
  %v2262 = vpop.permute.xlu0 %2261
  %2267 = vrot.lane.b32.xlu0 %v2135, 15
  %v2268 = vpop.permute.xlu0 %2267
  %2269 = vrot.lane.b32.xlu0 %v2137, 15
  %v2270 = vpop.permute.xlu0 %2269
  %2271 = vrot.lane.b32.xlu0 %v2139, 15
  %v2272 = vpop.permute.xlu0 %2271
  %2273 = vrot.lane.b32.xlu0 %v2141, 15
  %v2274 = vpop.permute.xlu0 %2273
  %v2275 = vsel %vm125, %v2268, %v2256
  %v2276 = vsel %vm125, %v2270, %v2258
  %v2277 = vsel %vm125, %v2272, %v2260
  %v2278 = vsel %vm125, %v2274, %v2262
  %v2287 = vsel %vm125, %v2256, %v2268
  %v2288 = vsel %vm125, %v2258, %v2270
  %v2289 = vsel %vm125, %v2260, %v2272
  %v2290 = vsel %vm125, %v2262, %v2274
  %v2291 = vsel %vm141, %v2287, 0.0
  %v2292 = vsel %vm142, %v2275, 0.0
  %v2293 = vsel %vm141, %v2288, 0.0
  %v2294 = vsel %vm142, %v2276, 0.0
  %v2295 = vsel %vm141, %v2289, 0.0
  %v2296 = vsel %vm142, %v2277, 0.0
  %v2297 = vsel %vm141, %v2290, 0.0
  %v2298 = vsel %vm142, %v2278, 0.0
  %2299 = vrot.lane.b32.xlu0 %v2136, 1
  %v2300 = vpop.permute.xlu0 %2299
  %2301 = vrot.lane.b32.xlu0 %v2138, 1
  %v2302 = vpop.permute.xlu0 %2301
  %2303 = vrot.lane.b32.xlu0 %v2140, 1
  %v2304 = vpop.permute.xlu0 %2303
  %2305 = vrot.lane.b32.xlu0 %v2142, 1
  %v2306 = vpop.permute.xlu0 %2305
  %2311 = vrot.lane.b32.xlu0 %v2135, 1
  %v2312 = vpop.permute.xlu0 %2311
  %2313 = vrot.lane.b32.xlu0 %v2137, 1
  %v2314 = vpop.permute.xlu0 %2313
  %2315 = vrot.lane.b32.xlu0 %v2139, 1
  %v2316 = vpop.permute.xlu0 %2315
  %2317 = vrot.lane.b32.xlu0 %v2141, 1
  %v2318 = vpop.permute.xlu0 %2317
  %v2319 = vsel %vm150, %v2312, %v2300
  %v2320 = vsel %vm150, %v2314, %v2302
  %v2321 = vsel %vm150, %v2316, %v2304
  %v2322 = vsel %vm150, %v2318, %v2306
  %v2331 = vsel %vm150, %v2300, %v2312
  %v2332 = vsel %vm150, %v2302, %v2314
  %v2333 = vsel %vm150, %v2304, %v2316
  %v2334 = vsel %vm150, %v2306, %v2318
  %v2335 = vsel %vm164, %v2331, 0.0
  %v2336 = vsel %vm165, %v2319, 0.0
  %v2337 = vsel %vm164, %v2332, 0.0
  %v2338 = vsel %vm165, %v2320, 0.0
  %v2339 = vsel %vm164, %v2333, 0.0
  %v2340 = vsel %vm165, %v2321, 0.0
  %v2341 = vsel %vm164, %v2334, 0.0
  %v2342 = vsel %vm165, %v2322, 0.0
  %2343 = vrot.lane.b32.xlu0 %v2135, 127
  %v2344 = vpop.permute.xlu0 %2343
  %2345 = vrot.lane.b32.xlu0 %v2136, 127
  %v2346 = vpop.permute.xlu0 %2345
  %2347 = vrot.lane.b32.xlu0 %v2137, 127
  %v2348 = vpop.permute.xlu0 %2347
  %2349 = vrot.lane.b32.xlu0 %v2138, 127
  %v2350 = vpop.permute.xlu0 %2349
  %2351 = vrot.lane.b32.xlu0 %v2139, 127
  %v2352 = vpop.permute.xlu0 %2351
  %2353 = vrot.lane.b32.xlu0 %v2140, 127
  %v2354 = vpop.permute.xlu0 %2353
  %2355 = vrot.lane.b32.xlu0 %v2141, 127
  %v2356 = vpop.permute.xlu0 %2355
  %2357 = vrot.lane.b32.xlu0 %v2142, 127
  %v2358 = vpop.permute.xlu0 %2357
  %v2359 = vsel %vm172, %v2344, %v2346
  %v2360 = vsel %vm172, %v2348, %v2350
  %v2361 = vsel %vm172, %v2352, %v2354
  %v2362 = vsel %vm172, %v2356, %v2358
  %v2375 = vsel %vm172, %v2346, %v2344
  %v2376 = vsel %vm172, %v2350, %v2348
  %v2377 = vsel %vm172, %v2354, %v2352
  %v2378 = vsel %vm172, %v2358, %v2356
  %v2379 = vsel %vm187, %v2359, 0.0
  %v2380 = vsel %vm188, %v2375, 0.0
  %v2381 = vsel %vm187, %v2360, 0.0
  %v2382 = vsel %vm188, %v2376, 0.0
  %v2383 = vsel %vm187, %v2361, 0.0
  %v2384 = vsel %vm188, %v2377, 0.0
  %v2385 = vsel %vm187, %v2362, 0.0
  %v2386 = vsel %vm188, %v2378, 0.0
  %2387 = vrot.lane.b32.xlu0 %v2135, 113
  %v2388 = vpop.permute.xlu0 %2387
  %2389 = vrot.lane.b32.xlu0 %v2136, 113
  %v2390 = vpop.permute.xlu0 %2389
  %2391 = vrot.lane.b32.xlu0 %v2137, 113
  %v2392 = vpop.permute.xlu0 %2391
  %2393 = vrot.lane.b32.xlu0 %v2138, 113
  %v2394 = vpop.permute.xlu0 %2393
  %2395 = vrot.lane.b32.xlu0 %v2139, 113
  %v2396 = vpop.permute.xlu0 %2395
  %2397 = vrot.lane.b32.xlu0 %v2140, 113
  %v2398 = vpop.permute.xlu0 %2397
  %2399 = vrot.lane.b32.xlu0 %v2141, 113
  %v2400 = vpop.permute.xlu0 %2399
  %2401 = vrot.lane.b32.xlu0 %v2142, 113
  %v2402 = vpop.permute.xlu0 %2401
  %v2403 = vsel %vm195, %v2388, %v2390
  %v2404 = vsel %vm195, %v2392, %v2394
  %v2405 = vsel %vm195, %v2396, %v2398
  %v2406 = vsel %vm195, %v2400, %v2402
  %v2419 = vsel %vm195, %v2390, %v2388
  %v2420 = vsel %vm195, %v2394, %v2392
  %v2421 = vsel %vm195, %v2398, %v2396
  %v2422 = vsel %vm195, %v2402, %v2400
  %v2423 = vsel %vm212, %v2403, 0.0
  %v2424 = vsel %vm213, %v2419, 0.0
  %v2425 = vsel %vm212, %v2404, 0.0
  %v2426 = vsel %vm213, %v2420, 0.0
  %v2427 = vsel %vm212, %v2405, 0.0
  %v2428 = vsel %vm213, %v2421, 0.0
  %v2429 = vsel %vm212, %v2406, 0.0
  %v2430 = vsel %vm213, %v2422, 0.0
  %2431 = vrot.lane.b32.xlu0 %v2135, 112
  %v2432 = vpop.permute.xlu0 %2431
  %2433 = vrot.lane.b32.xlu0 %v2136, 112
  %v2434 = vpop.permute.xlu0 %2433
  %2435 = vrot.lane.b32.xlu0 %v2137, 112
  %v2436 = vpop.permute.xlu0 %2435
  %2437 = vrot.lane.b32.xlu0 %v2138, 112
  %v2438 = vpop.permute.xlu0 %2437
  %2439 = vrot.lane.b32.xlu0 %v2139, 112
  %v2440 = vpop.permute.xlu0 %2439
  %2441 = vrot.lane.b32.xlu0 %v2140, 112
  %v2442 = vpop.permute.xlu0 %2441
  %2443 = vrot.lane.b32.xlu0 %v2141, 112
  %v2444 = vpop.permute.xlu0 %2443
  %2445 = vrot.lane.b32.xlu0 %v2142, 112
  %v2446 = vpop.permute.xlu0 %2445
  %v2447 = vsel %vm220, %v2432, %v2434
  %v2448 = vsel %vm220, %v2436, %v2438
  %v2449 = vsel %vm220, %v2440, %v2442
  %v2450 = vsel %vm220, %v2444, %v2446
  %v2463 = vsel %vm220, %v2434, %v2432
  %v2464 = vsel %vm220, %v2438, %v2436
  %v2465 = vsel %vm220, %v2442, %v2440
  %v2466 = vsel %vm220, %v2446, %v2444
  %v2467 = vsel %vm235, %v2447, 0.0
  %v2468 = vsel %vm236, %v2463, 0.0
  %v2469 = vsel %vm235, %v2448, 0.0
  %v2470 = vsel %vm236, %v2464, 0.0
  %v2471 = vsel %vm235, %v2449, 0.0
  %v2472 = vsel %vm236, %v2465, 0.0
  %v2473 = vsel %vm235, %v2450, 0.0
  %v2474 = vsel %vm236, %v2466, 0.0
  %2475 = vrot.lane.b32.xlu0 %v2135, 111
  %v2476 = vpop.permute.xlu0 %2475
  %2477 = vrot.lane.b32.xlu0 %v2136, 111
  %v2478 = vpop.permute.xlu0 %2477
  %2479 = vrot.lane.b32.xlu0 %v2137, 111
  %v2480 = vpop.permute.xlu0 %2479
  %2481 = vrot.lane.b32.xlu0 %v2138, 111
  %v2482 = vpop.permute.xlu0 %2481
  %2483 = vrot.lane.b32.xlu0 %v2139, 111
  %v2484 = vpop.permute.xlu0 %2483
  %2485 = vrot.lane.b32.xlu0 %v2140, 111
  %v2486 = vpop.permute.xlu0 %2485
  %2487 = vrot.lane.b32.xlu0 %v2141, 111
  %v2488 = vpop.permute.xlu0 %2487
  %2489 = vrot.lane.b32.xlu0 %v2142, 111
  %v2490 = vpop.permute.xlu0 %2489
  %v2491 = vsel %vm243, %v2476, %v2478
  %v2492 = vsel %vm243, %v2480, %v2482
  %v2493 = vsel %vm243, %v2484, %v2486
  %v2494 = vsel %vm243, %v2488, %v2490
  %v2507 = vsel %vm243, %v2478, %v2476
  %v2508 = vsel %vm243, %v2482, %v2480
  %v2509 = vsel %vm243, %v2486, %v2484
  %v2510 = vsel %vm243, %v2490, %v2488
  %v2511 = vsel %vm259, %v2491, 0.0
  %v2512 = vsel %vm260, %v2507, 0.0
  %v2513 = vsel %vm259, %v2492, 0.0
  %v2514 = vsel %vm260, %v2508, 0.0
  %v2515 = vsel %vm259, %v2493, 0.0
  %v2516 = vsel %vm260, %v2509, 0.0
  %v2517 = vsel %vm259, %v2494, 0.0
  %v2518 = vsel %vm260, %v2510, 0.0
  %v2519 = vpack.c.bf16 %v2205, %v2203
  %v2520 = vpack.c.bf16 %v2206, %v2204
  %v2521 = vpack.c.bf16 %v2209, %v2207
  %v2522 = vpack.c.bf16 %v2210, %v2208
  %v2523 = vpack.c.bf16 %v2249, %v2247
  %v2524 = vpack.c.bf16 %v2250, %v2248
  %v2525 = vpack.c.bf16 %v2253, %v2251
  %v2526 = vpack.c.bf16 %v2254, %v2252
  %v2527 = vpack.c.bf16 %v2293, %v2291
  %v2528 = vpack.c.bf16 %v2294, %v2292
  %v2529 = vpack.c.bf16 %v2297, %v2295
  %v2530 = vpack.c.bf16 %v2298, %v2296
  %v2531 = vpack.c.bf16 %v2337, %v2335
  %v2532 = vpack.c.bf16 %v2338, %v2336
  %v2533 = vpack.c.bf16 %v2341, %v2339
  %v2534 = vpack.c.bf16 %v2342, %v2340
  %v2535 = vpack.c.bf16 %v2137, %v2135
  %v2536 = vpack.c.bf16 %v2138, %v2136
  %v2537 = vpack.c.bf16 %v2141, %v2139
  %v2538 = vpack.c.bf16 %v2142, %v2140
  %v2539 = vpack.c.bf16 %v2381, %v2379
  %v2540 = vpack.c.bf16 %v2382, %v2380
  %v2541 = vpack.c.bf16 %v2385, %v2383
  %v2542 = vpack.c.bf16 %v2386, %v2384
  %v2543 = vpack.c.bf16 %v2425, %v2423
  %v2544 = vpack.c.bf16 %v2426, %v2424
  %v2545 = vpack.c.bf16 %v2429, %v2427
  %v2546 = vpack.c.bf16 %v2430, %v2428
  %v2547 = vpack.c.bf16 %v2469, %v2467
  %v2548 = vpack.c.bf16 %v2470, %v2468
  %v2549 = vpack.c.bf16 %v2473, %v2471
  %v2550 = vpack.c.bf16 %v2474, %v2472
  %v2551 = vpack.c.bf16 %v2513, %v2511
  %v2552 = vpack.c.bf16 %v2514, %v2512
  %v2553 = vpack.c.bf16 %v2517, %v2515
  %v2554 = vpack.c.bf16 %v2518, %v2516
  %2556 = vset.pattern.permute.xlu0 0
  %2557 = vperm.xlu0 %2556, %v2155
  %v2558 = vpop.permute.xlu0 %2557
  %2561 = vset.pattern.permute.xlu0 0
  %2562 = vperm.xlu0 %2561, %v2156
  %v2563 = vpop.permute.xlu0 %2562
  %2566 = vset.pattern.permute.xlu0 0
  %2567 = vperm.xlu0 %2566, %v2157
  %v2568 = vpop.permute.xlu0 %2567
  %2571 = vset.pattern.permute.xlu0 0
  %2572 = vperm.xlu0 %2571, %v2158
  %v2573 = vpop.permute.xlu0 %2572
  %v2587 = vunpack.c.l.b16 %v2143
  %v2588 = vunpack.c.h.b16 %v2143
  %v2589 = vunpack.c.l.b16 %v2144
  %v2590 = vunpack.c.h.b16 %v2144
  %v2591 = vunpack.c.l.b16 %v2145
  %v2592 = vunpack.c.l.b16 %v2146
  %v2593 = vunpack.c.h.b16 %v2146
  %v2594 = vunpack.c.l.b16 %v2147
  %v2595 = vunpack.c.h.b16 %v2147
  %v2596 = vunpack.c.l.b16 %v2148
  %v2597 = vunpack.c.l.b16 %v2149
  %v2598 = vunpack.c.h.b16 %v2149
  %v2599 = vunpack.c.l.b16 %v2150
  %v2600 = vunpack.c.h.b16 %v2150
  %v2601 = vunpack.c.l.b16 %v2151
  %v2602 = vunpack.c.l.b16 %v2152
  %v2603 = vunpack.c.h.b16 %v2152
  %v2604 = vunpack.c.l.b16 %v2153
  %v2605 = vunpack.c.h.b16 %v2153
  %v2606 = vunpack.c.l.b16 %v2154
  %v2607 = vpack.c.b16 %v2592, %v2587
  %v2608 = vpack.c.b16 %v2593, %v2588
  %v2609 = vpack.c.b16 %v2594, %v2589
  %v2610 = vpack.c.b16 %v2595, %v2590
  %v2611 = vpack.c.b16 %v2596, %v2591
  %v2612 = vpack.c.b16 %v2602, %v2597
  %v2613 = vpack.c.b16 %v2603, %v2598
  %v2614 = vpack.c.b16 %v2604, %v2599
  %v2615 = vpack.c.b16 %v2605, %v2600
  %v2616 = vpack.c.b16 %v2606, %v2601
  %vm2625 = vcmask 523264
  %v2627 = vsel %vm2625, %v2611, 0
  %v2630 = vsel %vm2625, %v2616, 0
  %2632 = vmatprep.subr.bf16.mxu0 %v1938
  %2633 = vmatpush1.bf16.msra.mxu0 %v1937
  %2634 = vmatprep.subr.bf16.mxu0 %v1940
  %2635 = vmatpush1.bf16.msra.mxu0 %v1939
  %2636 = vmatprep.subr.bf16.mxu0 %v2520
  %2637 = vmatpush1.bf16.msra.mxu0 %v2519
  %2638 = vmatprep.subr.bf16.mxu0 %v2522
  %2639 = vmatpush1.bf16.msra.mxu0 %v2521
  %2640 = vmatprep.subr.bf16.mxu0 %v1942
  %2641 = vmatpush1.bf16.msra.mxu0 %v1941
  %2642 = vmatprep.subr.bf16.mxu0 %v1944
  %2643 = vmatpush1.bf16.msra.mxu0 %v1943
  %2644 = vmatprep.subr.bf16.mxu0 %v2524
  %2645 = vmatpush1.bf16.msra.mxu0 %v2523
  %2646 = vmatprep.subr.bf16.mxu0 %v2526
  %2647 = vmatpush1.bf16.msra.mxu0 %v2525
  %2648 = vmatprep.subr.bf16.mxu0 %v1946
  %2649 = vmatpush1.bf16.msra.mxu0 %v1945
  %2650 = vmatprep.subr.bf16.mxu0 %v1948
  %2651 = vmatpush1.bf16.msra.mxu0 %v1947
  %2652 = vmatprep.subr.bf16.mxu0 %v2528
  %2653 = vmatpush1.bf16.msra.mxu0 %v2527
  %2654 = vmatprep.subr.bf16.mxu0 %v2530
  %2655 = vmatpush1.bf16.msra.mxu0 %v2529
  %2656 = vmatprep.subr.bf16.mxu0 %v1950
  %2657 = vmatpush1.bf16.msra.mxu0 %v1949
  %2658 = vmatprep.subr.bf16.mxu0 %v1952
  %2659 = vmatpush1.bf16.msra.mxu0 %v1951
  %2660 = vmatprep.subr.bf16.mxu0 %v2532
  %2661 = vmatpush1.bf16.msra.mxu0 %v2531
  %2662 = vmatprep.subr.bf16.mxu0 %v2534
  %2663 = vmatpush1.bf16.msra.mxu0 %v2533
  %2664 = vmatprep.mubr.bf16.mxu0 %v2608
  %2665 = vmatmul.mubr.bf16.gmra.mrb[0].mxu0 %v2607
  %v2666 = vpop.f32.mrb[0].mxu0
  %v2667 = vadd.f32 %v2558, %v2666
  %v2668 = vpop.f32.mrb[0].mxu0
  %v2669 = vadd.f32 %v2558, %v2668
  %v2670 = vpop.f32.mrb[0].mxu0
  %v2671 = vadd.f32 %v2563, %v2670
  %v2672 = vpop.f32.mrb[0].mxu0
  %v2673 = vadd.f32 %v2563, %v2672
  %2674 = vmatprep.mubr.bf16.mxu0 %v2613
  %2675 = vmatmul.mubr.bf16.gmra.mrb[0].mxu0 %v2612
  %v2676 = vpop.f32.mrb[0].mxu0
  %v2677 = vadd.f32 %v2568, %v2676
  %v2678 = vpop.f32.mrb[0].mxu0
  %v2679 = vadd.f32 %v2568, %v2678
  %v2680 = vpop.f32.mrb[0].mxu0
  %v2681 = vadd.f32 %v2573, %v2680
  %v2682 = vpop.f32.mrb[0].mxu0
  %v2683 = vadd.f32 %v2573, %v2682
  %2684 = vdwg.mxu0
  %2685 = vmatprep.subr.bf16.mxu0 %v1954
  %2686 = vmatpush1.bf16.msra.mxu0 %v1953
  %2687 = vmatprep.subr.bf16.mxu0 %v1956
  %2688 = vmatpush1.bf16.msra.mxu0 %v1955
  %2689 = vmatprep.subr.bf16.mxu0 %v2536
  %2690 = vmatpush1.bf16.msra.mxu0 %v2535
  %2691 = vmatprep.subr.bf16.mxu0 %v2538
  %2692 = vmatpush1.bf16.msra.mxu0 %v2537
  %2693 = vmatprep.subr.bf16.mxu0 %v1958
  %2694 = vmatpush1.bf16.msra.mxu0 %v1957
  %2695 = vmatprep.subr.bf16.mxu0 %v1960
  %2696 = vmatpush1.bf16.msra.mxu0 %v1959
  %2697 = vmatprep.subr.bf16.mxu0 %v2540
  %2698 = vmatpush1.bf16.msra.mxu0 %v2539
  %2699 = vmatprep.subr.bf16.mxu0 %v2542
  %2700 = vmatpush1.bf16.msra.mxu0 %v2541
  %2701 = vmatprep.subr.bf16.mxu0 %v1962
  %2702 = vmatpush1.bf16.msra.mxu0 %v1961
  %2703 = vmatprep.subr.bf16.mxu0 %v1964
  %2704 = vmatpush1.bf16.msra.mxu0 %v1963
  %2705 = vmatprep.subr.bf16.mxu0 %v2544
  %2706 = vmatpush1.bf16.msra.mxu0 %v2543
  %2707 = vmatprep.subr.bf16.mxu0 %v2546
  %2708 = vmatpush1.bf16.msra.mxu0 %v2545
  %2709 = vmatprep.subr.bf16.mxu0 %v1966
  %2710 = vmatpush1.bf16.msra.mxu0 %v1965
  %2711 = vmatprep.subr.bf16.mxu0 %v1968
  %2712 = vmatpush1.bf16.msra.mxu0 %v1967
  %2713 = vmatprep.subr.bf16.mxu0 %v2548
  %2714 = vmatpush1.bf16.msra.mxu0 %v2547
  %2715 = vmatprep.subr.bf16.mxu0 %v2550
  %2716 = vmatpush1.bf16.msra.mxu0 %v2549
  %2717 = vmatprep.mubr.bf16.mxu0 %v2610
  %2718 = vmatmul.mubr.bf16.gmra.mrb[0].mxu0 %v2609
  %v2719 = vpop.f32.mrb[0].mxu0
  %v2720 = vadd.f32 %v2667, %v2719
  %v2721 = vpop.f32.mrb[0].mxu0
  %v2722 = vadd.f32 %v2669, %v2721
  %v2723 = vpop.f32.mrb[0].mxu0
  %v2724 = vadd.f32 %v2671, %v2723
  %v2725 = vpop.f32.mrb[0].mxu0
  %v2726 = vadd.f32 %v2673, %v2725
  %2727 = vmatprep.mubr.bf16.mxu0 %v2615
  %2728 = vmatmul.mubr.bf16.gmra.mrb[0].mxu0 %v2614
  %v2729 = vpop.f32.mrb[0].mxu0
  %v2730 = vadd.f32 %v2677, %v2729
  %v2731 = vpop.f32.mrb[0].mxu0
  %v2732 = vadd.f32 %v2679, %v2731
  %v2733 = vpop.f32.mrb[0].mxu0
  %v2734 = vadd.f32 %v2681, %v2733
  %v2735 = vpop.f32.mrb[0].mxu0
  %v2736 = vadd.f32 %v2683, %v2735
  %2737 = vdwg.mxu0
  %2738 = vmatprep.subr.bf16.mxu0 %v1970
  %2739 = vmatpush1.bf16.msra.mxu0 %v1969
  %2740 = vmatprep.subr.bf16.mxu0 %v1972
  %2741 = vmatpush1.bf16.msra.mxu0 %v1971
  %2742 = vmatprep.subr.bf16.mxu0 %v2552
  %2743 = vmatpush1.bf16.msra.mxu0 %v2551
  %2744 = vmatprep.subr.bf16.mxu0 %v2554
  %2745 = vmatpush1.bf16.msra.mxu0 %v2553
  %2746 = vmatprep.subr.bf16.mxu0 0
  %2747 = vmatpush1.bf16.msra.mxu0 0
  %2748 = vmatprep.subr.bf16.mxu0 0
  %2749 = vmatpush1.bf16.msra.mxu0 0
  %2750 = vmatprep.subr.bf16.mxu0 0
  %2751 = vmatpush1.bf16.msra.mxu0 0
  %2752 = vmatprep.subr.bf16.mxu0 0
  %2753 = vmatpush1.bf16.msra.mxu0 0
  %2754 = vmatprep.subr.bf16.mxu0 0
  %2755 = vmatpush1.bf16.msra.mxu0 0
  %2756 = vmatprep.subr.bf16.mxu0 0
  %2757 = vmatpush1.bf16.msra.mxu0 0
  %2758 = vmatprep.subr.bf16.mxu0 0
  %2759 = vmatpush1.bf16.msra.mxu0 0
  %2760 = vmatprep.subr.bf16.mxu0 0
  %2761 = vmatpush1.bf16.msra.mxu0 0
  %2762 = vmatprep.subr.bf16.mxu0 0
  %2763 = vmatpush1.bf16.msra.mxu0 0
  %2764 = vmatprep.subr.bf16.mxu0 0
  %2765 = vmatpush1.bf16.msra.mxu0 0
  %2766 = vmatprep.subr.bf16.mxu0 0
  %2767 = vmatpush1.bf16.msra.mxu0 0
  %2768 = vmatprep.subr.bf16.mxu0 0
  %2769 = vmatpush1.bf16.msra.mxu0 0
  %2770 = vmatprep.mubr.bf16.mxu0 0
  %2771 = vmatmul.mubr.bf16.gmra.mrb[0].mxu0 %v2627
  %v2772 = vpop.f32.mrb[0].mxu0
  %v2773 = vadd.f32 %v2720, %v2772
  %v2774 = vpop.f32.mrb[0].mxu0
  %v2775 = vadd.f32 %v2722, %v2774
  %v2776 = vpop.f32.mrb[0].mxu0
  %v2777 = vadd.f32 %v2724, %v2776
  %v2778 = vpop.f32.mrb[0].mxu0
  %v2779 = vadd.f32 %v2726, %v2778
  %2780 = vmatprep.mubr.bf16.mxu0 0
  %2781 = vmatmul.mubr.bf16.gmra.mrb[0].mxu0 %v2630
  %v2782 = vpop.f32.mrb[0].mxu0
  %v2783 = vadd.f32 %v2730, %v2782
  %v2784 = vpop.f32.mrb[0].mxu0
  %v2785 = vadd.f32 %v2732, %v2784
  %v2786 = vpop.f32.mrb[0].mxu0
  %v2787 = vadd.f32 %v2734, %v2786
  %v2788 = vpop.f32.mrb[0].mxu0
  %v2789 = vadd.f32 %v2736, %v2788
  %2790 = vdwg.mxu0
  %v2791 = vmax.f32 %v2773, 0.0
  %v2792 = vmax.f32 %v2775, 0.0
  %v2793 = vmax.f32 %v2777, 0.0
  %v2794 = vmax.f32 %v2779, 0.0
  %v2795 = vmax.f32 %v2783, 0.0
  %v2796 = vmax.f32 %v2785, 0.0
  %v2797 = vmax.f32 %v2787, 0.0
  %v2798 = vmax.f32 %v2789, 0.0
  %v2799 = vld [vmem:[%s12] sm:$0xff]
  %v2800 = vld [vmem:[%s12 + $0x8] sm:$0xff]
  %v2801 = vld [vmem:[%s12 + $0x10] sm:$0xf]
  %v2802 = vld [vmem:[%s12 + $0x14] sm:$0xff]
  %v2803 = vld [vmem:[%s12 + $0x1c] sm:$0xff]
  %v2804 = vld [vmem:[%s12 + $0x24] sm:$0xf]
  %v2805 = vld [vmem:[%s12 + $0x28] sm:$0xff]
  %v2806 = vld [vmem:[%s12 + $0x30] sm:$0xff]
  %v2807 = vld [vmem:[%s12 + $0x38] sm:$0xf]
  %v2808 = vld [vmem:[%s12 + $0x3c] sm:$0xff]
  %v2809 = vld [vmem:[%s12 + $0x44] sm:$0xff]
  %v2810 = vld [vmem:[%s12 + $0x4c] sm:$0xf]
  %v2811 = vld [vmem:[%s13] sm:$0xff]
  %v2812 = vld [vmem:[%s13 + $0x8] sm:$0xff]
  %v2813 = vld [vmem:[%s13 + $0x10] sm:$0xff]
  %v2814 = vld [vmem:[%s13 + $0x18] sm:$0xff]
  %2819 = vrot.lane.b32.xlu0 %v2792, 17
  %v2820 = vpop.permute.xlu0 %2819
  %2821 = vrot.lane.b32.xlu0 %v2794, 17
  %v2822 = vpop.permute.xlu0 %2821
  %2823 = vrot.lane.b32.xlu0 %v2796, 17
  %v2824 = vpop.permute.xlu0 %2823
  %2825 = vrot.lane.b32.xlu0 %v2798, 17
  %v2826 = vpop.permute.xlu0 %2825
  %2835 = vrot.lane.b32.xlu0 %v2791, 17
  %v2836 = vpop.permute.xlu0 %2835
  %2837 = vrot.lane.b32.xlu0 %v2793, 17
  %v2838 = vpop.permute.xlu0 %2837
  %2839 = vrot.lane.b32.xlu0 %v2795, 17
  %v2840 = vpop.permute.xlu0 %2839
  %2841 = vrot.lane.b32.xlu0 %v2797, 17
  %v2842 = vpop.permute.xlu0 %2841
  %v2843 = vsel %vm76, %v2836, %v2820
  %v2844 = vsel %vm76, %v2838, %v2822
  %v2845 = vsel %vm76, %v2840, %v2824
  %v2846 = vsel %vm76, %v2842, %v2826
  %v2855 = vsel %vm76, %v2820, %v2836
  %v2856 = vsel %vm76, %v2822, %v2838
  %v2857 = vsel %vm76, %v2824, %v2840
  %v2858 = vsel %vm76, %v2826, %v2842
  %v2859 = vsel %vm93, %v2855, 0.0
  %v2860 = vsel %vm94, %v2843, 0.0
  %v2861 = vsel %vm93, %v2856, 0.0
  %v2862 = vsel %vm94, %v2844, 0.0
  %v2863 = vsel %vm93, %v2857, 0.0
  %v2864 = vsel %vm94, %v2845, 0.0
  %v2865 = vsel %vm93, %v2858, 0.0
  %v2866 = vsel %vm94, %v2846, 0.0
  %2867 = vrot.lane.b32.xlu0 %v2792, 16
  %v2868 = vpop.permute.xlu0 %2867
  %2869 = vrot.lane.b32.xlu0 %v2794, 16
  %v2870 = vpop.permute.xlu0 %2869
  %2871 = vrot.lane.b32.xlu0 %v2796, 16
  %v2872 = vpop.permute.xlu0 %2871
  %2873 = vrot.lane.b32.xlu0 %v2798, 16
  %v2874 = vpop.permute.xlu0 %2873
  %2879 = vrot.lane.b32.xlu0 %v2791, 16
  %v2880 = vpop.permute.xlu0 %2879
  %2881 = vrot.lane.b32.xlu0 %v2793, 16
  %v2882 = vpop.permute.xlu0 %2881
  %2883 = vrot.lane.b32.xlu0 %v2795, 16
  %v2884 = vpop.permute.xlu0 %2883
  %2885 = vrot.lane.b32.xlu0 %v2797, 16
  %v2886 = vpop.permute.xlu0 %2885
  %v2887 = vsel %vm102, %v2880, %v2868
  %v2888 = vsel %vm102, %v2882, %v2870
  %v2889 = vsel %vm102, %v2884, %v2872
  %v2890 = vsel %vm102, %v2886, %v2874
  %v2899 = vsel %vm102, %v2868, %v2880
  %v2900 = vsel %vm102, %v2870, %v2882
  %v2901 = vsel %vm102, %v2872, %v2884
  %v2902 = vsel %vm102, %v2874, %v2886
  %v2903 = vsel %vm116, %v2899, 0.0
  %v2904 = vsel %vm117, %v2887, 0.0
  %v2905 = vsel %vm116, %v2900, 0.0
  %v2906 = vsel %vm117, %v2888, 0.0
  %v2907 = vsel %vm116, %v2901, 0.0
  %v2908 = vsel %vm117, %v2889, 0.0
  %v2909 = vsel %vm116, %v2902, 0.0
  %v2910 = vsel %vm117, %v2890, 0.0
  %2911 = vrot.lane.b32.xlu0 %v2792, 15
  %v2912 = vpop.permute.xlu0 %2911
  %2913 = vrot.lane.b32.xlu0 %v2794, 15
  %v2914 = vpop.permute.xlu0 %2913
  %2915 = vrot.lane.b32.xlu0 %v2796, 15
  %v2916 = vpop.permute.xlu0 %2915
  %2917 = vrot.lane.b32.xlu0 %v2798, 15
  %v2918 = vpop.permute.xlu0 %2917
  %2923 = vrot.lane.b32.xlu0 %v2791, 15
  %v2924 = vpop.permute.xlu0 %2923
  %2925 = vrot.lane.b32.xlu0 %v2793, 15
  %v2926 = vpop.permute.xlu0 %2925
  %2927 = vrot.lane.b32.xlu0 %v2795, 15
  %v2928 = vpop.permute.xlu0 %2927
  %2929 = vrot.lane.b32.xlu0 %v2797, 15
  %v2930 = vpop.permute.xlu0 %2929
  %v2931 = vsel %vm125, %v2924, %v2912
  %v2932 = vsel %vm125, %v2926, %v2914
  %v2933 = vsel %vm125, %v2928, %v2916
  %v2934 = vsel %vm125, %v2930, %v2918
  %v2943 = vsel %vm125, %v2912, %v2924
  %v2944 = vsel %vm125, %v2914, %v2926
  %v2945 = vsel %vm125, %v2916, %v2928
  %v2946 = vsel %vm125, %v2918, %v2930
  %v2947 = vsel %vm141, %v2943, 0.0
  %v2948 = vsel %vm142, %v2931, 0.0
  %v2949 = vsel %vm141, %v2944, 0.0
  %v2950 = vsel %vm142, %v2932, 0.0
  %v2951 = vsel %vm141, %v2945, 0.0
  %v2952 = vsel %vm142, %v2933, 0.0
  %v2953 = vsel %vm141, %v2946, 0.0
  %v2954 = vsel %vm142, %v2934, 0.0
  %2955 = vrot.lane.b32.xlu0 %v2792, 1
  %v2956 = vpop.permute.xlu0 %2955
  %2957 = vrot.lane.b32.xlu0 %v2794, 1
  %v2958 = vpop.permute.xlu0 %2957
  %2959 = vrot.lane.b32.xlu0 %v2796, 1
  %v2960 = vpop.permute.xlu0 %2959
  %2961 = vrot.lane.b32.xlu0 %v2798, 1
  %v2962 = vpop.permute.xlu0 %2961
  %2967 = vrot.lane.b32.xlu0 %v2791, 1
  %v2968 = vpop.permute.xlu0 %2967
  %2969 = vrot.lane.b32.xlu0 %v2793, 1
  %v2970 = vpop.permute.xlu0 %2969
  %2971 = vrot.lane.b32.xlu0 %v2795, 1
  %v2972 = vpop.permute.xlu0 %2971
  %2973 = vrot.lane.b32.xlu0 %v2797, 1
  %v2974 = vpop.permute.xlu0 %2973
  %v2975 = vsel %vm150, %v2968, %v2956
  %v2976 = vsel %vm150, %v2970, %v2958
  %v2977 = vsel %vm150, %v2972, %v2960
  %v2978 = vsel %vm150, %v2974, %v2962
  %v2987 = vsel %vm150, %v2956, %v2968
  %v2988 = vsel %vm150, %v2958, %v2970
  %v2989 = vsel %vm150, %v2960, %v2972
  %v2990 = vsel %vm150, %v2962, %v2974
  %v2991 = vsel %vm164, %v2987, 0.0
  %v2992 = vsel %vm165, %v2975, 0.0
  %v2993 = vsel %vm164, %v2988, 0.0
  %v2994 = vsel %vm165, %v2976, 0.0
  %v2995 = vsel %vm164, %v2989, 0.0
  %v2996 = vsel %vm165, %v2977, 0.0
  %v2997 = vsel %vm164, %v2990, 0.0
  %v2998 = vsel %vm165, %v2978, 0.0
  %2999 = vrot.lane.b32.xlu0 %v2791, 127
  %v3000 = vpop.permute.xlu0 %2999
  %3001 = vrot.lane.b32.xlu0 %v2792, 127
  %v3002 = vpop.permute.xlu0 %3001
  %3003 = vrot.lane.b32.xlu0 %v2793, 127
  %v3004 = vpop.permute.xlu0 %3003
  %3005 = vrot.lane.b32.xlu0 %v2794, 127
  %v3006 = vpop.permute.xlu0 %3005
  %3007 = vrot.lane.b32.xlu0 %v2795, 127
  %v3008 = vpop.permute.xlu0 %3007
  %3009 = vrot.lane.b32.xlu0 %v2796, 127
  %v3010 = vpop.permute.xlu0 %3009
  %3011 = vrot.lane.b32.xlu0 %v2797, 127
  %v3012 = vpop.permute.xlu0 %3011
  %3013 = vrot.lane.b32.xlu0 %v2798, 127
  %v3014 = vpop.permute.xlu0 %3013
  %v3015 = vsel %vm172, %v3000, %v3002
  %v3016 = vsel %vm172, %v3004, %v3006
  %v3017 = vsel %vm172, %v3008, %v3010
  %v3018 = vsel %vm172, %v3012, %v3014
  %v3031 = vsel %vm172, %v3002, %v3000
  %v3032 = vsel %vm172, %v3006, %v3004
  %v3033 = vsel %vm172, %v3010, %v3008
  %v3034 = vsel %vm172, %v3014, %v3012
  %v3035 = vsel %vm187, %v3015, 0.0
  %v3036 = vsel %vm188, %v3031, 0.0
  %v3037 = vsel %vm187, %v3016, 0.0
  %v3038 = vsel %vm188, %v3032, 0.0
  %v3039 = vsel %vm187, %v3017, 0.0
  %v3040 = vsel %vm188, %v3033, 0.0
  %v3041 = vsel %vm187, %v3018, 0.0
  %v3042 = vsel %vm188, %v3034, 0.0
  %3043 = vrot.lane.b32.xlu0 %v2791, 113
  %v3044 = vpop.permute.xlu0 %3043
  %3045 = vrot.lane.b32.xlu0 %v2792, 113
  %v3046 = vpop.permute.xlu0 %3045
  %3047 = vrot.lane.b32.xlu0 %v2793, 113
  %v3048 = vpop.permute.xlu0 %3047
  %3049 = vrot.lane.b32.xlu0 %v2794, 113
  %v3050 = vpop.permute.xlu0 %3049
  %3051 = vrot.lane.b32.xlu0 %v2795, 113
  %v3052 = vpop.permute.xlu0 %3051
  %3053 = vrot.lane.b32.xlu0 %v2796, 113
  %v3054 = vpop.permute.xlu0 %3053
  %3055 = vrot.lane.b32.xlu0 %v2797, 113
  %v3056 = vpop.permute.xlu0 %3055
  %3057 = vrot.lane.b32.xlu0 %v2798, 113
  %v3058 = vpop.permute.xlu0 %3057
  %v3059 = vsel %vm195, %v3044, %v3046
  %v3060 = vsel %vm195, %v3048, %v3050
  %v3061 = vsel %vm195, %v3052, %v3054
  %v3062 = vsel %vm195, %v3056, %v3058
  %v3075 = vsel %vm195, %v3046, %v3044
  %v3076 = vsel %vm195, %v3050, %v3048
  %v3077 = vsel %vm195, %v3054, %v3052
  %v3078 = vsel %vm195, %v3058, %v3056
  %v3079 = vsel %vm212, %v3059, 0.0
  %v3080 = vsel %vm213, %v3075, 0.0
  %v3081 = vsel %vm212, %v3060, 0.0
  %v3082 = vsel %vm213, %v3076, 0.0
  %v3083 = vsel %vm212, %v3061, 0.0
  %v3084 = vsel %vm213, %v3077, 0.0
  %v3085 = vsel %vm212, %v3062, 0.0
  %v3086 = vsel %vm213, %v3078, 0.0
  %3087 = vrot.lane.b32.xlu0 %v2791, 112
  %v3088 = vpop.permute.xlu0 %3087
  %3089 = vrot.lane.b32.xlu0 %v2792, 112
  %v3090 = vpop.permute.xlu0 %3089
  %3091 = vrot.lane.b32.xlu0 %v2793, 112
  %v3092 = vpop.permute.xlu0 %3091
  %3093 = vrot.lane.b32.xlu0 %v2794, 112
  %v3094 = vpop.permute.xlu0 %3093
  %3095 = vrot.lane.b32.xlu0 %v2795, 112
  %v3096 = vpop.permute.xlu0 %3095
  %3097 = vrot.lane.b32.xlu0 %v2796, 112
  %v3098 = vpop.permute.xlu0 %3097
  %3099 = vrot.lane.b32.xlu0 %v2797, 112
  %v3100 = vpop.permute.xlu0 %3099
  %3101 = vrot.lane.b32.xlu0 %v2798, 112
  %v3102 = vpop.permute.xlu0 %3101
  %v3103 = vsel %vm220, %v3088, %v3090
  %v3104 = vsel %vm220, %v3092, %v3094
  %v3105 = vsel %vm220, %v3096, %v3098
  %v3106 = vsel %vm220, %v3100, %v3102
  %v3119 = vsel %vm220, %v3090, %v3088
  %v3120 = vsel %vm220, %v3094, %v3092
  %v3121 = vsel %vm220, %v3098, %v3096
  %v3122 = vsel %vm220, %v3102, %v3100
  %v3123 = vsel %vm235, %v3103, 0.0
  %v3124 = vsel %vm236, %v3119, 0.0
  %v3125 = vsel %vm235, %v3104, 0.0
  %v3126 = vsel %vm236, %v3120, 0.0
  %v3127 = vsel %vm235, %v3105, 0.0
  %v3128 = vsel %vm236, %v3121, 0.0
  %v3129 = vsel %vm235, %v3106, 0.0
  %v3130 = vsel %vm236, %v3122, 0.0
  %3131 = vrot.lane.b32.xlu0 %v2791, 111
  %v3132 = vpop.permute.xlu0 %3131
  %3133 = vrot.lane.b32.xlu0 %v2792, 111
  %v3134 = vpop.permute.xlu0 %3133
  %3135 = vrot.lane.b32.xlu0 %v2793, 111
  %v3136 = vpop.permute.xlu0 %3135
  %3137 = vrot.lane.b32.xlu0 %v2794, 111
  %v3138 = vpop.permute.xlu0 %3137
  %3139 = vrot.lane.b32.xlu0 %v2795, 111
  %v3140 = vpop.permute.xlu0 %3139
  %3141 = vrot.lane.b32.xlu0 %v2796, 111
  %v3142 = vpop.permute.xlu0 %3141
  %3143 = vrot.lane.b32.xlu0 %v2797, 111
  %v3144 = vpop.permute.xlu0 %3143
  %3145 = vrot.lane.b32.xlu0 %v2798, 111
  %v3146 = vpop.permute.xlu0 %3145
  %v3147 = vsel %vm243, %v3132, %v3134
  %v3148 = vsel %vm243, %v3136, %v3138
  %v3149 = vsel %vm243, %v3140, %v3142
  %v3150 = vsel %vm243, %v3144, %v3146
  %v3163 = vsel %vm243, %v3134, %v3132
  %v3164 = vsel %vm243, %v3138, %v3136
  %v3165 = vsel %vm243, %v3142, %v3140
  %v3166 = vsel %vm243, %v3146, %v3144
  %v3167 = vsel %vm259, %v3147, 0.0
  %v3168 = vsel %vm260, %v3163, 0.0
  %v3169 = vsel %vm259, %v3148, 0.0
  %v3170 = vsel %vm260, %v3164, 0.0
  %v3171 = vsel %vm259, %v3149, 0.0
  %v3172 = vsel %vm260, %v3165, 0.0
  %v3173 = vsel %vm259, %v3150, 0.0
  %v3174 = vsel %vm260, %v3166, 0.0
  %v3175 = vpack.c.bf16 %v2861, %v2859
  %v3176 = vpack.c.bf16 %v2862, %v2860
  %v3177 = vpack.c.bf16 %v2865, %v2863
  %v3178 = vpack.c.bf16 %v2866, %v2864
  %v3179 = vpack.c.bf16 %v2905, %v2903
  %v3180 = vpack.c.bf16 %v2906, %v2904
  %v3181 = vpack.c.bf16 %v2909, %v2907
  %v3182 = vpack.c.bf16 %v2910, %v2908
  %v3183 = vpack.c.bf16 %v2949, %v2947
  %v3184 = vpack.c.bf16 %v2950, %v2948
  %v3185 = vpack.c.bf16 %v2953, %v2951
  %v3186 = vpack.c.bf16 %v2954, %v2952
  %v3187 = vpack.c.bf16 %v2993, %v2991
  %v3188 = vpack.c.bf16 %v2994, %v2992
  %v3189 = vpack.c.bf16 %v2997, %v2995
  %v3190 = vpack.c.bf16 %v2998, %v2996
  %v3191 = vpack.c.bf16 %v2793, %v2791
  %v3192 = vpack.c.bf16 %v2794, %v2792
  %v3193 = vpack.c.bf16 %v2797, %v2795
  %v3194 = vpack.c.bf16 %v2798, %v2796
  %v3195 = vpack.c.bf16 %v3037, %v3035
  %v3196 = vpack.c.bf16 %v3038, %v3036
  %v3197 = vpack.c.bf16 %v3041, %v3039
  %v3198 = vpack.c.bf16 %v3042, %v3040
  %v3199 = vpack.c.bf16 %v3081, %v3079
  %v3200 = vpack.c.bf16 %v3082, %v3080
  %v3201 = vpack.c.bf16 %v3085, %v3083
  %v3202 = vpack.c.bf16 %v3086, %v3084
  %v3203 = vpack.c.bf16 %v3125, %v3123
  %v3204 = vpack.c.bf16 %v3126, %v3124
  %v3205 = vpack.c.bf16 %v3129, %v3127
  %v3206 = vpack.c.bf16 %v3130, %v3128
  %v3207 = vpack.c.bf16 %v3169, %v3167
  %v3208 = vpack.c.bf16 %v3170, %v3168
  %v3209 = vpack.c.bf16 %v3173, %v3171
  %v3210 = vpack.c.bf16 %v3174, %v3172
  %3212 = vset.pattern.permute.xlu0 0
  %3213 = vperm.xlu0 %3212, %v2811
  %v3214 = vpop.permute.xlu0 %3213
  %3217 = vset.pattern.permute.xlu0 0
  %3218 = vperm.xlu0 %3217, %v2812
  %v3219 = vpop.permute.xlu0 %3218
  %3222 = vset.pattern.permute.xlu0 0
  %3223 = vperm.xlu0 %3222, %v2813
  %v3224 = vpop.permute.xlu0 %3223
  %3227 = vset.pattern.permute.xlu0 0
  %3228 = vperm.xlu0 %3227, %v2814
  %v3229 = vpop.permute.xlu0 %3228
  %v3243 = vunpack.c.l.b16 %v2799
  %v3244 = vunpack.c.h.b16 %v2799
  %v3245 = vunpack.c.l.b16 %v2800
  %v3246 = vunpack.c.h.b16 %v2800
  %v3247 = vunpack.c.l.b16 %v2801
  %v3248 = vunpack.c.l.b16 %v2802
  %v3249 = vunpack.c.h.b16 %v2802
  %v3250 = vunpack.c.l.b16 %v2803
  %v3251 = vunpack.c.h.b16 %v2803
  %v3252 = vunpack.c.l.b16 %v2804
  %v3253 = vunpack.c.l.b16 %v2805
  %v3254 = vunpack.c.h.b16 %v2805
  %v3255 = vunpack.c.l.b16 %v2806
  %v3256 = vunpack.c.h.b16 %v2806
  %v3257 = vunpack.c.l.b16 %v2807
  %v3258 = vunpack.c.l.b16 %v2808
  %v3259 = vunpack.c.h.b16 %v2808
  %v3260 = vunpack.c.l.b16 %v2809
  %v3261 = vunpack.c.h.b16 %v2809
  %v3262 = vunpack.c.l.b16 %v2810
  %v3263 = vpack.c.b16 %v3248, %v3243
  %v3264 = vpack.c.b16 %v3249, %v3244
  %v3265 = vpack.c.b16 %v3250, %v3245
  %v3266 = vpack.c.b16 %v3251, %v3246
  %v3267 = vpack.c.b16 %v3252, %v3247
  %v3268 = vpack.c.b16 %v3258, %v3253
  %v3269 = vpack.c.b16 %v3259, %v3254
  %v3270 = vpack.c.b16 %v3260, %v3255
  %v3271 = vpack.c.b16 %v3261, %v3256
  %v3272 = vpack.c.b16 %v3262, %v3257
  %v3282 = vsel %vm2625, %v3267, 0
  %v3285 = vsel %vm2625, %v3272, 0
  %3287 = vmatprep.subr.bf16.mxu0 %v1360
  %3288 = vmatpush1.bf16.msra.mxu0 %v1359
  %3289 = vmatprep.subr.bf16.mxu0 %v1362
  %3290 = vmatpush1.bf16.msra.mxu0 %v1361
  %3291 = vmatprep.subr.bf16.mxu0 %v3176
  %3292 = vmatpush1.bf16.msra.mxu0 %v3175
  %3293 = vmatprep.subr.bf16.mxu0 %v3178
  %3294 = vmatpush1.bf16.msra.mxu0 %v3177
  %3295 = vmatprep.subr.bf16.mxu0 %v1364
  %3296 = vmatpush1.bf16.msra.mxu0 %v1363
  %3297 = vmatprep.subr.bf16.mxu0 %v1366
  %3298 = vmatpush1.bf16.msra.mxu0 %v1365
  %3299 = vmatprep.subr.bf16.mxu0 %v3180
  %3300 = vmatpush1.bf16.msra.mxu0 %v3179
  %3301 = vmatprep.subr.bf16.mxu0 %v3182
  %3302 = vmatpush1.bf16.msra.mxu0 %v3181
  %3303 = vmatprep.subr.bf16.mxu0 %v1368
  %3304 = vmatpush1.bf16.msra.mxu0 %v1367
  %3305 = vmatprep.subr.bf16.mxu0 %v1370
  %3306 = vmatpush1.bf16.msra.mxu0 %v1369
  %3307 = vmatprep.subr.bf16.mxu0 %v3184
  %3308 = vmatpush1.bf16.msra.mxu0 %v3183
  %3309 = vmatprep.subr.bf16.mxu0 %v3186
  %3310 = vmatpush1.bf16.msra.mxu0 %v3185
  %3311 = vmatprep.subr.bf16.mxu0 %v1372
  %3312 = vmatpush1.bf16.msra.mxu0 %v1371
  %3313 = vmatprep.subr.bf16.mxu0 %v1374
  %3314 = vmatpush1.bf16.msra.mxu0 %v1373
  %3315 = vmatprep.subr.bf16.mxu0 %v3188
  %3316 = vmatpush1.bf16.msra.mxu0 %v3187
  %3317 = vmatprep.subr.bf16.mxu0 %v3190
  %3318 = vmatpush1.bf16.msra.mxu0 %v3189
  %3319 = vmatprep.mubr.bf16.mxu0 %v3264
  %3320 = vmatmul.mubr.bf16.gmra.mrb[0].mxu0 %v3263
  %v3321 = vpop.f32.mrb[0].mxu0
  %v3322 = vadd.f32 %v3214, %v3321
  %v3323 = vpop.f32.mrb[0].mxu0
  %v3324 = vadd.f32 %v3214, %v3323
  %v3325 = vpop.f32.mrb[0].mxu0
  %v3326 = vadd.f32 %v3219, %v3325
  %v3327 = vpop.f32.mrb[0].mxu0
  %v3328 = vadd.f32 %v3219, %v3327
  %3329 = vmatprep.mubr.bf16.mxu0 %v3269
  %3330 = vmatmul.mubr.bf16.gmra.mrb[0].mxu0 %v3268
  %v3331 = vpop.f32.mrb[0].mxu0
  %v3332 = vadd.f32 %v3224, %v3331
  %v3333 = vpop.f32.mrb[0].mxu0
  %v3334 = vadd.f32 %v3224, %v3333
  %v3335 = vpop.f32.mrb[0].mxu0
  %v3336 = vadd.f32 %v3229, %v3335
  %v3337 = vpop.f32.mrb[0].mxu0
  %v3338 = vadd.f32 %v3229, %v3337
  %3339 = vdwg.mxu0
  %3340 = vmatprep.subr.bf16.mxu0 %v1376
  %3341 = vmatpush1.bf16.msra.mxu0 %v1375
  %3342 = vmatprep.subr.bf16.mxu0 %v1378
  %3343 = vmatpush1.bf16.msra.mxu0 %v1377
  %3344 = vmatprep.subr.bf16.mxu0 %v3192
  %3345 = vmatpush1.bf16.msra.mxu0 %v3191
  %3346 = vmatprep.subr.bf16.mxu0 %v3194
  %3347 = vmatpush1.bf16.msra.mxu0 %v3193
  %3348 = vmatprep.subr.bf16.mxu0 %v1380
  %3349 = vmatpush1.bf16.msra.mxu0 %v1379
  %3350 = vmatprep.subr.bf16.mxu0 %v1382
  %3351 = vmatpush1.bf16.msra.mxu0 %v1381
  %3352 = vmatprep.subr.bf16.mxu0 %v3196
  %3353 = vmatpush1.bf16.msra.mxu0 %v3195
  %3354 = vmatprep.subr.bf16.mxu0 %v3198
  %3355 = vmatpush1.bf16.msra.mxu0 %v3197
  %3356 = vmatprep.subr.bf16.mxu0 %v1384
  %3357 = vmatpush1.bf16.msra.mxu0 %v1383
  %3358 = vmatprep.subr.bf16.mxu0 %v1386
  %3359 = vmatpush1.bf16.msra.mxu0 %v1385
  %3360 = vmatprep.subr.bf16.mxu0 %v3200
  %3361 = vmatpush1.bf16.msra.mxu0 %v3199
  %3362 = vmatprep.subr.bf16.mxu0 %v3202
  %3363 = vmatpush1.bf16.msra.mxu0 %v3201
  %3364 = vmatprep.subr.bf16.mxu0 %v1388
  %3365 = vmatpush1.bf16.msra.mxu0 %v1387
  %3366 = vmatprep.subr.bf16.mxu0 %v1390
  %3367 = vmatpush1.bf16.msra.mxu0 %v1389
  %3368 = vmatprep.subr.bf16.mxu0 %v3204
  %3369 = vmatpush1.bf16.msra.mxu0 %v3203
  %3370 = vmatprep.subr.bf16.mxu0 %v3206
  %3371 = vmatpush1.bf16.msra.mxu0 %v3205
  %3372 = vmatprep.mubr.bf16.mxu0 %v3266
  %3373 = vmatmul.mubr.bf16.gmra.mrb[0].mxu0 %v3265
  %v3374 = vpop.f32.mrb[0].mxu0
  %v3375 = vadd.f32 %v3322, %v3374
  %v3376 = vpop.f32.mrb[0].mxu0
  %v3377 = vadd.f32 %v3324, %v3376
  %v3378 = vpop.f32.mrb[0].mxu0
  %v3379 = vadd.f32 %v3326, %v3378
  %v3380 = vpop.f32.mrb[0].mxu0
  %v3381 = vadd.f32 %v3328, %v3380
  %3382 = vmatprep.mubr.bf16.mxu0 %v3271
  %3383 = vmatmul.mubr.bf16.gmra.mrb[0].mxu0 %v3270
  %v3384 = vpop.f32.mrb[0].mxu0
  %v3385 = vadd.f32 %v3332, %v3384
  %v3386 = vpop.f32.mrb[0].mxu0
  %v3387 = vadd.f32 %v3334, %v3386
  %v3388 = vpop.f32.mrb[0].mxu0
  %v3389 = vadd.f32 %v3336, %v3388
  %v3390 = vpop.f32.mrb[0].mxu0
  %v3391 = vadd.f32 %v3338, %v3390
  %3392 = vdwg.mxu0
  %3393 = vmatprep.subr.bf16.mxu0 %v1392
  %3394 = vmatpush1.bf16.msra.mxu0 %v1391
  %3395 = vmatprep.subr.bf16.mxu0 %v1394
  %3396 = vmatpush1.bf16.msra.mxu0 %v1393
  %3397 = vmatprep.subr.bf16.mxu0 %v3208
  %3398 = vmatpush1.bf16.msra.mxu0 %v3207
  %3399 = vmatprep.subr.bf16.mxu0 %v3210
  %3400 = vmatpush1.bf16.msra.mxu0 %v3209
  %3401 = vmatprep.subr.bf16.mxu0 0
  %3402 = vmatpush1.bf16.msra.mxu0 0
  %3403 = vmatprep.subr.bf16.mxu0 0
  %3404 = vmatpush1.bf16.msra.mxu0 0
  %3405 = vmatprep.subr.bf16.mxu0 0
  %3406 = vmatpush1.bf16.msra.mxu0 0
  %3407 = vmatprep.subr.bf16.mxu0 0
  %3408 = vmatpush1.bf16.msra.mxu0 0
  %3409 = vmatprep.subr.bf16.mxu0 0
  %3410 = vmatpush1.bf16.msra.mxu0 0
  %3411 = vmatprep.subr.bf16.mxu0 0
  %3412 = vmatpush1.bf16.msra.mxu0 0
  %3413 = vmatprep.subr.bf16.mxu0 0
  %3414 = vmatpush1.bf16.msra.mxu0 0
  %3415 = vmatprep.subr.bf16.mxu0 0
  %3416 = vmatpush1.bf16.msra.mxu0 0
  %3417 = vmatprep.subr.bf16.mxu0 0
  %3418 = vmatpush1.bf16.msra.mxu0 0
  %3419 = vmatprep.subr.bf16.mxu0 0
  %3420 = vmatpush1.bf16.msra.mxu0 0
  %3421 = vmatprep.subr.bf16.mxu0 0
  %3422 = vmatpush1.bf16.msra.mxu0 0
  %3423 = vmatprep.subr.bf16.mxu0 0
  %3424 = vmatpush1.bf16.msra.mxu0 0
  %3425 = vmatprep.mubr.bf16.mxu0 0
  %3426 = vmatmul.mubr.bf16.gmra.mrb[0].mxu0 %v3282
  %v3427 = vpop.f32.mrb[0].mxu0
  %v3428 = vadd.f32 %v3375, %v3427
  %v3429 = vpop.f32.mrb[0].mxu0
  %v3430 = vadd.f32 %v3377, %v3429
  %v3431 = vpop.f32.mrb[0].mxu0
  %v3432 = vadd.f32 %v3379, %v3431
  %v3433 = vpop.f32.mrb[0].mxu0
  %v3434 = vadd.f32 %v3381, %v3433
  %3435 = vmatprep.mubr.bf16.mxu0 0
  %3436 = vmatmul.mubr.bf16.gmra.mrb[0].mxu0 %v3285
  %v3437 = vpop.f32.mrb[0].mxu0
  %v3438 = vadd.f32 %v3385, %v3437
  %v3439 = vpop.f32.mrb[0].mxu0
  %v3440 = vadd.f32 %v3387, %v3439
  %v3441 = vpop.f32.mrb[0].mxu0
  %v3442 = vadd.f32 %v3389, %v3441
  %v3443 = vpop.f32.mrb[0].mxu0
  %v3444 = vadd.f32 %v3391, %v3443
  %3445 = vdwg.mxu0
  %v3446 = vmax.f32 %v3428, 0.0
  %v3447 = vmax.f32 %v3430, 0.0
  %v3448 = vmax.f32 %v3432, 0.0
  %v3449 = vmax.f32 %v3434, 0.0
  %v3450 = vmax.f32 %v3438, 0.0
  %v3451 = vmax.f32 %v3440, 0.0
  %v3452 = vmax.f32 %v3442, 0.0
  %v3453 = vmax.f32 %v3444, 0.0
  %v3454 = vld [vmem:[%s14] sm:$0xff]
  %v3455 = vld [vmem:[%s14 + $0x8] sm:$0xff]
  %v3456 = vld [vmem:[%s14 + $0x10] sm:$0xf]
  %v3457 = vld [vmem:[%s14 + $0x14] sm:$0xff]
  %v3458 = vld [vmem:[%s14 + $0x1c] sm:$0xff]
  %v3459 = vld [vmem:[%s14 + $0x24] sm:$0xf]
  %v3460 = vld [vmem:[%s14 + $0x28] sm:$0xff]
  %v3461 = vld [vmem:[%s14 + $0x30] sm:$0xff]
  %v3462 = vld [vmem:[%s14 + $0x38] sm:$0xf]
  %v3463 = vld [vmem:[%s15] sm:$0xff]
  %v3464 = vld [vmem:[%s15 + $0x8] sm:$0xff]
  %v3465 = vld [vmem:[%s15 + $0x10] sm:$0xff]
  %3470 = vrot.lane.b32.xlu0 %v3447, 17
  %v3471 = vpop.permute.xlu0 %3470
  %3472 = vrot.lane.b32.xlu0 %v3449, 17
  %v3473 = vpop.permute.xlu0 %3472
  %3474 = vrot.lane.b32.xlu0 %v3451, 17
  %v3475 = vpop.permute.xlu0 %3474
  %3476 = vrot.lane.b32.xlu0 %v3453, 17
  %v3477 = vpop.permute.xlu0 %3476
  %3486 = vrot.lane.b32.xlu0 %v3446, 17
  %v3487 = vpop.permute.xlu0 %3486
  %3488 = vrot.lane.b32.xlu0 %v3448, 17
  %v3489 = vpop.permute.xlu0 %3488
  %3490 = vrot.lane.b32.xlu0 %v3450, 17
  %v3491 = vpop.permute.xlu0 %3490
  %3492 = vrot.lane.b32.xlu0 %v3452, 17
  %v3493 = vpop.permute.xlu0 %3492
  %v3494 = vsel %vm76, %v3487, %v3471
  %v3495 = vsel %vm76, %v3489, %v3473
  %v3496 = vsel %vm76, %v3491, %v3475
  %v3497 = vsel %vm76, %v3493, %v3477
  %v3506 = vsel %vm76, %v3471, %v3487
  %v3507 = vsel %vm76, %v3473, %v3489
  %v3508 = vsel %vm76, %v3475, %v3491
  %v3509 = vsel %vm76, %v3477, %v3493
  %v3510 = vsel %vm93, %v3506, 0.0
  %v3511 = vsel %vm94, %v3494, 0.0
  %v3512 = vsel %vm93, %v3507, 0.0
  %v3513 = vsel %vm94, %v3495, 0.0
  %v3514 = vsel %vm93, %v3508, 0.0
  %v3515 = vsel %vm94, %v3496, 0.0
  %v3516 = vsel %vm93, %v3509, 0.0
  %v3517 = vsel %vm94, %v3497, 0.0
  %3518 = vrot.lane.b32.xlu0 %v3447, 16
  %v3519 = vpop.permute.xlu0 %3518
  %3520 = vrot.lane.b32.xlu0 %v3449, 16
  %v3521 = vpop.permute.xlu0 %3520
  %3522 = vrot.lane.b32.xlu0 %v3451, 16
  %v3523 = vpop.permute.xlu0 %3522
  %3524 = vrot.lane.b32.xlu0 %v3453, 16
  %v3525 = vpop.permute.xlu0 %3524
  %3530 = vrot.lane.b32.xlu0 %v3446, 16
  %v3531 = vpop.permute.xlu0 %3530
  %3532 = vrot.lane.b32.xlu0 %v3448, 16
  %v3533 = vpop.permute.xlu0 %3532
  %3534 = vrot.lane.b32.xlu0 %v3450, 16
  %v3535 = vpop.permute.xlu0 %3534
  %3536 = vrot.lane.b32.xlu0 %v3452, 16
  %v3537 = vpop.permute.xlu0 %3536
  %v3538 = vsel %vm102, %v3531, %v3519
  %v3539 = vsel %vm102, %v3533, %v3521
  %v3540 = vsel %vm102, %v3535, %v3523
  %v3541 = vsel %vm102, %v3537, %v3525
  %v3550 = vsel %vm102, %v3519, %v3531
  %v3551 = vsel %vm102, %v3521, %v3533
  %v3552 = vsel %vm102, %v3523, %v3535
  %v3553 = vsel %vm102, %v3525, %v3537
  %v3554 = vsel %vm116, %v3550, 0.0
  %v3555 = vsel %vm117, %v3538, 0.0
  %v3556 = vsel %vm116, %v3551, 0.0
  %v3557 = vsel %vm117, %v3539, 0.0
  %v3558 = vsel %vm116, %v3552, 0.0
  %v3559 = vsel %vm117, %v3540, 0.0
  %v3560 = vsel %vm116, %v3553, 0.0
  %v3561 = vsel %vm117, %v3541, 0.0
  %3562 = vrot.lane.b32.xlu0 %v3447, 15
  %v3563 = vpop.permute.xlu0 %3562
  %3564 = vrot.lane.b32.xlu0 %v3449, 15
  %v3565 = vpop.permute.xlu0 %3564
  %3566 = vrot.lane.b32.xlu0 %v3451, 15
  %v3567 = vpop.permute.xlu0 %3566
  %3568 = vrot.lane.b32.xlu0 %v3453, 15
  %v3569 = vpop.permute.xlu0 %3568
  %3574 = vrot.lane.b32.xlu0 %v3446, 15
  %v3575 = vpop.permute.xlu0 %3574
  %3576 = vrot.lane.b32.xlu0 %v3448, 15
  %v3577 = vpop.permute.xlu0 %3576
  %3578 = vrot.lane.b32.xlu0 %v3450, 15
  %v3579 = vpop.permute.xlu0 %3578
  %3580 = vrot.lane.b32.xlu0 %v3452, 15
  %v3581 = vpop.permute.xlu0 %3580
  %v3582 = vsel %vm125, %v3575, %v3563
  %v3583 = vsel %vm125, %v3577, %v3565
  %v3584 = vsel %vm125, %v3579, %v3567
  %v3585 = vsel %vm125, %v3581, %v3569
  %v3594 = vsel %vm125, %v3563, %v3575
  %v3595 = vsel %vm125, %v3565, %v3577
  %v3596 = vsel %vm125, %v3567, %v3579
  %v3597 = vsel %vm125, %v3569, %v3581
  %v3598 = vsel %vm141, %v3594, 0.0
  %v3599 = vsel %vm142, %v3582, 0.0
  %v3600 = vsel %vm141, %v3595, 0.0
  %v3601 = vsel %vm142, %v3583, 0.0
  %v3602 = vsel %vm141, %v3596, 0.0
  %v3603 = vsel %vm142, %v3584, 0.0
  %v3604 = vsel %vm141, %v3597, 0.0
  %v3605 = vsel %vm142, %v3585, 0.0
  %3606 = vrot.lane.b32.xlu0 %v3447, 1
  %v3607 = vpop.permute.xlu0 %3606
  %3608 = vrot.lane.b32.xlu0 %v3449, 1
  %v3609 = vpop.permute.xlu0 %3608
  %3610 = vrot.lane.b32.xlu0 %v3451, 1
  %v3611 = vpop.permute.xlu0 %3610
  %3612 = vrot.lane.b32.xlu0 %v3453, 1
  %v3613 = vpop.permute.xlu0 %3612
  %3618 = vrot.lane.b32.xlu0 %v3446, 1
  %v3619 = vpop.permute.xlu0 %3618
  %3620 = vrot.lane.b32.xlu0 %v3448, 1
  %v3621 = vpop.permute.xlu0 %3620
  %3622 = vrot.lane.b32.xlu0 %v3450, 1
  %v3623 = vpop.permute.xlu0 %3622
  %3624 = vrot.lane.b32.xlu0 %v3452, 1
  %v3625 = vpop.permute.xlu0 %3624
  %v3626 = vsel %vm150, %v3619, %v3607
  %v3627 = vsel %vm150, %v3621, %v3609
  %v3628 = vsel %vm150, %v3623, %v3611
  %v3629 = vsel %vm150, %v3625, %v3613
  %v3638 = vsel %vm150, %v3607, %v3619
  %v3639 = vsel %vm150, %v3609, %v3621
  %v3640 = vsel %vm150, %v3611, %v3623
  %v3641 = vsel %vm150, %v3613, %v3625
  %v3642 = vsel %vm164, %v3638, 0.0
  %v3643 = vsel %vm165, %v3626, 0.0
  %v3644 = vsel %vm164, %v3639, 0.0
  %v3645 = vsel %vm165, %v3627, 0.0
  %v3646 = vsel %vm164, %v3640, 0.0
  %v3647 = vsel %vm165, %v3628, 0.0
  %v3648 = vsel %vm164, %v3641, 0.0
  %v3649 = vsel %vm165, %v3629, 0.0
  %3650 = vrot.lane.b32.xlu0 %v3446, 127
  %v3651 = vpop.permute.xlu0 %3650
  %3652 = vrot.lane.b32.xlu0 %v3447, 127
  %v3653 = vpop.permute.xlu0 %3652
  %3654 = vrot.lane.b32.xlu0 %v3448, 127
  %v3655 = vpop.permute.xlu0 %3654
  %3656 = vrot.lane.b32.xlu0 %v3449, 127
  %v3657 = vpop.permute.xlu0 %3656
  %3658 = vrot.lane.b32.xlu0 %v3450, 127
  %v3659 = vpop.permute.xlu0 %3658
  %3660 = vrot.lane.b32.xlu0 %v3451, 127
  %v3661 = vpop.permute.xlu0 %3660
  %3662 = vrot.lane.b32.xlu0 %v3452, 127
  %v3663 = vpop.permute.xlu0 %3662
  %3664 = vrot.lane.b32.xlu0 %v3453, 127
  %v3665 = vpop.permute.xlu0 %3664
  %v3666 = vsel %vm172, %v3651, %v3653
  %v3667 = vsel %vm172, %v3655, %v3657
  %v3668 = vsel %vm172, %v3659, %v3661
  %v3669 = vsel %vm172, %v3663, %v3665
  %v3682 = vsel %vm172, %v3653, %v3651
  %v3683 = vsel %vm172, %v3657, %v3655
  %v3684 = vsel %vm172, %v3661, %v3659
  %v3685 = vsel %vm172, %v3665, %v3663
  %v3686 = vsel %vm187, %v3666, 0.0
  %v3687 = vsel %vm188, %v3682, 0.0
  %v3688 = vsel %vm187, %v3667, 0.0
  %v3689 = vsel %vm188, %v3683, 0.0
  %v3690 = vsel %vm187, %v3668, 0.0
  %v3691 = vsel %vm188, %v3684, 0.0
  %v3692 = vsel %vm187, %v3669, 0.0
  %v3693 = vsel %vm188, %v3685, 0.0
  %3694 = vrot.lane.b32.xlu0 %v3446, 113
  %v3695 = vpop.permute.xlu0 %3694
  %3696 = vrot.lane.b32.xlu0 %v3447, 113
  %v3697 = vpop.permute.xlu0 %3696
  %3698 = vrot.lane.b32.xlu0 %v3448, 113
  %v3699 = vpop.permute.xlu0 %3698
  %3700 = vrot.lane.b32.xlu0 %v3449, 113
  %v3701 = vpop.permute.xlu0 %3700
  %3702 = vrot.lane.b32.xlu0 %v3450, 113
  %v3703 = vpop.permute.xlu0 %3702
  %3704 = vrot.lane.b32.xlu0 %v3451, 113
  %v3705 = vpop.permute.xlu0 %3704
  %3706 = vrot.lane.b32.xlu0 %v3452, 113
  %v3707 = vpop.permute.xlu0 %3706
  %3708 = vrot.lane.b32.xlu0 %v3453, 113
  %v3709 = vpop.permute.xlu0 %3708
  %v3710 = vsel %vm195, %v3695, %v3697
  %v3711 = vsel %vm195, %v3699, %v3701
  %v3712 = vsel %vm195, %v3703, %v3705
  %v3713 = vsel %vm195, %v3707, %v3709
  %v3726 = vsel %vm195, %v3697, %v3695
  %v3727 = vsel %vm195, %v3701, %v3699
  %v3728 = vsel %vm195, %v3705, %v3703
  %v3729 = vsel %vm195, %v3709, %v3707
  %v3730 = vsel %vm212, %v3710, 0.0
  %v3731 = vsel %vm213, %v3726, 0.0
  %v3732 = vsel %vm212, %v3711, 0.0
  %v3733 = vsel %vm213, %v3727, 0.0
  %v3734 = vsel %vm212, %v3712, 0.0
  %v3735 = vsel %vm213, %v3728, 0.0
  %v3736 = vsel %vm212, %v3713, 0.0
  %v3737 = vsel %vm213, %v3729, 0.0
  %3738 = vrot.lane.b32.xlu0 %v3446, 112
  %v3739 = vpop.permute.xlu0 %3738
  %3740 = vrot.lane.b32.xlu0 %v3447, 112
  %v3741 = vpop.permute.xlu0 %3740
  %3742 = vrot.lane.b32.xlu0 %v3448, 112
  %v3743 = vpop.permute.xlu0 %3742
  %3744 = vrot.lane.b32.xlu0 %v3449, 112
  %v3745 = vpop.permute.xlu0 %3744
  %3746 = vrot.lane.b32.xlu0 %v3450, 112
  %v3747 = vpop.permute.xlu0 %3746
  %3748 = vrot.lane.b32.xlu0 %v3451, 112
  %v3749 = vpop.permute.xlu0 %3748
  %3750 = vrot.lane.b32.xlu0 %v3452, 112
  %v3751 = vpop.permute.xlu0 %3750
  %3752 = vrot.lane.b32.xlu0 %v3453, 112
  %v3753 = vpop.permute.xlu0 %3752
  %v3754 = vsel %vm220, %v3739, %v3741
  %v3755 = vsel %vm220, %v3743, %v3745
  %v3756 = vsel %vm220, %v3747, %v3749
  %v3757 = vsel %vm220, %v3751, %v3753
  %v3770 = vsel %vm220, %v3741, %v3739
  %v3771 = vsel %vm220, %v3745, %v3743
  %v3772 = vsel %vm220, %v3749, %v3747
  %v3773 = vsel %vm220, %v3753, %v3751
  %v3774 = vsel %vm235, %v3754, 0.0
  %v3775 = vsel %vm236, %v3770, 0.0
  %v3776 = vsel %vm235, %v3755, 0.0
  %v3777 = vsel %vm236, %v3771, 0.0
  %v3778 = vsel %vm235, %v3756, 0.0
  %v3779 = vsel %vm236, %v3772, 0.0
  %v3780 = vsel %vm235, %v3757, 0.0
  %v3781 = vsel %vm236, %v3773, 0.0
  %3782 = vrot.lane.b32.xlu0 %v3446, 111
  %v3783 = vpop.permute.xlu0 %3782
  %3784 = vrot.lane.b32.xlu0 %v3447, 111
  %v3785 = vpop.permute.xlu0 %3784
  %3786 = vrot.lane.b32.xlu0 %v3448, 111
  %v3787 = vpop.permute.xlu0 %3786
  %3788 = vrot.lane.b32.xlu0 %v3449, 111
  %v3789 = vpop.permute.xlu0 %3788
  %3790 = vrot.lane.b32.xlu0 %v3450, 111
  %v3791 = vpop.permute.xlu0 %3790
  %3792 = vrot.lane.b32.xlu0 %v3451, 111
  %v3793 = vpop.permute.xlu0 %3792
  %3794 = vrot.lane.b32.xlu0 %v3452, 111
  %v3795 = vpop.permute.xlu0 %3794
  %3796 = vrot.lane.b32.xlu0 %v3453, 111
  %v3797 = vpop.permute.xlu0 %3796
  %v3798 = vsel %vm243, %v3783, %v3785
  %v3799 = vsel %vm243, %v3787, %v3789
  %v3800 = vsel %vm243, %v3791, %v3793
  %v3801 = vsel %vm243, %v3795, %v3797
  %v3814 = vsel %vm243, %v3785, %v3783
  %v3815 = vsel %vm243, %v3789, %v3787
  %v3816 = vsel %vm243, %v3793, %v3791
  %v3817 = vsel %vm243, %v3797, %v3795
  %v3818 = vsel %vm259, %v3798, 0.0
  %v3819 = vsel %vm260, %v3814, 0.0
  %v3820 = vsel %vm259, %v3799, 0.0
  %v3821 = vsel %vm260, %v3815, 0.0
  %v3822 = vsel %vm259, %v3800, 0.0
  %v3823 = vsel %vm260, %v3816, 0.0
  %v3824 = vsel %vm259, %v3801, 0.0
  %v3825 = vsel %vm260, %v3817, 0.0
  %v3826 = vpack.c.bf16 %v3512, %v3510
  %v3827 = vpack.c.bf16 %v3513, %v3511
  %v3828 = vpack.c.bf16 %v3516, %v3514
  %v3829 = vpack.c.bf16 %v3517, %v3515
  %v3830 = vpack.c.bf16 %v3556, %v3554
  %v3831 = vpack.c.bf16 %v3557, %v3555
  %v3832 = vpack.c.bf16 %v3560, %v3558
  %v3833 = vpack.c.bf16 %v3561, %v3559
  %v3834 = vpack.c.bf16 %v3600, %v3598
  %v3835 = vpack.c.bf16 %v3601, %v3599
  %v3836 = vpack.c.bf16 %v3604, %v3602
  %v3837 = vpack.c.bf16 %v3605, %v3603
  %v3838 = vpack.c.bf16 %v3644, %v3642
  %v3839 = vpack.c.bf16 %v3645, %v3643
  %v3840 = vpack.c.bf16 %v3648, %v3646
  %v3841 = vpack.c.bf16 %v3649, %v3647
  %v3842 = vpack.c.bf16 %v3448, %v3446
  %v3843 = vpack.c.bf16 %v3449, %v3447
  %v3844 = vpack.c.bf16 %v3452, %v3450
  %v3845 = vpack.c.bf16 %v3453, %v3451
  %v3846 = vpack.c.bf16 %v3688, %v3686
  %v3847 = vpack.c.bf16 %v3689, %v3687
  %v3848 = vpack.c.bf16 %v3692, %v3690
  %v3849 = vpack.c.bf16 %v3693, %v3691
  %v3850 = vpack.c.bf16 %v3732, %v3730
  %v3851 = vpack.c.bf16 %v3733, %v3731
  %v3852 = vpack.c.bf16 %v3736, %v3734
  %v3853 = vpack.c.bf16 %v3737, %v3735
  %v3854 = vpack.c.bf16 %v3776, %v3774
  %v3855 = vpack.c.bf16 %v3777, %v3775
  %v3856 = vpack.c.bf16 %v3780, %v3778
  %v3857 = vpack.c.bf16 %v3781, %v3779
  %v3858 = vpack.c.bf16 %v3820, %v3818
  %v3859 = vpack.c.bf16 %v3821, %v3819
  %v3860 = vpack.c.bf16 %v3824, %v3822
  %v3861 = vpack.c.bf16 %v3825, %v3823
  %3863 = vset.pattern.permute.xlu0 0
  %3864 = vperm.xlu0 %3863, %v3463
  %v3865 = vpop.permute.xlu0 %3864
  %3868 = vset.pattern.permute.xlu0 0
  %3869 = vperm.xlu0 %3868, %v3464
  %v3870 = vpop.permute.xlu0 %3869
  %3873 = vset.pattern.permute.xlu0 0
  %3874 = vperm.xlu0 %3873, %v3465
  %v3875 = vpop.permute.xlu0 %3874
  %v3886 = vunpack.c.l.b16 %v3454
  %v3887 = vunpack.c.h.b16 %v3454
  %v3888 = vunpack.c.l.b16 %v3455
  %v3889 = vunpack.c.h.b16 %v3455
  %v3890 = vunpack.c.l.b16 %v3456
  %v3891 = vunpack.c.l.b16 %v3457
  %v3892 = vunpack.c.h.b16 %v3457
  %v3893 = vunpack.c.l.b16 %v3458
  %v3894 = vunpack.c.h.b16 %v3458
  %v3895 = vunpack.c.l.b16 %v3459
  %v3896 = vunpack.c.l.b16 %v3460
  %v3897 = vunpack.c.h.b16 %v3460
  %v3898 = vunpack.c.l.b16 %v3461
  %v3899 = vunpack.c.h.b16 %v3461
  %v3900 = vunpack.c.l.b16 %v3462
  %v3901 = vpack.c.b16 %v3891, %v3886
  %v3902 = vpack.c.b16 %v3892, %v3887
  %v3903 = vpack.c.b16 %v3893, %v3888
  %v3904 = vpack.c.b16 %v3894, %v3889
  %v3905 = vpack.c.b16 %v3895, %v3890
  %v3906 = vpack.c.b16 %v3896, %v3896
  %v3907 = vpack.c.b16 %v3897, %v3897
  %v3908 = vpack.c.b16 %v3898, %v3898
  %v3909 = vpack.c.b16 %v3899, %v3899
  %v3910 = vpack.c.b16 %v3900, %v3900
  %v3920 = vsel %vm2625, %v3905, 0
  %v3923 = vsel %vm2625, %v3910, 0
  %3925 = vmatprep.subr.bf16.mxu0 %v781
  %3926 = vmatpush1.bf16.msra.mxu0 %v780
  %3927 = vmatprep.subr.bf16.mxu0 %v783
  %3928 = vmatpush1.bf16.msra.mxu0 %v782
  %3929 = vmatprep.subr.bf16.mxu0 %v3827
  %3930 = vmatpush1.bf16.msra.mxu0 %v3826
  %3931 = vmatprep.subr.bf16.mxu0 %v3829
  %3932 = vmatpush1.bf16.msra.mxu0 %v3828
  %3933 = vmatprep.subr.bf16.mxu0 %v785
  %3934 = vmatpush1.bf16.msra.mxu0 %v784
  %3935 = vmatprep.subr.bf16.mxu0 %v787
  %3936 = vmatpush1.bf16.msra.mxu0 %v786
  %3937 = vmatprep.subr.bf16.mxu0 %v3831
  %3938 = vmatpush1.bf16.msra.mxu0 %v3830
  %3939 = vmatprep.subr.bf16.mxu0 %v3833
  %3940 = vmatpush1.bf16.msra.mxu0 %v3832
  %3941 = vmatprep.subr.bf16.mxu0 %v789
  %3942 = vmatpush1.bf16.msra.mxu0 %v788
  %3943 = vmatprep.subr.bf16.mxu0 %v791
  %3944 = vmatpush1.bf16.msra.mxu0 %v790
  %3945 = vmatprep.subr.bf16.mxu0 %v3835
  %3946 = vmatpush1.bf16.msra.mxu0 %v3834
  %3947 = vmatprep.subr.bf16.mxu0 %v3837
  %3948 = vmatpush1.bf16.msra.mxu0 %v3836
  %3949 = vmatprep.subr.bf16.mxu0 %v793
  %3950 = vmatpush1.bf16.msra.mxu0 %v792
  %3951 = vmatprep.subr.bf16.mxu0 %v795
  %3952 = vmatpush1.bf16.msra.mxu0 %v794
  %3953 = vmatprep.subr.bf16.mxu0 %v3839
  %3954 = vmatpush1.bf16.msra.mxu0 %v3838
  %3955 = vmatprep.subr.bf16.mxu0 %v3841
  %3956 = vmatpush1.bf16.msra.mxu0 %v3840
  %3957 = vmatprep.mubr.bf16.mxu0 %v3902
  %3958 = vmatmul.mubr.bf16.gmra.mrb[0].mxu0 %v3901
  %v3959 = vpop.f32.mrb[0].mxu0
  %v3960 = vadd.f32 %v3865, %v3959
  %v3961 = vpop.f32.mrb[0].mxu0
  %v3962 = vadd.f32 %v3865, %v3961
  %v3963 = vpop.f32.mrb[0].mxu0
  %v3964 = vadd.f32 %v3870, %v3963
  %v3965 = vpop.f32.mrb[0].mxu0
  %v3966 = vadd.f32 %v3870, %v3965
  %3967 = vmatprep.mubr.bf16.mxu0 %v3907
  %3968 = vmatmul.mubr.bf16.gmra.mrb[0].mxu0 %v3906
  %v3969 = vpop.f32.mrb[0].mxu0
  %v3970 = vadd.f32 %v3875, %v3969
  %v3971 = vpop.f32.mrb[0].mxu0
  %v3972 = vadd.f32 %v3875, %v3971
  %v3973 = vpop.f32.mrb[0].mxu0
  %v3974 = vpop.f32.mrb[0].mxu0
  %3975 = vdwg.mxu0
  %3976 = vmatprep.subr.bf16.mxu0 %v797
  %3977 = vmatpush1.bf16.msra.mxu0 %v796
  %3978 = vmatprep.subr.bf16.mxu0 %v799
  %3979 = vmatpush1.bf16.msra.mxu0 %v798
  %3980 = vmatprep.subr.bf16.mxu0 %v3843
  %3981 = vmatpush1.bf16.msra.mxu0 %v3842
  %3982 = vmatprep.subr.bf16.mxu0 %v3845
  %3983 = vmatpush1.bf16.msra.mxu0 %v3844
  %3984 = vmatprep.subr.bf16.mxu0 %v801
  %3985 = vmatpush1.bf16.msra.mxu0 %v800
  %3986 = vmatprep.subr.bf16.mxu0 %v803
  %3987 = vmatpush1.bf16.msra.mxu0 %v802
  %3988 = vmatprep.subr.bf16.mxu0 %v3847
  %3989 = vmatpush1.bf16.msra.mxu0 %v3846
  %3990 = vmatprep.subr.bf16.mxu0 %v3849
  %3991 = vmatpush1.bf16.msra.mxu0 %v3848
  %3992 = vmatprep.subr.bf16.mxu0 %v805
  %3993 = vmatpush1.bf16.msra.mxu0 %v804
  %3994 = vmatprep.subr.bf16.mxu0 %v807
  %3995 = vmatpush1.bf16.msra.mxu0 %v806
  %3996 = vmatprep.subr.bf16.mxu0 %v3851
  %3997 = vmatpush1.bf16.msra.mxu0 %v3850
  %3998 = vmatprep.subr.bf16.mxu0 %v3853
  %3999 = vmatpush1.bf16.msra.mxu0 %v3852
  %4000 = vmatprep.subr.bf16.mxu0 %v809
  %4001 = vmatpush1.bf16.msra.mxu0 %v808
  %4002 = vmatprep.subr.bf16.mxu0 %v811
  %4003 = vmatpush1.bf16.msra.mxu0 %v810
  %4004 = vmatprep.subr.bf16.mxu0 %v3855
  %4005 = vmatpush1.bf16.msra.mxu0 %v3854
  %4006 = vmatprep.subr.bf16.mxu0 %v3857
  %4007 = vmatpush1.bf16.msra.mxu0 %v3856
  %4008 = vmatprep.mubr.bf16.mxu0 %v3904
  %4009 = vmatmul.mubr.bf16.gmra.mrb[0].mxu0 %v3903
  %v4010 = vpop.f32.mrb[0].mxu0
  %v4011 = vadd.f32 %v3960, %v4010
  %v4012 = vpop.f32.mrb[0].mxu0
  %v4013 = vadd.f32 %v3962, %v4012
  %v4014 = vpop.f32.mrb[0].mxu0
  %v4015 = vadd.f32 %v3964, %v4014
  %v4016 = vpop.f32.mrb[0].mxu0
  %v4017 = vadd.f32 %v3966, %v4016
  %4018 = vmatprep.mubr.bf16.mxu0 %v3909
  %4019 = vmatmul.mubr.bf16.gmra.mrb[0].mxu0 %v3908
  %v4020 = vpop.f32.mrb[0].mxu0
  %v4021 = vadd.f32 %v3970, %v4020
  %v4022 = vpop.f32.mrb[0].mxu0
  %v4023 = vadd.f32 %v3972, %v4022
  %v4024 = vpop.f32.mrb[0].mxu0
  %v4025 = vpop.f32.mrb[0].mxu0
  %4026 = vdwg.mxu0
  %4027 = vmatprep.subr.bf16.mxu0 %v813
  %4028 = vmatpush1.bf16.msra.mxu0 %v812
  %4029 = vmatprep.subr.bf16.mxu0 %v815
  %4030 = vmatpush1.bf16.msra.mxu0 %v814
  %4031 = vmatprep.subr.bf16.mxu0 %v3859
  %4032 = vmatpush1.bf16.msra.mxu0 %v3858
  %4033 = vmatprep.subr.bf16.mxu0 %v3861
  %4034 = vmatpush1.bf16.msra.mxu0 %v3860
  %4035 = vmatprep.subr.bf16.mxu0 0
  %4036 = vmatpush1.bf16.msra.mxu0 0
  %4037 = vmatprep.subr.bf16.mxu0 0
  %4038 = vmatpush1.bf16.msra.mxu0 0
  %4039 = vmatprep.subr.bf16.mxu0 0
  %4040 = vmatpush1.bf16.msra.mxu0 0
  %4041 = vmatprep.subr.bf16.mxu0 0
  %4042 = vmatpush1.bf16.msra.mxu0 0
  %4043 = vmatprep.subr.bf16.mxu0 0
  %4044 = vmatpush1.bf16.msra.mxu0 0
  %4045 = vmatprep.subr.bf16.mxu0 0
  %4046 = vmatpush1.bf16.msra.mxu0 0
  %4047 = vmatprep.subr.bf16.mxu0 0
  %4048 = vmatpush1.bf16.msra.mxu0 0
  %4049 = vmatprep.subr.bf16.mxu0 0
  %4050 = vmatpush1.bf16.msra.mxu0 0
  %4051 = vmatprep.subr.bf16.mxu0 0
  %4052 = vmatpush1.bf16.msra.mxu0 0
  %4053 = vmatprep.subr.bf16.mxu0 0
  %4054 = vmatpush1.bf16.msra.mxu0 0
  %4055 = vmatprep.subr.bf16.mxu0 0
  %4056 = vmatpush1.bf16.msra.mxu0 0
  %4057 = vmatprep.subr.bf16.mxu0 0
  %4058 = vmatpush1.bf16.msra.mxu0 0
  %4059 = vmatprep.mubr.bf16.mxu0 0
  %4060 = vmatmul.mubr.bf16.gmra.mrb[0].mxu0 %v3920
  %v4061 = vpop.f32.mrb[0].mxu0
  %v4062 = vadd.f32 %v4011, %v4061
  %v4063 = vpop.f32.mrb[0].mxu0
  %v4064 = vadd.f32 %v4013, %v4063
  %v4065 = vpop.f32.mrb[0].mxu0
  %v4066 = vadd.f32 %v4015, %v4065
  %v4067 = vpop.f32.mrb[0].mxu0
  %v4068 = vadd.f32 %v4017, %v4067
  %4069 = vmatprep.mubr.bf16.mxu0 0
  %4070 = vmatmul.mubr.bf16.gmra.mrb[0].mxu0 %v3923
  %v4071 = vpop.f32.mrb[0].mxu0
  %v4072 = vadd.f32 %v4021, %v4071
  %v4073 = vpop.f32.mrb[0].mxu0
  %v4074 = vadd.f32 %v4023, %v4073
  %v4075 = vpop.f32.mrb[0].mxu0
  %v4076 = vpop.f32.mrb[0].mxu0
  %4077 = vdwg.mxu0
  %v4078 = vtanh.pop %v4062
  %v4079 = vtanh.pop %v4064
  %v4080 = vtanh.pop %v4066
  %v4081 = vtanh.pop %v4068
  %v4082 = vtanh.pop %v4072
  %v4083 = vtanh.pop %v4074
  %v4084 = vmul.f32 %v60, %v60
  %v4085 = vsub.f32 %v4084, %v60
  %v4087 = vcombine.high %v4085, %v4085
  %v4089 = vmul.f32 %v4078, %v4085
  %v4090 = vmul.f32 %v4079, %v4087
  %v4093 = vcombine.low %v4089, %v4090
  %v4095 = vadd.f32 %v60, %v4093
  %v4096 = vmul.f32 %v4095, %v4095
  %v4097 = vsub.f32 %v4096, %v4095
  %v4099 = vcombine.high %v4097, %v4097
  %v4100 = vrot.slane %v4097, 5
  %v4101 = vrot.slane %v4099, 5
  %v4104 = vmul.f32 %v4078, %v4100
  %v4105 = vmul.f32 %v4079, %v4101
  %v4108 = vcombine.low %v4104, %v4105
  %v4109 = vcombine.high %v4104, %v4105
  %vm4110 = vcmask 1040384
  %vm4111 = vcmask 1044484
  %vm4112 = vmor %vm4110, %vm4111
  %v4113 = vrot.slane %v4108, 7
  %v4114 = vrot.slane %v4113, 4
  %v4115 = vrot.slane %v4109, 7
  %v4116 = vsel %vm4112, %v4114, %v4115
  %v4118 = vadd.f32 %v4095, %v4116
  %v4119 = vmul.f32 %v4118, %v4118
  %v4120 = vsub.f32 %v4119, %v4118
  %v4122 = vcombine.high %v4120, %v4120
  %v4123 = vrot.slane %v4120, 2
  %v4124 = vrot.slane %v4122, 2
  %v4127 = vmul.f32 %v4078, %v4123
  %v4128 = vmul.f32 %v4079, %v4124
  %v4129 = vmul.f32 %v4080, %v4123
  %v4130 = vmul.f32 %v4081, %v4124
  %v4135 = vcombine.high %v4127, %v4128
  %v4136 = vcombine.low %v4129, %v4130
  %vm4137 = vcmask 1045508
  %vm4138 = vmor %vm340, %vm4137
  %v4139 = vrot.slane %v4135, 6
  %v4140 = vrot.slane %v4139, 4
  %v4141 = vrot.slane %v4136, 6
  %v4142 = vsel %vm4138, %v4140, %v4141
  %v4144 = vadd.f32 %v4118, %v4142
  %v4145 = vmul.f32 %v4144, %v4144
  %v4146 = vsub.f32 %v4145, %v4144
  %v4148 = vcombine.high %v4146, %v4146
  %v4149 = vrot.slane %v4146, 7
  %v4150 = vrot.slane %v4148, 7
  %v4153 = vmul.f32 %v4080, %v4149
  %v4154 = vmul.f32 %v4081, %v4150
  %v4157 = vcombine.low %v4153, %v4154
  %v4158 = vrot.slane %v4157, 5
  %v4159 = vrot.slane %v4158, 4
  %v4161 = vadd.f32 %v4144, %v4159
  %4162 = vst [vmem:[%s16] sm:$0x77] %v4161
  %v4163 = vmul.f32 %v4161, %v4161
  %v4164 = vsub.f32 %v4163, %v4161
  %v4166 = vcombine.low %v4164, %v4164
  %v4168 = vmul.f32 %v4080, %v4166
  %v4169 = vmul.f32 %v4081, %v4164
  %v4172 = vcombine.high %v4168, %v4169
  %v4174 = vadd.f32 %v4161, %v4172
  %v4175 = vmul.f32 %v4174, %v4174
  %v4176 = vsub.f32 %v4175, %v4174
  %v4178 = vcombine.high %v4176, %v4176
  %v4179 = vrot.slane %v4176, 1
  %v4180 = vrot.slane %v4178, 1
  %v4183 = vmul.f32 %v4080, %v4179
  %v4184 = vmul.f32 %v4081, %v4180
  %v4185 = vmul.f32 %v4082, %v4179
  %v4186 = vmul.f32 %v4083, %v4180
  %v4191 = vcombine.high %v4183, %v4184
  %v4192 = vcombine.low %v4185, %v4186
  %v4193 = vrot.slane %v4191, 7
  %v4194 = vrot.slane %v4193, 4
  %v4195 = vrot.slane %v4192, 7
  %v4196 = vsel %vm4112, %v4194, %v4195
  %v4198 = vadd.f32 %v4174, %v4196
  %v4199 = vmul.f32 %v4198, %v4198
  %v4200 = vsub.f32 %v4199, %v4198
  %v4202 = vcombine.high %v4200, %v4200
  %v4203 = vrot.slane %v4200, 6
  %v4204 = vrot.slane %v4202, 6
  %v4207 = vmul.f32 %v4082, %v4203
  %v4208 = vmul.f32 %v4083, %v4204
  %v4211 = vcombine.low %v4207, %v4208
  %v4212 = vcombine.high %v4207, %v4208
  %v4213 = vrot.slane %v4211, 6
  %v4214 = vrot.slane %v4213, 4
  %v4215 = vrot.slane %v4212, 6
  %v4216 = vsel %vm4138, %v4214, %v4215
  %v4218 = vadd.f32 %v4198, %v4216
  %v4219 = vmul.f32 %v4218, %v4218
  %v4220 = vsub.f32 %v4219, %v4218
  %v4222 = vcombine.high %v4220, %v4220
  %v4223 = vrot.slane %v4220, 3
  %v4224 = vrot.slane %v4222, 3
  %v4227 = vmul.f32 %v4082, %v4223
  %v4228 = vmul.f32 %v4083, %v4224
  %v4231 = vcombine.high %v4227, %v4228
  %v4232 = vrot.slane %v4231, 5
  %v4233 = vrot.slane %v4232, 4
  %v4235 = vadd.f32 %v4218, %v4233
  %4236 = vst [vmem:[%s17] sm:$0x77] %v4235
  %4237 = vst [vmem:[%s18] sm:$0xff] %v4078
  %4238 = vst [vmem:[%s18 + $0x8] sm:$0xff] %v4079
  %4239 = vst [vmem:[%s18 + $0x10] sm:$0xff] %v4080
  %4240 = vst [vmem:[%s18 + $0x18] sm:$0xff] %v4081
  %4241 = vst [vmem:[%s18 + $0x20] sm:$0xff] %v4082
  %4242 = vst [vmem:[%s18 + $0x28] sm:$0xff] %v4083
  // Predicated region
  $region66: #{enhance_net_forward.1} parent=0 // pred_check
    _
  $region67: #{enhance_net_forward.1} parent=0 // pred_check_branch
    %4244 = sbr.rel (0) target = $region69
  $region68: #{enhance_net_forward.1} parent=0 // pred_region
    _
  $region69: #{enhance_net_forward.1} parent=0 // pred_fallthru
    _
  // Predicated region
  $region70: #{enhance_net_forward.1} parent=0 // pred_check
    _
  $region71: #{enhance_net_forward.1} parent=0 // pred_check_branch
    %4246 = sbr.rel (0) target = $region73
  $region72: #{enhance_net_forward.1} parent=0 // pred_region
    _
  $region73: #{enhance_net_forward.1} parent=0 // pred_fallthru
    _
  // Predicated region
  $region74: #{enhance_net_forward.1} parent=0 // pred_check
    _
  $region75: #{enhance_net_forward.1} parent=0 // pred_check_branch
    %4248 = sbr.rel (0) target = $region77
  $region76: #{enhance_net_forward.1} parent=0 // pred_region
    _
  $region77: #{enhance_net_forward.1} parent=0 // pred_fallthru
    _
  // Predicated region
  $region78: #{enhance_net_forward.1} parent=0 // pred_check
    _
  $region79: #{enhance_net_forward.1} parent=0 // pred_check_branch
    %4250 = sbr.rel (0) target = $region81
  $region80: #{enhance_net_forward.1} parent=0 // pred_region
    _
  $region81: #{enhance_net_forward.1} parent=0 // pred_fallthru
    _
  // Predicated region
  $region82: #{enhance_net_forward.1} parent=0 // pred_check
    _
  $region83: #{enhance_net_forward.1} parent=0 // pred_check_branch
    %4252 = sbr.rel (0) target = $region85
  $region84: #{enhance_net_forward.1} parent=0 // pred_region
    _
  $region85: #{enhance_net_forward.1} parent=0 // pred_fallthru
    _
  // Predicated region
  $region86: #{enhance_net_forward.1} parent=0 // pred_check
    _
  $region87: #{enhance_net_forward.1} parent=0 // pred_check_branch
    %4254 = sbr.rel (0) target = $region89
  $region88: #{enhance_net_forward.1} parent=0 // pred_region
    _
  $region89: #{enhance_net_forward.1} parent=0 // pred_fallthru
    _

</llo_original>
